<compile_context>
chip_gen: v7x
topology: tpu7x:2x2x1
jax: 0.10.0
libtpu: 0.0.40
codegen_flags: <defaults>
</compile_context>

<pallas_src>
import numpy as np
import jax
import jax.numpy as jnp
from jax.experimental import pallas as pl
from jax.experimental.pallas import tpu as pltpu

ACT_NAME = "relu"   # module is parameterized by act_fn; ReLU branch chosen


def _act(x):
    if ACT_NAME == "relu":
        return jnp.maximum(x, 0.0)
    if ACT_NAME == "leaky":
        return jnp.where(x >= 0, x, 0.01 * x)
    if ACT_NAME == "tanh":
        return jnp.tanh(x)
    if ACT_NAME == "swish":
        return x * jax.nn.sigmoid(x)
    if ACT_NAME == "gelu":
        return jax.nn.gelu(x)
    raise ValueError(ACT_NAME)


# ------------------------------ fused kernel -------------------------------

def _fused_kernel(xr_ref, a_ref, cb1_ref, cm1_ref, cs1_ref,
                  w2_ref, cb2_ref, cm2_ref, cs2_ref,
                  wf1_ref, bf1_ref, wf2_ref, bf2_ref, out_ref, s_ref):
    B = xr_ref.shape[2]          # samples per grid step (multiple of 8)
    R = 13 * B                   # rows per pool-row-parity = (pool_row, sample)

    # ---- stage 1: conv1 as ONE banded matmul + act + bn1 + 2x2 max-pool ----
    # xr[di, i, b, ki*28+jj] = x[b, 2i+di+ki, jj];  rows of lhs = (di, i, b).
    lhs = xr_ref[...].reshape(2 * R, 84)
    z = jnp.dot(lhs, a_ref[...], preferred_element_type=jnp.float32)
    z = _act(z + cb1_ref[...]) * cm1_ref[...] + cs1_ref[...]      # (2R, 256)
    m = jnp.maximum(z[:, 0:104], z[:, 128:232])                   # max over dj
    pooled = jnp.maximum(m[0:R, :], m[R:2 * R, :])                # max over di

    # ---- stage 2: row-padded scratch (rows = (pad_i, b)) for conv2 taps ----
    zrow = jnp.zeros((B, 104), jnp.float32)
    s_ref[pl.ds(0, B), :] = zrow                                  # top pad rows
    s_ref[pl.ds(14 * B, B), :] = zrow                             # bottom pad rows
    s_ref[pl.ds(B, R), :] = pooled                                # data rows

    # ---- stage 3: conv2 = 3 banded matmuls over shifted row windows + act + bn2
    acc2 = jnp.dot(s_ref[pl.ds(0, R), :], w2_ref[0],
                   preferred_element_type=jnp.float32)
    for t in (1, 2):
        acc2 = acc2 + jnp.dot(s_ref[pl.ds(t * B, R), :], w2_ref[t],
                              preferred_element_type=jnp.float32)
    h2 = _act(acc2 + cb2_ref[...]) * cm2_ref[...] + cs2_ref[...]  # (R, 208)
    # TODO(synk): Dropout(0.25) and batch-stat BatchNorm are eval-mode here
    # (identity / running stats); training-mode behaviour is not implemented.

    # ---- stage 4: flatten folded into fc1 weight permutation; fc1 + act + fc2
    acc = jnp.zeros((B, 128), jnp.float32) + bf1_ref[...]
    for i in range(13):
        acc = acc + jnp.dot(h2[i * B:(i + 1) * B, :], wf1_ref[i],
                            preferred_element_type=jnp.float32)
    hfc = _act(acc)                                               # (B, 128)
    out_ref[...] = (jnp.dot(hfc, wf2_ref[...],
                            preferred_element_type=jnp.float32) + bf2_ref[...])


# ------------------------------- wrapper -----------------------------------

def forward(x, params, *, block_b=None):
    N = x.shape[0]
    if block_b is None:
        block_b = 8 if N <= 16 else 32        # amortize per-step overhead
    bb = block_b
    Np = ((N + bb - 1) // bb) * bb
    if Np != N:
        x = jnp.pad(x, ((0, Np - N), (0, 0), (0, 0), (0, 0)))
    x2 = x[:, 0]                                                  # (Np, 28, 28)

    # conv1 LHS: for each pool row-parity di, concatenate the 3 row taps.
    cats = []
    for di in range(2):
        taps = [x2[:, di + ki: di + ki + 25:2, :] for ki in range(3)]
        cats.append(jnp.concatenate(taps, axis=-1))               # (Np, 13, 84)
    xr = jnp.transpose(jnp.stack(cats, axis=0), (0, 2, 1, 3))     # (2, 13, Np, 84)

    steps = Np // bb
    flops_step = 2 * (26 * bb * 84 * 256 + 3 * 13 * bb * 104 * 208
                      + 13 * bb * 208 * 128 + bb * 128 * 10)
    ce = pl.CostEstimate(
        flops=int(flops_step * steps), transcendentals=0,
        bytes_accessed=int(xr.size * 4 + Np * 40 + 1_800_000))

    out = pl.pallas_call(
        _fused_kernel,
        out_shape=jax.ShapeDtypeStruct((Np, 10), jnp.float32),
        grid=(steps,),
        in_specs=[
            pl.BlockSpec((2, 13, bb, 84), lambda t: (0, 0, t, 0)),  # conv1 lhs
            pl.BlockSpec((84, 256), lambda t: (0, 0)),              # conv1 banded W
            pl.BlockSpec((1, 256), lambda t: (0, 0)),               # conv1 bias
            pl.BlockSpec((1, 256), lambda t: (0, 0)),               # bn1 scale
            pl.BlockSpec((1, 256), lambda t: (0, 0)),               # bn1 shift
            pl.BlockSpec((3, 104, 208), lambda t: (0, 0, 0)),       # conv2 banded W
            pl.BlockSpec((1, 208), lambda t: (0, 0)),               # conv2 bias
            pl.BlockSpec((1, 208), lambda t: (0, 0)),               # bn2 scale
            pl.BlockSpec((1, 208), lambda t: (0, 0)),               # bn2 shift
            pl.BlockSpec((13, 208, 128), lambda t: (0, 0, 0)),      # fc1 (permuted)
            pl.BlockSpec((1, 128), lambda t: (0, 0)),               # fc1 bias
            pl.BlockSpec((128, 10), lambda t: (0, 0)),              # fc2
            pl.BlockSpec((1, 10), lambda t: (0, 0)),                # fc2 bias
        ],
        out_specs=pl.BlockSpec((bb, 10), lambda t: (t, 0)),
        scratch_shapes=[pltpu.VMEM((15 * bb, 104), jnp.float32)],
        compiler_params=pltpu.CompilerParams(dimension_semantics=("parallel",)),
        cost_estimate=ce,
    )(xr, params["a"], params["cb1"], params["cm1"], params["cs1"],
      params["w2"], params["cb2"], params["cm2"], params["cs2"],
      params["wf1"], params["bf1"], params["wf2"], params["bf2"])
    return out[:N]


def make_params(key):
    ks = jax.random.split(key, 8)
    # Kaiming-normal (fan_out, relu) conv init as in the torch module
    w1 = jax.random.normal(ks[0], (8, 1, 3, 3), jnp.float32) * (2.0 / (8 * 9)) ** 0.5
    b1 = jax.random.normal(ks[1], (8,), jnp.float32) * 0.05
    w2 = jax.random.normal(ks[2], (16, 8, 3, 3), jnp.float32) * (2.0 / (16 * 9)) ** 0.5
    b2 = jax.random.normal(ks[3], (16,), jnp.float32) * 0.05
    wfc1 = jax.random.normal(ks[4], (128, 2704), jnp.float32) * (1.0 / 2704) ** 0.5
    bfc1 = jax.random.normal(ks[5], (128,), jnp.float32) * 0.02
    wfc2 = jax.random.normal(ks[6], (10, 128), jnp.float32) * (1.0 / 128) ** 0.5
    bfc2 = jax.random.normal(ks[7], (10,), jnp.float32) * 0.02

    eps = 1e-5
    # eval-mode BatchNorm affine (gamma=1, beta=0, running_mean=0, running_var=1)
    sc1 = np.full((8,), 1.0 / np.sqrt(1.0 + eps), np.float32); sh1 = np.zeros(8, np.float32)
    sc2 = np.full((16,), 1.0 / np.sqrt(1.0 + eps), np.float32); sh2 = np.zeros(16, np.float32)

    w1n = np.asarray(w1)[:, 0]           # (8, 3, 3)
    b1n = np.asarray(b1)
    w2n = np.asarray(w2)                 # (16, 8, 3, 3)
    b2n = np.asarray(b2)

    # conv1 banded weights, both pool column-parities side by side (lane blocks
    # at offsets 0 and 128 so in-kernel slices stay 128-aligned):
    #   A[ki*28+jj, dj*128 + j*8+c] = w1[c, ki, jj-2j-dj]
    A = np.zeros((84, 256), np.float32)
    for dj in range(2):
        for ki in range(3):
            for kj in range(3):
                for j in range(13):
                    jj = 2 * j + dj + kj
                    A[ki * 28 + jj, dj * 128 + j * 8: dj * 128 + j * 8 + 8] = w1n[:, ki, kj]

    def pad256(v104):
        out = np.zeros((1, 256), np.float32)
        out[0, 0:104] = v104
        out[0, 128:232] = v104
        return out

    cb1 = pad256(np.tile(b1n, 13))
    cm1 = pad256(np.tile(sc1, 13))
    cs1 = pad256(np.tile(sh1, 13))

    # conv2 banded weights W2[t]: (104, 208); W2[t, jp*8+ic, j*16+oc] = w2[oc,ic,t,kj], jp=j+kj-1
    W2 = np.zeros((3, 104, 208), np.float32)
    for t in range(3):
        for kj in range(3):
            for j in range(13):
                jp = j + kj - 1
                if 0 <= jp < 13:
                    W2[t, jp * 8: jp * 8 + 8, j * 16: j * 16 + 16] = w2n[:, :, t, kj].T
    cb2 = np.tile(b2n, 13)[None, :]
    cm2 = np.tile(sc2, 13)[None, :]
    cs2 = np.tile(sh2, 13)[None, :]

    # fc1 weight permuted so torch's channel-major flatten needs no runtime transpose
    wf1 = np.asarray(wfc1).reshape(128, 16, 13, 13)            # (h, oc, i, j)
    wf1p = np.transpose(wf1, (2, 3, 1, 0)).reshape(13, 208, 128)

    return dict(
        a=jnp.asarray(A), cb1=jnp.asarray(cb1), cm1=jnp.asarray(cm1), cs1=jnp.asarray(cs1),
        w2=jnp.asarray(W2), cb2=jnp.asarray(cb2), cm2=jnp.asarray(cm2), cs2=jnp.asarray(cs2),
        wf1=jnp.asarray(wf1p), bf1=jnp.asarray(bfc1).reshape(1, 128),
        wf2=jnp.asarray(np.asarray(wfc2).T), bf2=jnp.asarray(bfc2).reshape(1, 10),
    )


if __name__ == "__main__":
    key = jax.random.PRNGKey(0)
    pkey, xkey = jax.random.split(key)
    params = make_params(pkey)
    # MNIST-shaped input forced by fc1 in_features = 16*13*13 = 2704
    x = jax.random.normal(xkey, (2, 1, 28, 28), jnp.float32)

    logits = jax.jit(forward)(x, params)
    jax.block_until_ready(logits)
    assert logits.shape == (2, 10) and logits.dtype == jnp.float32
    print("KERNEL_OK")
</pallas_src>

<mosaic_0001>
module attributes {stable_mosaic.version = 11 : i64} {
  func.func @_fused_kernel(%arg0: i32, %arg1: memref<2x13x8x84xf32, #tpu.memory_space<vmem>>, %arg2: memref<84x256xf32, #tpu.memory_space<vmem>>, %arg3: memref<1x256xf32, #tpu.memory_space<vmem>>, %arg4: memref<1x256xf32, #tpu.memory_space<vmem>>, %arg5: memref<1x256xf32, #tpu.memory_space<vmem>>, %arg6: memref<3x104x208xf32, #tpu.memory_space<vmem>>, %arg7: memref<1x208xf32, #tpu.memory_space<vmem>>, %arg8: memref<1x208xf32, #tpu.memory_space<vmem>>, %arg9: memref<1x208xf32, #tpu.memory_space<vmem>>, %arg10: memref<13x208x128xf32, #tpu.memory_space<vmem>>, %arg11: memref<1x128xf32, #tpu.memory_space<vmem>>, %arg12: memref<128x10xf32, #tpu.memory_space<vmem>>, %arg13: memref<1x10xf32, #tpu.memory_space<vmem>>, %arg14: memref<8x10xf32, #tpu.memory_space<vmem>>, %arg15: memref<120x104xf32, #tpu.memory_space<vmem>>) attributes {dimension_semantics = [#tpu.dimension_semantics<parallel>], iteration_bounds = array<i64: 1>, scalar_prefetch = 0 : i64, scratch_operands = 1 : i64, tpu.core_type = #tpu.core_type<tc>, window_params = [{transform_indices = @transform_0, window_bounds = array<i64: 2, 13, 8, 84>}, {pipeline_mode = #tpu.pipeline_mode<synchronous>, transform_indices = @transform_1, window_bounds = array<i64: 84, 256>}, {pipeline_mode = #tpu.pipeline_mode<synchronous>, transform_indices = @transform_2, window_bounds = array<i64: 1, 256>}, {pipeline_mode = #tpu.pipeline_mode<synchronous>, transform_indices = @transform_3, window_bounds = array<i64: 1, 256>}, {pipeline_mode = #tpu.pipeline_mode<synchronous>, transform_indices = @transform_4, window_bounds = array<i64: 1, 256>}, {pipeline_mode = #tpu.pipeline_mode<synchronous>, transform_indices = @transform_5, window_bounds = array<i64: 3, 104, 208>}, {pipeline_mode = #tpu.pipeline_mode<synchronous>, transform_indices = @transform_6, window_bounds = array<i64: 1, 208>}, {pipeline_mode = #tpu.pipeline_mode<synchronous>, transform_indices = @transform_7, window_bounds = array<i64: 1, 208>}, {pipeline_mode = #tpu.pipeline_mode<synchronous>, transform_indices = @transform_8, window_bounds = array<i64: 1, 208>}, {pipeline_mode = #tpu.pipeline_mode<synchronous>, transform_indices = @transform_9, window_bounds = array<i64: 13, 208, 128>}, {pipeline_mode = #tpu.pipeline_mode<synchronous>, transform_indices = @transform_10, window_bounds = array<i64: 1, 128>}, {pipeline_mode = #tpu.pipeline_mode<synchronous>, transform_indices = @transform_11, window_bounds = array<i64: 128, 10>}, {pipeline_mode = #tpu.pipeline_mode<synchronous>, transform_indices = @transform_12, window_bounds = array<i64: 1, 10>}, {transform_indices = @transform_13, window_bounds = array<i64: 8, 10>}]} {
    %c0 = arith.constant 0 : index
    %c0_0 = arith.constant 0 : index
    %c0_1 = arith.constant 0 : index
    %c0_2 = arith.constant 0 : index
    %0 = vector.load %arg1[%c0, %c0_0, %c0_1, %c0_2] : memref<2x13x8x84xf32, #tpu.memory_space<vmem>>, vector<2x13x8x84xf32>
    %1 = vector.shape_cast %0 : vector<2x13x8x84xf32> to vector<208x84xf32>
    %c0_3 = arith.constant 0 : index
    %c0_4 = arith.constant 0 : index
    %2 = vector.load %arg2[%c0_3, %c0_4] : memref<84x256xf32, #tpu.memory_space<vmem>>, vector<84x256xf32>
    %cst = arith.constant dense<0.000000e+00> : vector<208x256xf32>
    %3 = tpu.matmul %1, %2, %cst {dimension_numbers = #tpu.dot_dimension_numbers<[1], [0], [0], [1], [0, 0, 1, 1], [], []>} : vector<208x84xf32>, vector<84x256xf32>, vector<208x256xf32> -> vector<208x256xf32>
    %c0_5 = arith.constant 0 : index
    %c0_6 = arith.constant 0 : index
    %4 = vector.load %arg3[%c0_5, %c0_6] : memref<1x256xf32, #tpu.memory_space<vmem>>, vector<1x256xf32>
    %5 = vector.broadcast %4 : vector<1x256xf32> to vector<208x256xf32>
    %6 = arith.addf %3, %5 : vector<208x256xf32>
    %cst_7 = arith.constant 0.000000e+00 : f32
    %7 = vector.broadcast %cst_7 : f32 to vector<208x256xf32>
    %8 = arith.maximumf %6, %7 : vector<208x256xf32>
    %c0_8 = arith.constant 0 : index
    %c0_9 = arith.constant 0 : index
    %9 = vector.load %arg4[%c0_8, %c0_9] : memref<1x256xf32, #tpu.memory_space<vmem>>, vector<1x256xf32>
    %10 = vector.broadcast %9 : vector<1x256xf32> to vector<208x256xf32>
    %11 = arith.mulf %8, %10 : vector<208x256xf32>
    %c0_10 = arith.constant 0 : index
    %c0_11 = arith.constant 0 : index
    %12 = vector.load %arg5[%c0_10, %c0_11] : memref<1x256xf32, #tpu.memory_space<vmem>>, vector<1x256xf32>
    %13 = vector.broadcast %12 : vector<1x256xf32> to vector<208x256xf32>
    %14 = arith.addf %11, %13 : vector<208x256xf32>
    %15 = vector.extract_strided_slice %14 {offsets = [0, 0], sizes = [208, 104], strides = [1, 1]} : vector<208x256xf32> to vector<208x104xf32>
    %16 = vector.extract_strided_slice %14 {offsets = [0, 128], sizes = [208, 104], strides = [1, 1]} : vector<208x256xf32> to vector<208x104xf32>
    %17 = arith.maximumf %15, %16 : vector<208x104xf32>
    %18 = vector.extract_strided_slice %17 {offsets = [0, 0], sizes = [104, 104], strides = [1, 1]} : vector<208x104xf32> to vector<104x104xf32>
    %19 = vector.extract_strided_slice %17 {offsets = [104, 0], sizes = [104, 104], strides = [1, 1]} : vector<208x104xf32> to vector<104x104xf32>
    %20 = arith.maximumf %18, %19 : vector<104x104xf32>
    %cst_12 = arith.constant 0.000000e+00 : f32
    %21 = vector.broadcast %cst_12 : f32 to vector<8x104xf32>
    %c0_13 = arith.constant 0 : index
    %c0_14 = arith.constant 0 : index
    %22 = vector.load %arg15[%c0_13, %c0_14] : memref<120x104xf32, #tpu.memory_space<vmem>>, vector<8x104xf32>
    tpu.vector_store %arg15[%c0_13, %c0_14], %21 {strides = array<i32>} : memref<120x104xf32, #tpu.memory_space<vmem>>, vector<8x104xf32>,
    %c112 = arith.constant 112 : index
    %c0_15 = arith.constant 0 : index
    %23 = vector.load %arg15[%c112, %c0_15] : memref<120x104xf32, #tpu.memory_space<vmem>>, vector<8x104xf32>
    tpu.vector_store %arg15[%c112, %c0_15], %21 {strides = array<i32>} : memref<120x104xf32, #tpu.memory_space<vmem>>, vector<8x104xf32>,
    %c8 = arith.constant 8 : index
    %c0_16 = arith.constant 0 : index
    %24 = vector.load %arg15[%c8, %c0_16] : memref<120x104xf32, #tpu.memory_space<vmem>>, vector<104x104xf32>
    tpu.vector_store %arg15[%c8, %c0_16], %20 {strides = array<i32>} : memref<120x104xf32, #tpu.memory_space<vmem>>, vector<104x104xf32>,
    %c0_17 = arith.constant 0 : index
    %c0_18 = arith.constant 0 : index
    %25 = vector.load %arg15[%c0_17, %c0_18] : memref<120x104xf32, #tpu.memory_space<vmem>>, vector<104x104xf32>
    %c0_19 = arith.constant 0 : index
    %c0_20 = arith.constant 0 : index
    %c0_21 = arith.constant 0 : index
    %26 = vector.load %arg6[%c0_19, %c0_20, %c0_21] : memref<3x104x208xf32, #tpu.memory_space<vmem>>, vector<1x104x208xf32>
    %27 = vector.shape_cast %26 : vector<1x104x208xf32> to vector<104x208xf32>
    %cst_22 = arith.constant dense<0.000000e+00> : vector<104x208xf32>
    %28 = tpu.matmul %25, %27, %cst_22 {dimension_numbers = #tpu.dot_dimension_numbers<[1], [0], [0], [1], [0, 0, 1, 1], [], []>} : vector<104x104xf32>, vector<104x208xf32>, vector<104x208xf32> -> vector<104x208xf32>
    %c8_23 = arith.constant 8 : index
    %c0_24 = arith.constant 0 : index
    %29 = vector.load %arg15[%c8_23, %c0_24] : memref<120x104xf32, #tpu.memory_space<vmem>>, vector<104x104xf32>
    %c1 = arith.constant 1 : index
    %c0_25 = arith.constant 0 : index
    %c0_26 = arith.constant 0 : index
    %30 = vector.load %arg6[%c1, %c0_25, %c0_26] : memref<3x104x208xf32, #tpu.memory_space<vmem>>, vector<1x104x208xf32>
    %31 = vector.shape_cast %30 : vector<1x104x208xf32> to vector<104x208xf32>
    %cst_27 = arith.constant dense<0.000000e+00> : vector<104x208xf32>
    %32 = tpu.matmul %29, %31, %cst_27 {dimension_numbers = #tpu.dot_dimension_numbers<[1], [0], [0], [1], [0, 0, 1, 1], [], []>} : vector<104x104xf32>, vector<104x208xf32>, vector<104x208xf32> -> vector<104x208xf32>
    %33 = arith.addf %28, %32 : vector<104x208xf32>
    %c16 = arith.constant 16 : index
    %c0_28 = arith.constant 0 : index
    %34 = vector.load %arg15[%c16, %c0_28] : memref<120x104xf32, #tpu.memory_space<vmem>>, vector<104x104xf32>
    %c2 = arith.constant 2 : index
    %c0_29 = arith.constant 0 : index
    %c0_30 = arith.constant 0 : index
    %35 = vector.load %arg6[%c2, %c0_29, %c0_30] : memref<3x104x208xf32, #tpu.memory_space<vmem>>, vector<1x104x208xf32>
    %36 = vector.shape_cast %35 : vector<1x104x208xf32> to vector<104x208xf32>
    %cst_31 = arith.constant dense<0.000000e+00> : vector<104x208xf32>
    %37 = tpu.matmul %34, %36, %cst_31 {dimension_numbers = #tpu.dot_dimension_numbers<[1], [0], [0], [1], [0, 0, 1, 1], [], []>} : vector<104x104xf32>, vector<104x208xf32>, vector<104x208xf32> -> vector<104x208xf32>
    %38 = arith.addf %33, %37 : vector<104x208xf32>
    %c0_32 = arith.constant 0 : index
    %c0_33 = arith.constant 0 : index
    %39 = vector.load %arg7[%c0_32, %c0_33] : memref<1x208xf32, #tpu.memory_space<vmem>>, vector<1x208xf32>
    %40 = vector.broadcast %39 : vector<1x208xf32> to vector<104x208xf32>
    %41 = arith.addf %38, %40 : vector<104x208xf32>
    %cst_34 = arith.constant 0.000000e+00 : f32
    %42 = vector.broadcast %cst_34 : f32 to vector<104x208xf32>
    %43 = arith.maximumf %41, %42 : vector<104x208xf32>
    %c0_35 = arith.constant 0 : index
    %c0_36 = arith.constant 0 : index
    %44 = vector.load %arg8[%c0_35, %c0_36] : memref<1x208xf32, #tpu.memory_space<vmem>>, vector<1x208xf32>
    %45 = vector.broadcast %44 : vector<1x208xf32> to vector<104x208xf32>
    %46 = arith.mulf %43, %45 : vector<104x208xf32>
    %c0_37 = arith.constant 0 : index
    %c0_38 = arith.constant 0 : index
    %47 = vector.load %arg9[%c0_37, %c0_38] : memref<1x208xf32, #tpu.memory_space<vmem>>, vector<1x208xf32>
    %48 = vector.broadcast %47 : vector<1x208xf32> to vector<104x208xf32>
    %49 = arith.addf %46, %48 : vector<104x208xf32>
    %cst_39 = arith.constant 0.000000e+00 : f32
    %50 = vector.broadcast %cst_39 : f32 to vector<8x128xf32>
    %c0_40 = arith.constant 0 : index
    %c0_41 = arith.constant 0 : index
    %51 = vector.load %arg11[%c0_40, %c0_41] : memref<1x128xf32, #tpu.memory_space<vmem>>, vector<1x128xf32>
    %52 = vector.broadcast %51 : vector<1x128xf32> to vector<8x128xf32>
    %53 = arith.addf %50, %52 : vector<8x128xf32>
    %54 = vector.extract_strided_slice %49 {offsets = [0, 0], sizes = [8, 208], strides = [1, 1]} : vector<104x208xf32> to vector<8x208xf32>
    %c0_42 = arith.constant 0 : index
    %c0_43 = arith.constant 0 : index
    %c0_44 = arith.constant 0 : index
    %55 = vector.load %arg10[%c0_42, %c0_43, %c0_44] : memref<13x208x128xf32, #tpu.memory_space<vmem>>, vector<1x208x128xf32>
    %56 = vector.shape_cast %55 : vector<1x208x128xf32> to vector<208x128xf32>
    %cst_45 = arith.constant dense<0.000000e+00> : vector<8x128xf32>
    %57 = tpu.matmul %54, %56, %cst_45 {dimension_numbers = #tpu.dot_dimension_numbers<[1], [0], [0], [1], [0, 0, 1, 1], [], []>} : vector<8x208xf32>, vector<208x128xf32>, vector<8x128xf32> -> vector<8x128xf32>
    %58 = arith.addf %53, %57 : vector<8x128xf32>
    %59 = vector.extract_strided_slice %49 {offsets = [8, 0], sizes = [8, 208], strides = [1, 1]} : vector<104x208xf32> to vector<8x208xf32>
    %c1_46 = arith.constant 1 : index
    %c0_47 = arith.constant 0 : index
    %c0_48 = arith.constant 0 : index
    %60 = vector.load %arg10[%c1_46, %c0_47, %c0_48] : memref<13x208x128xf32, #tpu.memory_space<vmem>>, vector<1x208x128xf32>
    %61 = vector.shape_cast %60 : vector<1x208x128xf32> to vector<208x128xf32>
    %cst_49 = arith.constant dense<0.000000e+00> : vector<8x128xf32>
    %62 = tpu.matmul %59, %61, %cst_49 {dimension_numbers = #tpu.dot_dimension_numbers<[1], [0], [0], [1], [0, 0, 1, 1], [], []>} : vector<8x208xf32>, vector<208x128xf32>, vector<8x128xf32> -> vector<8x128xf32>
    %63 = arith.addf %58, %62 : vector<8x128xf32>
    %64 = vector.extract_strided_slice %49 {offsets = [16, 0], sizes = [8, 208], strides = [1, 1]} : vector<104x208xf32> to vector<8x208xf32>
    %c2_50 = arith.constant 2 : index
    %c0_51 = arith.constant 0 : index
    %c0_52 = arith.constant 0 : index
    %65 = vector.load %arg10[%c2_50, %c0_51, %c0_52] : memref<13x208x128xf32, #tpu.memory_space<vmem>>, vector<1x208x128xf32>
    %66 = vector.shape_cast %65 : vector<1x208x128xf32> to vector<208x128xf32>
    %cst_53 = arith.constant dense<0.000000e+00> : vector<8x128xf32>
    %67 = tpu.matmul %64, %66, %cst_53 {dimension_numbers = #tpu.dot_dimension_numbers<[1], [0], [0], [1], [0, 0, 1, 1], [], []>} : vector<8x208xf32>, vector<208x128xf32>, vector<8x128xf32> -> vector<8x128xf32>
    %68 = arith.addf %63, %67 : vector<8x128xf32>
    %69 = vector.extract_strided_slice %49 {offsets = [24, 0], sizes = [8, 208], strides = [1, 1]} : vector<104x208xf32> to vector<8x208xf32>
    %c3 = arith.constant 3 : index
    %c0_54 = arith.constant 0 : index
    %c0_55 = arith.constant 0 : index
    %70 = vector.load %arg10[%c3, %c0_54, %c0_55] : memref<13x208x128xf32, #tpu.memory_space<vmem>>, vector<1x208x128xf32>
    %71 = vector.shape_cast %70 : vector<1x208x128xf32> to vector<208x128xf32>
    %cst_56 = arith.constant dense<0.000000e+00> : vector<8x128xf32>
    %72 = tpu.matmul %69, %71, %cst_56 {dimension_numbers = #tpu.dot_dimension_numbers<[1], [0], [0], [1], [0, 0, 1, 1], [], []>} : vector<8x208xf32>, vector<208x128xf32>, vector<8x128xf32> -> vector<8x128xf32>
    %73 = arith.addf %68, %72 : vector<8x128xf32>
    %74 = vector.extract_strided_slice %49 {offsets = [32, 0], sizes = [8, 208], strides = [1, 1]} : vector<104x208xf32> to vector<8x208xf32>
    %c4 = arith.constant 4 : index
    %c0_57 = arith.constant 0 : index
    %c0_58 = arith.constant 0 : index
    %75 = vector.load %arg10[%c4, %c0_57, %c0_58] : memref<13x208x128xf32, #tpu.memory_space<vmem>>, vector<1x208x128xf32>
    %76 = vector.shape_cast %75 : vector<1x208x128xf32> to vector<208x128xf32>
    %cst_59 = arith.constant dense<0.000000e+00> : vector<8x128xf32>
    %77 = tpu.matmul %74, %76, %cst_59 {dimension_numbers = #tpu.dot_dimension_numbers<[1], [0], [0], [1], [0, 0, 1, 1], [], []>} : vector<8x208xf32>, vector<208x128xf32>, vector<8x128xf32> -> vector<8x128xf32>
    %78 = arith.addf %73, %77 : vector<8x128xf32>
    %79 = vector.extract_strided_slice %49 {offsets = [40, 0], sizes = [8, 208], strides = [1, 1]} : vector<104x208xf32> to vector<8x208xf32>
    %c5 = arith.constant 5 : index
    %c0_60 = arith.constant 0 : index
    %c0_61 = arith.constant 0 : index
    %80 = vector.load %arg10[%c5, %c0_60, %c0_61] : memref<13x208x128xf32, #tpu.memory_space<vmem>>, vector<1x208x128xf32>
    %81 = vector.shape_cast %80 : vector<1x208x128xf32> to vector<208x128xf32>
    %cst_62 = arith.constant dense<0.000000e+00> : vector<8x128xf32>
    %82 = tpu.matmul %79, %81, %cst_62 {dimension_numbers = #tpu.dot_dimension_numbers<[1], [0], [0], [1], [0, 0, 1, 1], [], []>} : vector<8x208xf32>, vector<208x128xf32>, vector<8x128xf32> -> vector<8x128xf32>
    %83 = arith.addf %78, %82 : vector<8x128xf32>
    %84 = vector.extract_strided_slice %49 {offsets = [48, 0], sizes = [8, 208], strides = [1, 1]} : vector<104x208xf32> to vector<8x208xf32>
    %c6 = arith.constant 6 : index
    %c0_63 = arith.constant 0 : index
    %c0_64 = arith.constant 0 : index
    %85 = vector.load %arg10[%c6, %c0_63, %c0_64] : memref<13x208x128xf32, #tpu.memory_space<vmem>>, vector<1x208x128xf32>
    %86 = vector.shape_cast %85 : vector<1x208x128xf32> to vector<208x128xf32>
    %cst_65 = arith.constant dense<0.000000e+00> : vector<8x128xf32>
    %87 = tpu.matmul %84, %86, %cst_65 {dimension_numbers = #tpu.dot_dimension_numbers<[1], [0], [0], [1], [0, 0, 1, 1], [], []>} : vector<8x208xf32>, vector<208x128xf32>, vector<8x128xf32> -> vector<8x128xf32>
    %88 = arith.addf %83, %87 : vector<8x128xf32>
    %89 = vector.extract_strided_slice %49 {offsets = [56, 0], sizes = [8, 208], strides = [1, 1]} : vector<104x208xf32> to vector<8x208xf32>
    %c7 = arith.constant 7 : index
    %c0_66 = arith.constant 0 : index
    %c0_67 = arith.constant 0 : index
    %90 = vector.load %arg10[%c7, %c0_66, %c0_67] : memref<13x208x128xf32, #tpu.memory_space<vmem>>, vector<1x208x128xf32>
    %91 = vector.shape_cast %90 : vector<1x208x128xf32> to vector<208x128xf32>
    %cst_68 = arith.constant dense<0.000000e+00> : vector<8x128xf32>
    %92 = tpu.matmul %89, %91, %cst_68 {dimension_numbers = #tpu.dot_dimension_numbers<[1], [0], [0], [1], [0, 0, 1, 1], [], []>} : vector<8x208xf32>, vector<208x128xf32>, vector<8x128xf32> -> vector<8x128xf32>
    %93 = arith.addf %88, %92 : vector<8x128xf32>
    %94 = vector.extract_strided_slice %49 {offsets = [64, 0], sizes = [8, 208], strides = [1, 1]} : vector<104x208xf32> to vector<8x208xf32>
    %c8_69 = arith.constant 8 : index
    %c0_70 = arith.constant 0 : index
    %c0_71 = arith.constant 0 : index
    %95 = vector.load %arg10[%c8_69, %c0_70, %c0_71] : memref<13x208x128xf32, #tpu.memory_space<vmem>>, vector<1x208x128xf32>
    %96 = vector.shape_cast %95 : vector<1x208x128xf32> to vector<208x128xf32>
    %cst_72 = arith.constant dense<0.000000e+00> : vector<8x128xf32>
    %97 = tpu.matmul %94, %96, %cst_72 {dimension_numbers = #tpu.dot_dimension_numbers<[1], [0], [0], [1], [0, 0, 1, 1], [], []>} : vector<8x208xf32>, vector<208x128xf32>, vector<8x128xf32> -> vector<8x128xf32>
    %98 = arith.addf %93, %97 : vector<8x128xf32>
    %99 = vector.extract_strided_slice %49 {offsets = [72, 0], sizes = [8, 208], strides = [1, 1]} : vector<104x208xf32> to vector<8x208xf32>
    %c9 = arith.constant 9 : index
    %c0_73 = arith.constant 0 : index
    %c0_74 = arith.constant 0 : index
    %100 = vector.load %arg10[%c9, %c0_73, %c0_74] : memref<13x208x128xf32, #tpu.memory_space<vmem>>, vector<1x208x128xf32>
    %101 = vector.shape_cast %100 : vector<1x208x128xf32> to vector<208x128xf32>
    %cst_75 = arith.constant dense<0.000000e+00> : vector<8x128xf32>
    %102 = tpu.matmul %99, %101, %cst_75 {dimension_numbers = #tpu.dot_dimension_numbers<[1], [0], [0], [1], [0, 0, 1, 1], [], []>} : vector<8x208xf32>, vector<208x128xf32>, vector<8x128xf32> -> vector<8x128xf32>
    %103 = arith.addf %98, %102 : vector<8x128xf32>
    %104 = vector.extract_strided_slice %49 {offsets = [80, 0], sizes = [8, 208], strides = [1, 1]} : vector<104x208xf32> to vector<8x208xf32>
    %c10 = arith.constant 10 : index
    %c0_76 = arith.constant 0 : index
    %c0_77 = arith.constant 0 : index
    %105 = vector.load %arg10[%c10, %c0_76, %c0_77] : memref<13x208x128xf32, #tpu.memory_space<vmem>>, vector<1x208x128xf32>
    %106 = vector.shape_cast %105 : vector<1x208x128xf32> to vector<208x128xf32>
    %cst_78 = arith.constant dense<0.000000e+00> : vector<8x128xf32>
    %107 = tpu.matmul %104, %106, %cst_78 {dimension_numbers = #tpu.dot_dimension_numbers<[1], [0], [0], [1], [0, 0, 1, 1], [], []>} : vector<8x208xf32>, vector<208x128xf32>, vector<8x128xf32> -> vector<8x128xf32>
    %108 = arith.addf %103, %107 : vector<8x128xf32>
    %109 = vector.extract_strided_slice %49 {offsets = [88, 0], sizes = [8, 208], strides = [1, 1]} : vector<104x208xf32> to vector<8x208xf32>
    %c11 = arith.constant 11 : index
    %c0_79 = arith.constant 0 : index
    %c0_80 = arith.constant 0 : index
    %110 = vector.load %arg10[%c11, %c0_79, %c0_80] : memref<13x208x128xf32, #tpu.memory_space<vmem>>, vector<1x208x128xf32>
    %111 = vector.shape_cast %110 : vector<1x208x128xf32> to vector<208x128xf32>
    %cst_81 = arith.constant dense<0.000000e+00> : vector<8x128xf32>
    %112 = tpu.matmul %109, %111, %cst_81 {dimension_numbers = #tpu.dot_dimension_numbers<[1], [0], [0], [1], [0, 0, 1, 1], [], []>} : vector<8x208xf32>, vector<208x128xf32>, vector<8x128xf32> -> vector<8x128xf32>
    %113 = arith.addf %108, %112 : vector<8x128xf32>
    %114 = vector.extract_strided_slice %49 {offsets = [96, 0], sizes = [8, 208], strides = [1, 1]} : vector<104x208xf32> to vector<8x208xf32>
    %c12 = arith.constant 12 : index
    %c0_82 = arith.constant 0 : index
    %c0_83 = arith.constant 0 : index
    %115 = vector.load %arg10[%c12, %c0_82, %c0_83] : memref<13x208x128xf32, #tpu.memory_space<vmem>>, vector<1x208x128xf32>
    %116 = vector.shape_cast %115 : vector<1x208x128xf32> to vector<208x128xf32>
    %cst_84 = arith.constant dense<0.000000e+00> : vector<8x128xf32>
    %117 = tpu.matmul %114, %116, %cst_84 {dimension_numbers = #tpu.dot_dimension_numbers<[1], [0], [0], [1], [0, 0, 1, 1], [], []>} : vector<8x208xf32>, vector<208x128xf32>, vector<8x128xf32> -> vector<8x128xf32>
    %118 = arith.addf %113, %117 : vector<8x128xf32>
    %cst_85 = arith.constant 0.000000e+00 : f32
    %119 = vector.broadcast %cst_85 : f32 to vector<8x128xf32>
    %120 = arith.maximumf %118, %119 : vector<8x128xf32>
    %c0_86 = arith.constant 0 : index
    %c0_87 = arith.constant 0 : index
    %121 = vector.load %arg12[%c0_86, %c0_87] : memref<128x10xf32, #tpu.memory_space<vmem>>, vector<128x10xf32>
    %cst_88 = arith.constant dense<0.000000e+00> : vector<8x10xf32>
    %122 = tpu.matmul %120, %121, %cst_88 {dimension_numbers = #tpu.dot_dimension_numbers<[1], [0], [0], [1], [0, 0, 1, 1], [], []>} : vector<8x128xf32>, vector<128x10xf32>, vector<8x10xf32> -> vector<8x10xf32>
    %c0_89 = arith.constant 0 : index
    %c0_90 = arith.constant 0 : index
    %123 = vector.load %arg13[%c0_89, %c0_90] : memref<1x10xf32, #tpu.memory_space<vmem>>, vector<1x10xf32>
    %124 = vector.broadcast %123 : vector<1x10xf32> to vector<8x10xf32>
    %125 = arith.addf %122, %124 : vector<8x10xf32>
    %c0_91 = arith.constant 0 : index
    %c0_92 = arith.constant 0 : index
    %126 = vector.load %arg14[%c0_91, %c0_92] : memref<8x10xf32, #tpu.memory_space<vmem>>, vector<8x10xf32>
    tpu.vector_store %arg14[%c0_91, %c0_92], %125 {strides = array<i32>} : memref<8x10xf32, #tpu.memory_space<vmem>>, vector<8x10xf32>,
    return
  }
  func.func @transform_0(%arg0: i32) -> (i32, i32, i32, i32) {
    %c0_i32 = arith.constant 0 : i32
    %c0_i32_0 = arith.constant 0 : i32
    %c0_i32_1 = arith.constant 0 : i32
    %c0_i32_2 = arith.constant 0 : i32
    return %c0_i32, %c0_i32_0, %arg0, %c0_i32_1 : i32, i32, i32, i32
  }
  func.func @transform_1(%arg0: i32) -> (i32, i32) {
    %c0_i32 = arith.constant 0 : i32
    %c0_i32_0 = arith.constant 0 : i32
    %c0_i32_1 = arith.constant 0 : i32
    return %c0_i32, %c0_i32_0 : i32, i32
  }
  func.func @transform_2(%arg0: i32) -> (i32, i32) {
    %c0_i32 = arith.constant 0 : i32
    %c0_i32_0 = arith.constant 0 : i32
    %c0_i32_1 = arith.constant 0 : i32
    return %c0_i32, %c0_i32_0 : i32, i32
  }
  func.func @transform_3(%arg0: i32) -> (i32, i32) {
    %c0_i32 = arith.constant 0 : i32
    %c0_i32_0 = arith.constant 0 : i32
    %c0_i32_1 = arith.constant 0 : i32
    return %c0_i32, %c0_i32_0 : i32, i32
  }
  func.func @transform_4(%arg0: i32) -> (i32, i32) {
    %c0_i32 = arith.constant 0 : i32
    %c0_i32_0 = arith.constant 0 : i32
    %c0_i32_1 = arith.constant 0 : i32
    return %c0_i32, %c0_i32_0 : i32, i32
  }
  func.func @transform_5(%arg0: i32) -> (i32, i32, i32) {
    %c0_i32 = arith.constant 0 : i32
    %c0_i32_0 = arith.constant 0 : i32
    %c0_i32_1 = arith.constant 0 : i32
    %c0_i32_2 = arith.constant 0 : i32
    return %c0_i32, %c0_i32_0, %c0_i32_1 : i32, i32, i32
  }
  func.func @transform_6(%arg0: i32) -> (i32, i32) {
    %c0_i32 = arith.constant 0 : i32
    %c0_i32_0 = arith.constant 0 : i32
    %c0_i32_1 = arith.constant 0 : i32
    return %c0_i32, %c0_i32_0 : i32, i32
  }
  func.func @transform_7(%arg0: i32) -> (i32, i32) {
    %c0_i32 = arith.constant 0 : i32
    %c0_i32_0 = arith.constant 0 : i32
    %c0_i32_1 = arith.constant 0 : i32
    return %c0_i32, %c0_i32_0 : i32, i32
  }
  func.func @transform_8(%arg0: i32) -> (i32, i32) {
    %c0_i32 = arith.constant 0 : i32
    %c0_i32_0 = arith.constant 0 : i32
    %c0_i32_1 = arith.constant 0 : i32
    return %c0_i32, %c0_i32_0 : i32, i32
  }
  func.func @transform_9(%arg0: i32) -> (i32, i32, i32) {
    %c0_i32 = arith.constant 0 : i32
    %c0_i32_0 = arith.constant 0 : i32
    %c0_i32_1 = arith.constant 0 : i32
    %c0_i32_2 = arith.constant 0 : i32
    return %c0_i32, %c0_i32_0, %c0_i32_1 : i32, i32, i32
  }
  func.func @transform_10(%arg0: i32) -> (i32, i32) {
    %c0_i32 = arith.constant 0 : i32
    %c0_i32_0 = arith.constant 0 : i32
    %c0_i32_1 = arith.constant 0 : i32
    return %c0_i32, %c0_i32_0 : i32, i32
  }
  func.func @transform_11(%arg0: i32) -> (i32, i32) {
    %c0_i32 = arith.constant 0 : i32
    %c0_i32_0 = arith.constant 0 : i32
    %c0_i32_1 = arith.constant 0 : i32
    return %c0_i32, %c0_i32_0 : i32, i32
  }
  func.func @transform_12(%arg0: i32) -> (i32, i32) {
    %c0_i32 = arith.constant 0 : i32
    %c0_i32_0 = arith.constant 0 : i32
    %c0_i32_1 = arith.constant 0 : i32
    return %c0_i32, %c0_i32_0 : i32, i32
  }
  func.func @transform_13(%arg0: i32) -> (i32, i32) {
    %c0_i32 = arith.constant 0 : i32
    %c0_i32_0 = arith.constant 0 : i32
    return %arg0, %c0_i32 : i32, i32
  }
}

</mosaic_0001>

<llo_original>
// kernel: forward.1
$region0: #{forward.1}
  #allocation0 [shape = 'u32[]', space=smem, size = 0x4, offset = 0x4, fixed_abs, tag = 'smem constant byte address 0x4 - core index']
  #allocation1 [shape = 'u32[144,128]{1,0:T(1,128)}', space=vmem, size = 0x12000, scoped, tag = 'internal scratch']
  #allocation2 [shape = 'f32[120,104]{1,0:T(8,128)}', space=vmem, size = 0xf000, scoped, tag = 'scratch operand']
  %s0 = inlined_call_operand.vmem [shape: f32[2,13,8,84], index: 0, kind: input, shape index: {}]
  %s1 = inlined_call_operand.hbm [shape: f32[84,256], index: 1, kind: input, shape index: {}]
  %s2 = inlined_call_operand.hbm [shape: f32[1,256], index: 2, kind: input, shape index: {}]
  %s3 = inlined_call_operand.hbm [shape: f32[1,256], index: 3, kind: input, shape index: {}]
  %s4 = inlined_call_operand.hbm [shape: f32[1,256], index: 4, kind: input, shape index: {}]
  %s5 = inlined_call_operand.vmem [shape: f32[3,104,208], index: 5, kind: input, shape index: {}]
  %s6 = inlined_call_operand.hbm [shape: f32[1,208], index: 6, kind: input, shape index: {}]
  %s7 = inlined_call_operand.hbm [shape: f32[1,208], index: 7, kind: input, shape index: {}]
  %s8 = inlined_call_operand.hbm [shape: f32[1,208], index: 8, kind: input, shape index: {}]
  %s9 = inlined_call_operand.hbm [shape: f32[13,208,128], index: 9, kind: input, shape index: {}]
  %s10 = inlined_call_operand.hbm [shape: f32[1,128], index: 10, kind: input, shape index: {}]
  %s11 = inlined_call_operand.vmem [shape: f32[128,10], index: 11, kind: input, shape index: {}]
  %s12 = inlined_call_operand.hbm [shape: f32[1,10], index: 12, kind: input, shape index: {}]
  %s13 = inlined_call_operand.vmem [shape: f32[8,10], index: 13, kind: output, shape index: {}]
  %s14 = sld [smem:[#allocation0]]
  $region102: #{forward.1} parent=0
    _
  %s16 = ssub.s32 1, %s14
  %s17 = scalar_select 0, %s16, %s14
  $region1: #{forward.1} parent=0
    #allocation3 [shape = 'u8[90112]{0}', space=vmem, size = 0x16000, scoped, tag = 'input window, operand 1, single buffered']
    #allocation4 [shape = 's32[1]{0}', space=sflag, size = 0x4, scoped, tag = 'scoped memory for forward.1']
    #allocation5 [shape = 'u8[1024]{0}', space=vmem, size = 0x400, scoped, tag = 'input window, operand 2, single buffered']
    #allocation6 [shape = 's32[1]{0}', space=sflag, size = 0x4, scoped, tag = 'scoped memory for forward.1']
    #allocation7 [shape = 'u8[1024]{0}', space=vmem, size = 0x400, scoped, tag = 'input window, operand 3, single buffered']
    #allocation8 [shape = 'u8[1024]{0}', space=vmem, size = 0x400, scoped, tag = 'input window, operand 4, single buffered']
    #allocation9 [shape = 's32[1]{0}', space=sflag, size = 0x4, scoped, tag = 'scoped memory for forward.1']
    #allocation10 [shape = 'u8[1024]{0}', space=vmem, size = 0x400, scoped, tag = 'input window, operand 6, single buffered']
    #allocation11 [shape = 'u8[1024]{0}', space=vmem, size = 0x400, scoped, tag = 'input window, operand 7, single buffered']
    #allocation12 [shape = 's32[1]{0}', space=sflag, size = 0x4, scoped, tag = 'scoped memory for forward.1']
    #allocation13 [shape = 'u8[1024]{0}', space=vmem, size = 0x400, scoped, tag = 'input window, operand 8, single buffered']
    #allocation14 [shape = 'u8[1384448]{0}', space=vmem, size = 0x152000, scoped, tag = 'input window, operand 9, single buffered']
    #allocation15 [shape = 's32[1]{0}', space=sflag, size = 0x4, scoped, tag = 'scoped memory for forward.1']
    #allocation16 [shape = 'u8[512]{0}', space=vmem, size = 0x400, scoped, tag = 'input window, operand 10, single buffered']
    #allocation17 [shape = 'u8[512]{0}', space=vmem, size = 0x400, scoped, tag = 'input window, operand 12, single buffered']
    #allocation18 [shape = 's32[1]{0}', space=sflag, size = 0x4, scoped, tag = 'scoped memory for forward.1']
    %18 = vsyncpa [#allocation4], 0
    %19 = vsyncpa [#allocation6], 0
    %20 = vsyncpa [#allocation9], 0
    %21 = vsyncpa [#allocation12], 0
    %22 = vsyncpa [#allocation15], 0
    %23 = vsyncpa [#allocation18], 0
    // Predicated region
    $region2: #{forward.1} parent=1 // pred_check
      _
    $region3: #{forward.1} parent=1 // pred_check_branch
      %25 = sbr.rel (0) target = $region5
    $region4: #{forward.1} parent=1 // pred_region
      _
    $region5: #{forward.1} parent=1 // pred_fallthru
      _
    // Predicated region
    $region6: #{forward.1} parent=1 // pred_check
      _
    $region7: #{forward.1} parent=1 // pred_check_branch
      %27 = sbr.rel (0) target = $region9
    $region8: #{forward.1} parent=1 // pred_region
      %s29 = ssub.s32 2816, 2816
      %30 = vsyncadd [#allocation4], %s29
      %s31 = sshll.u32 [#allocation3], 4
      %s32 = int_to_ptr.vmem [resolvable:$true] %s31
      %37 = dma.hbm_to_vmem [thread:$0]  %s1, 2816, %s32, [#allocation4], 256, 256, 16
    $region9: #{forward.1} parent=1 // pred_fallthru
      _
    // Predicated region
    $region10: #{forward.1} parent=1 // pred_check
      _
    $region11: #{forward.1} parent=1 // pred_check_branch
      %39 = sbr.rel (0) target = $region13
    $region12: #{forward.1} parent=1 // pred_region
      %s41 = ssub.s32 32, 32
      %42 = vsyncadd [#allocation6], %s41
      %s44 = sshll.u32 [#allocation5], 4
      %s45 = int_to_ptr.vmem [resolvable:$true] %s44
      %47 = dma.hbm_to_vmem [thread:$0]  %s2, 32, %s45, [#allocation6]
    $region13: #{forward.1} parent=1 // pred_fallthru
      _
    // Predicated region
    $region14: #{forward.1} parent=1 // pred_check
      _
    $region15: #{forward.1} parent=1 // pred_check_branch
      %49 = sbr.rel (0) target = $region17
    $region16: #{forward.1} parent=1 // pred_region
      %s51 = ssub.s32 32, 32
      %52 = vsyncadd [#allocation6], %s51
      %s54 = sshll.u32 [#allocation7], 4
      %s55 = int_to_ptr.vmem [resolvable:$true] %s54
      %57 = dma.hbm_to_vmem [thread:$0]  %s3, 32, %s55, [#allocation6]
    $region17: #{forward.1} parent=1 // pred_fallthru
      _
    // Predicated region
    $region18: #{forward.1} parent=1 // pred_check
      _
    $region19: #{forward.1} parent=1 // pred_check_branch
      %59 = sbr.rel (0) target = $region21
    $region20: #{forward.1} parent=1 // pred_region
      %s61 = ssub.s32 32, 32
      %62 = vsyncadd [#allocation9], %s61
      %s64 = sshll.u32 [#allocation8], 4
      %s65 = int_to_ptr.vmem [resolvable:$true] %s64
      %67 = dma.hbm_to_vmem [thread:$0]  %s4, 32, %s65, [#allocation9]
    $region21: #{forward.1} parent=1 // pred_fallthru
      _
    // Predicated region
    $region22: #{forward.1} parent=1 // pred_check
      _
    $region23: #{forward.1} parent=1 // pred_check_branch
      %69 = sbr.rel (0) target = $region25
    $region24: #{forward.1} parent=1 // pred_region
      _
    $region25: #{forward.1} parent=1 // pred_fallthru
      _
    // Predicated region
    $region26: #{forward.1} parent=1 // pred_check
      _
    $region27: #{forward.1} parent=1 // pred_check_branch
      %71 = sbr.rel (0) target = $region29
    $region28: #{forward.1} parent=1 // pred_region
      %s73 = ssub.s32 32, 32
      %74 = vsyncadd [#allocation9], %s73
      %s76 = sshll.u32 [#allocation10], 4
      %s77 = int_to_ptr.vmem [resolvable:$true] %s76
      %79 = dma.hbm_to_vmem [thread:$0]  %s6, 32, %s77, [#allocation9]
    $region29: #{forward.1} parent=1 // pred_fallthru
      _
    // Predicated region
    $region30: #{forward.1} parent=1 // pred_check
      _
    $region31: #{forward.1} parent=1 // pred_check_branch
      %81 = sbr.rel (0) target = $region33
    $region32: #{forward.1} parent=1 // pred_region
      %s83 = ssub.s32 32, 32
      %84 = vsyncadd [#allocation12], %s83
      %s86 = sshll.u32 [#allocation11], 4
      %s87 = int_to_ptr.vmem [resolvable:$true] %s86
      %89 = dma.hbm_to_vmem [thread:$0]  %s7, 32, %s87, [#allocation12]
    $region33: #{forward.1} parent=1 // pred_fallthru
      _
    // Predicated region
    $region34: #{forward.1} parent=1 // pred_check
      _
    $region35: #{forward.1} parent=1 // pred_check_branch
      %91 = sbr.rel (0) target = $region37
    $region36: #{forward.1} parent=1 // pred_region
      %s93 = ssub.s32 32, 32
      %94 = vsyncadd [#allocation12], %s93
      %s96 = sshll.u32 [#allocation13], 4
      %s97 = int_to_ptr.vmem [resolvable:$true] %s96
      %99 = dma.hbm_to_vmem [thread:$0]  %s8, 32, %s97, [#allocation12]
    $region37: #{forward.1} parent=1 // pred_fallthru
      _
    // Predicated region
    $region38: #{forward.1} parent=1 // pred_check
      _
    $region39: #{forward.1} parent=1 // pred_check_branch
      %101 = sbr.rel (0) target = $region41
    $region40: #{forward.1} parent=1 // pred_region
      %s103 = ssub.s32 43264, 43264
      %104 = vsyncadd [#allocation15], %s103
      %s105 = sshll.u32 [#allocation14], 4
      %s106 = int_to_ptr.vmem [resolvable:$true] %s105
      %111 = dma.hbm_to_vmem [thread:$0]  %s9, 43264, %s106, [#allocation15], 128, 128, 8
    $region41: #{forward.1} parent=1 // pred_fallthru
      _
    // Predicated region
    $region42: #{forward.1} parent=1 // pred_check
      _
    $region43: #{forward.1} parent=1 // pred_check_branch
      %113 = sbr.rel (0) target = $region45
    $region44: #{forward.1} parent=1 // pred_region
      %s115 = ssub.s32 16, 16
      %116 = vsyncadd [#allocation15], %s115
      %s118 = sshll.u32 [#allocation16], 4
      %s119 = int_to_ptr.vmem [resolvable:$true] %s118
      %121 = dma.hbm_to_vmem [thread:$0]  %s10, 16, %s119, [#allocation15]
    $region45: #{forward.1} parent=1 // pred_fallthru
      _
    // Predicated region
    $region46: #{forward.1} parent=1 // pred_check
      _
    $region47: #{forward.1} parent=1 // pred_check_branch
      %123 = sbr.rel (0) target = $region49
    $region48: #{forward.1} parent=1 // pred_region
      _
    $region49: #{forward.1} parent=1 // pred_fallthru
      _
    // Predicated region
    $region50: #{forward.1} parent=1 // pred_check
      _
    $region51: #{forward.1} parent=1 // pred_check_branch
      %125 = sbr.rel (0) target = $region53
    $region52: #{forward.1} parent=1 // pred_region
      %s127 = ssub.s32 16, 16
      %128 = vsyncadd [#allocation18], %s127
      %s130 = sshll.u32 [#allocation17], 4
      %s131 = int_to_ptr.vmem [resolvable:$true] %s130
      %133 = dma.hbm_to_vmem [thread:$0]  %s12, 16, %s131, [#allocation18]
    $region53: #{forward.1} parent=1 // pred_fallthru
      _
    // Predicated region
    $region54: #{forward.1} parent=1 // pred_check
      _
    $region55: #{forward.1} parent=1 // pred_check_branch
      %135 = sbr.rel (0) target = $region57
    $region56: #{forward.1} parent=1 // pred_region
      %136 = dma.done [#allocation4], 2816
    $region57: #{forward.1} parent=1 // pred_fallthru
      _
    // Predicated region
    $region58: #{forward.1} parent=1 // pred_check
      _
    $region59: #{forward.1} parent=1 // pred_check_branch
      %138 = sbr.rel (0) target = $region61
    $region60: #{forward.1} parent=1 // pred_region
      %139 = dma.done [#allocation6], 32
    $region61: #{forward.1} parent=1 // pred_fallthru
      _
    // Predicated region
    $region62: #{forward.1} parent=1 // pred_check
      _
    $region63: #{forward.1} parent=1 // pred_check_branch
      %141 = sbr.rel (0) target = $region65
    $region64: #{forward.1} parent=1 // pred_region
      %142 = dma.done [#allocation6], 32
    $region65: #{forward.1} parent=1 // pred_fallthru
      _
    // Predicated region
    $region66: #{forward.1} parent=1 // pred_check
      _
    $region67: #{forward.1} parent=1 // pred_check_branch
      %144 = sbr.rel (0) target = $region69
    $region68: #{forward.1} parent=1 // pred_region
      %145 = dma.done [#allocation9], 32
    $region69: #{forward.1} parent=1 // pred_fallthru
      _
    // Predicated region
    $region70: #{forward.1} parent=1 // pred_check
      _
    $region71: #{forward.1} parent=1 // pred_check_branch
      %147 = sbr.rel (0) target = $region73
    $region72: #{forward.1} parent=1 // pred_region
      %148 = dma.done [#allocation9], 32
    $region73: #{forward.1} parent=1 // pred_fallthru
      _
    // Predicated region
    $region74: #{forward.1} parent=1 // pred_check
      _
    $region75: #{forward.1} parent=1 // pred_check_branch
      %150 = sbr.rel (0) target = $region77
    $region76: #{forward.1} parent=1 // pred_region
      %151 = dma.done [#allocation12], 32
    $region77: #{forward.1} parent=1 // pred_fallthru
      _
    // Predicated region
    $region78: #{forward.1} parent=1 // pred_check
      _
    $region79: #{forward.1} parent=1 // pred_check_branch
      %153 = sbr.rel (0) target = $region81
    $region80: #{forward.1} parent=1 // pred_region
      %154 = dma.done [#allocation12], 32
    $region81: #{forward.1} parent=1 // pred_fallthru
      _
    // Predicated region
    $region82: #{forward.1} parent=1 // pred_check
      _
    $region83: #{forward.1} parent=1 // pred_check_branch
      %156 = sbr.rel (0) target = $region85
    $region84: #{forward.1} parent=1 // pred_region
      %157 = dma.done [#allocation15], 43264
    $region85: #{forward.1} parent=1 // pred_fallthru
      _
    // Predicated region
    $region86: #{forward.1} parent=1 // pred_check
      _
    $region87: #{forward.1} parent=1 // pred_check_branch
      %159 = sbr.rel (0) target = $region89
    $region88: #{forward.1} parent=1 // pred_region
      %160 = dma.done [#allocation15], 16
    $region89: #{forward.1} parent=1 // pred_fallthru
      _
    // Predicated region
    $region90: #{forward.1} parent=1 // pred_check
      _
    $region91: #{forward.1} parent=1 // pred_check_branch
      %162 = sbr.rel (0) target = $region93
    $region92: #{forward.1} parent=1 // pred_region
      %163 = dma.done [#allocation18], 16
    $region93: #{forward.1} parent=1 // pred_fallthru
      _
    %v164 = vld [vmem:[%s0] sm:$0xff]
    %v165 = vld [vmem:[%s0 + $0x8] sm:$0xff]
    %v166 = vld [vmem:[%s0 + $0x10] sm:$0xff]
    %v167 = vld [vmem:[%s0 + $0x18] sm:$0xff]
    %v168 = vld [vmem:[%s0 + $0x20] sm:$0xff]
    %v169 = vld [vmem:[%s0 + $0x28] sm:$0xff]
    %v170 = vld [vmem:[%s0 + $0x30] sm:$0xff]
    %v171 = vld [vmem:[%s0 + $0x38] sm:$0xff]
    %v172 = vld [vmem:[%s0 + $0x40] sm:$0xff]
    %v173 = vld [vmem:[%s0 + $0x48] sm:$0xff]
    %v174 = vld [vmem:[%s0 + $0x50] sm:$0xff]
    %v175 = vld [vmem:[%s0 + $0x58] sm:$0xff]
    %v176 = vld [vmem:[%s0 + $0x60] sm:$0xff]
    %v177 = vld [vmem:[%s0 + $0x68] sm:$0xff]
    %v178 = vld [vmem:[%s0 + $0x70] sm:$0xff]
    %v179 = vld [vmem:[%s0 + $0x78] sm:$0xff]
    %v180 = vld [vmem:[%s0 + $0x80] sm:$0xff]
    %v181 = vld [vmem:[%s0 + $0x88] sm:$0xff]
    %v182 = vld [vmem:[%s0 + $0x90] sm:$0xff]
    %v183 = vld [vmem:[%s0 + $0x98] sm:$0xff]
    %v184 = vld [vmem:[%s0 + $0xa0] sm:$0xff]
    %v185 = vld [vmem:[%s0 + $0xa8] sm:$0xff]
    %v186 = vld [vmem:[%s0 + $0xb0] sm:$0xff]
    %v187 = vld [vmem:[%s0 + $0xb8] sm:$0xff]
    %v188 = vld [vmem:[%s0 + $0xc0] sm:$0xff]
    %v189 = vld [vmem:[%s0 + $0xc8] sm:$0xff]
    %v190 = vld [vmem:[#allocation3] sm:$0xff]
    %v191 = vld [vmem:[#allocation3 + $0x8] sm:$0xff]
    %v192 = vld [vmem:[#allocation3 + $0x10] sm:$0xff]
    %v193 = vld [vmem:[#allocation3 + $0x18] sm:$0xff]
    %v194 = vld [vmem:[#allocation3 + $0x20] sm:$0xff]
    %v195 = vld [vmem:[#allocation3 + $0x28] sm:$0xff]
    %v196 = vld [vmem:[#allocation3 + $0x30] sm:$0xff]
    %v197 = vld [vmem:[#allocation3 + $0x38] sm:$0xff]
    %v198 = vld [vmem:[#allocation3 + $0x40] sm:$0xff]
    %v199 = vld [vmem:[#allocation3 + $0x48] sm:$0xff]
    %v200 = vld [vmem:[#allocation3 + $0x50] sm:$0xff]
    %v201 = vld [vmem:[#allocation3 + $0x58] sm:$0xff]
    %v202 = vld [vmem:[#allocation3 + $0x60] sm:$0xff]
    %v203 = vld [vmem:[#allocation3 + $0x68] sm:$0xff]
    %v204 = vld [vmem:[#allocation3 + $0x70] sm:$0xff]
    %v205 = vld [vmem:[#allocation3 + $0x78] sm:$0xff]
    %v206 = vld [vmem:[#allocation3 + $0x80] sm:$0xff]
    %v207 = vld [vmem:[#allocation3 + $0x88] sm:$0xff]
    %v208 = vld [vmem:[#allocation3 + $0x90] sm:$0xff]
    %v209 = vld [vmem:[#allocation3 + $0x98] sm:$0xff]
    %v210 = vld [vmem:[#allocation3 + $0xa0] sm:$0xf]
    %v211 = vld [vmem:[#allocation3 + $0xa8] sm:$0xf]
    %v212 = vld [vmem:[#allocation5] sm:$0x3]
    %v214 = vlaneseq
    %v215 = vshrl.u32 %v214, 7
    %v216 = vsub.s32 0, %v215
    %v217 = vrot.slane %v212, %v216
    %v218 = vlaneseq
    %v219 = vshrl.u32 %v218, 7
    %v220 = vsub.s32 1, %v219
    %v221 = vrot.slane %v212, %v220
    %vm224 = vcmask 687104
    %v226 = vsel %vm224, %v164, 0
    %v229 = vsel %vm224, %v165, 0
    %v232 = vsel %vm224, %v166, 0
    %v235 = vsel %vm224, %v167, 0
    %v238 = vsel %vm224, %v168, 0
    %v241 = vsel %vm224, %v169, 0
    %v244 = vsel %vm224, %v170, 0
    %v247 = vsel %vm224, %v171, 0
    %v250 = vsel %vm224, %v172, 0
    %v253 = vsel %vm224, %v173, 0
    %v256 = vsel %vm224, %v174, 0
    %v259 = vsel %vm224, %v175, 0
    %v262 = vsel %vm224, %v176, 0
    %v265 = vsel %vm224, %v177, 0
    %v268 = vsel %vm224, %v178, 0
    %v271 = vsel %vm224, %v179, 0
    %v274 = vsel %vm224, %v180, 0
    %v277 = vsel %vm224, %v181, 0
    %v280 = vsel %vm224, %v182, 0
    %v283 = vsel %vm224, %v183, 0
    %v286 = vsel %vm224, %v184, 0
    %v289 = vsel %vm224, %v185, 0
    %v292 = vsel %vm224, %v186, 0
    %v295 = vsel %vm224, %v187, 0
    %v298 = vsel %vm224, %v188, 0
    %v301 = vsel %vm224, %v189, 0
    %vm303 = vcmask 1043456
    %v305 = vsel %vm303, %v210, 0
    %v308 = vsel %vm303, %v211, 0
    %310 = vmatprep.subr.mxu0 %v191
    %311 = vmatpush1.msra.mxu0 %v190
    %312 = vmatprep.subr.mxu0 %v193
    %313 = vmatpush1.msra.mxu0 %v192
    %314 = vmatprep.subr.mxu0 %v195
    %315 = vmatpush1.msra.mxu0 %v194
    %316 = vmatprep.subr.mxu0 %v197
    %317 = vmatpush1.msra.mxu0 %v196
    %318 = vmatprep.subr.mxu0 %v199
    %319 = vmatpush1.msra.mxu0 %v198
    %320 = vmatprep.subr.mxu0 %v201
    %321 = vmatpush1.msra.mxu0 %v200
    %322 = vmatprep.subr.mxu0 %v203
    %323 = vmatpush1.msra.mxu0 %v202
    %324 = vmatprep.subr.mxu0 %v205
    %325 = vmatpush1.msra.mxu0 %v204
    %326 = vmatprep.subr.mxu0 %v207
    %327 = vmatpush1.msra.mxu0 %v206
    %328 = vmatprep.subr.mxu0 %v209
    %329 = vmatpush1.msra.mxu0 %v208
    %330 = vmatprep.subr.mxu0 %v308
    %331 = vmatpush1.msra.mxu0 %v305
    %332 = vmatprep.subr.mxu0 0.0
    %333 = vmatpush1.msra.mxu0 0.0
    %334 = vmatprep.subr.mxu0 0.0
    %335 = vmatpush1.msra.mxu0 0.0
    %336 = vmatprep.subr.mxu0 0.0
    %337 = vmatpush1.msra.mxu0 0.0
    %338 = vmatprep.subr.mxu0 0.0
    %339 = vmatpush1.msra.mxu0 0.0
    %340 = vmatprep.subr.mxu0 0.0
    %341 = vmatpush1.msra.mxu0 0.0
    %342 = vmatprep.subr.mxu0 0.0
    %343 = vmatpush1.msra.mxu0 0.0
    %344 = vmatprep.subr.mxu0 0.0
    %345 = vmatpush1.msra.mxu0 0.0
    %346 = vmatprep.subr.mxu0 0.0
    %347 = vmatpush1.msra.mxu0 0.0
    %348 = vmatprep.subr.mxu0 0.0
    %349 = vmatpush1.msra.mxu0 0.0
    %350 = vmatprep.subr.mxu0 0.0
    %351 = vmatpush1.msra.mxu0 0.0
    %352 = vmatprep.subr.mxu0 0.0
    %353 = vmatpush1.msra.mxu0 0.0
    %354 = vmatprep.subr.mxu0 0.0
    %355 = vmatpush1.msra.mxu0 0.0
    %356 = vmatprep.subr.mxu0 0.0
    %357 = vmatpush1.msra.mxu0 0.0
    %358 = vmatprep.subr.mxu0 0.0
    %359 = vmatpush1.msra.mxu0 0.0
    %360 = vmatprep.subr.mxu0 0.0
    %361 = vmatpush1.msra.mxu0 0.0
    %362 = vmatprep.subr.mxu0 0.0
    %363 = vmatpush1.msra.mxu0 0.0
    %364 = vmatprep.subr.mxu0 0.0
    %365 = vmatpush1.msra.mxu0 0.0
    %366 = vmatprep.subr.mxu0 0.0
    %367 = vmatpush1.msra.mxu0 0.0
    %368 = vmatprep.subr.mxu0 0.0
    %369 = vmatpush1.msra.mxu0 0.0
    %370 = vmatprep.subr.mxu0 0.0
    %371 = vmatpush1.msra.mxu0 0.0
    %372 = vmatprep.subr.mxu0 0.0
    %373 = vmatpush1.msra.mxu0 0.0
    %374 = vmatprep.mubr.f32.mxu0 0.0
    %375 = vmatmul.mubr.f32.gmra.mrb[0].mxu0 %v226
    %v376 = vpop.f32.mrb[0].mxu0
    %v377 = vadd.f32 %v217, %v376
    %v378 = vpop.f32.mrb[0].mxu0
    %v379 = vadd.f32 %v221, %v378
    %380 = vmatprep.mubr.f32.mxu0 0.0
    %381 = vmatmul.mubr.f32.gmra.mrb[0].mxu0 %v229
    %v382 = vpop.f32.mrb[0].mxu0
    %v383 = vadd.f32 %v217, %v382
    %v384 = vpop.f32.mrb[0].mxu0
    %v385 = vadd.f32 %v221, %v384
    %386 = vmatprep.mubr.f32.mxu0 0.0
    %387 = vmatmul.mubr.f32.gmra.mrb[0].mxu0 %v232
    %v388 = vpop.f32.mrb[0].mxu0
    %v389 = vadd.f32 %v217, %v388
    %v390 = vpop.f32.mrb[0].mxu0
    %v391 = vadd.f32 %v221, %v390
    %392 = vmatprep.mubr.f32.mxu0 0.0
    %393 = vmatmul.mubr.f32.gmra.mrb[0].mxu0 %v235
    %v394 = vpop.f32.mrb[0].mxu0
    %v395 = vadd.f32 %v217, %v394
    %v396 = vpop.f32.mrb[0].mxu0
    %v397 = vadd.f32 %v221, %v396
    %398 = vmatprep.mubr.f32.mxu0 0.0
    %399 = vmatmul.mubr.f32.gmra.mrb[0].mxu0 %v238
    %v400 = vpop.f32.mrb[0].mxu0
    %v401 = vadd.f32 %v217, %v400
    %v402 = vpop.f32.mrb[0].mxu0
    %v403 = vadd.f32 %v221, %v402
    %404 = vmatprep.mubr.f32.mxu0 0.0
    %405 = vmatmul.mubr.f32.gmra.mrb[0].mxu0 %v241
    %v406 = vpop.f32.mrb[0].mxu0
    %v407 = vadd.f32 %v217, %v406
    %v408 = vpop.f32.mrb[0].mxu0
    %v409 = vadd.f32 %v221, %v408
    %410 = vmatprep.mubr.f32.mxu0 0.0
    %411 = vmatmul.mubr.f32.gmra.mrb[0].mxu0 %v244
    %v412 = vpop.f32.mrb[0].mxu0
    %v413 = vadd.f32 %v217, %v412
    %v414 = vpop.f32.mrb[0].mxu0
    %v415 = vadd.f32 %v221, %v414
    %416 = vmatprep.mubr.f32.mxu0 0.0
    %417 = vmatmul.mubr.f32.gmra.mrb[0].mxu0 %v247
    %v418 = vpop.f32.mrb[0].mxu0
    %v419 = vadd.f32 %v217, %v418
    %v420 = vpop.f32.mrb[0].mxu0
    %v421 = vadd.f32 %v221, %v420
    %422 = vmatprep.mubr.f32.mxu0 0.0
    %423 = vmatmul.mubr.f32.gmra.mrb[0].mxu0 %v250
    %v424 = vpop.f32.mrb[0].mxu0
    %v425 = vadd.f32 %v217, %v424
    %v426 = vpop.f32.mrb[0].mxu0
    %v427 = vadd.f32 %v221, %v426
    %428 = vmatprep.mubr.f32.mxu0 0.0
    %429 = vmatmul.mubr.f32.gmra.mrb[0].mxu0 %v253
    %v430 = vpop.f32.mrb[0].mxu0
    %v431 = vadd.f32 %v217, %v430
    %v432 = vpop.f32.mrb[0].mxu0
    %v433 = vadd.f32 %v221, %v432
    %434 = vmatprep.mubr.f32.mxu0 0.0
    %435 = vmatmul.mubr.f32.gmra.mrb[0].mxu0 %v256
    %v436 = vpop.f32.mrb[0].mxu0
    %v437 = vadd.f32 %v217, %v436
    %v438 = vpop.f32.mrb[0].mxu0
    %v439 = vadd.f32 %v221, %v438
    %440 = vmatprep.mubr.f32.mxu0 0.0
    %441 = vmatmul.mubr.f32.gmra.mrb[0].mxu0 %v259
    %v442 = vpop.f32.mrb[0].mxu0
    %v443 = vadd.f32 %v217, %v442
    %v444 = vpop.f32.mrb[0].mxu0
    %v445 = vadd.f32 %v221, %v444
    %446 = vmatprep.mubr.f32.mxu0 0.0
    %447 = vmatmul.mubr.f32.gmra.mrb[0].mxu0 %v262
    %v448 = vpop.f32.mrb[0].mxu0
    %v449 = vadd.f32 %v217, %v448
    %v450 = vpop.f32.mrb[0].mxu0
    %v451 = vadd.f32 %v221, %v450
    %452 = vmatprep.mubr.f32.mxu0 0.0
    %453 = vmatmul.mubr.f32.gmra.mrb[0].mxu0 %v265
    %v454 = vpop.f32.mrb[0].mxu0
    %v455 = vadd.f32 %v217, %v454
    %v456 = vpop.f32.mrb[0].mxu0
    %v457 = vadd.f32 %v221, %v456
    %458 = vmatprep.mubr.f32.mxu0 0.0
    %459 = vmatmul.mubr.f32.gmra.mrb[0].mxu0 %v268
    %v460 = vpop.f32.mrb[0].mxu0
    %v461 = vadd.f32 %v217, %v460
    %v462 = vpop.f32.mrb[0].mxu0
    %v463 = vadd.f32 %v221, %v462
    %464 = vmatprep.mubr.f32.mxu0 0.0
    %465 = vmatmul.mubr.f32.gmra.mrb[0].mxu0 %v271
    %v466 = vpop.f32.mrb[0].mxu0
    %v467 = vadd.f32 %v217, %v466
    %v468 = vpop.f32.mrb[0].mxu0
    %v469 = vadd.f32 %v221, %v468
    %470 = vmatprep.mubr.f32.mxu0 0.0
    %471 = vmatmul.mubr.f32.gmra.mrb[0].mxu0 %v274
    %v472 = vpop.f32.mrb[0].mxu0
    %v473 = vadd.f32 %v217, %v472
    %v474 = vpop.f32.mrb[0].mxu0
    %v475 = vadd.f32 %v221, %v474
    %476 = vmatprep.mubr.f32.mxu0 0.0
    %477 = vmatmul.mubr.f32.gmra.mrb[0].mxu0 %v277
    %v478 = vpop.f32.mrb[0].mxu0
    %v479 = vadd.f32 %v217, %v478
    %v480 = vpop.f32.mrb[0].mxu0
    %v481 = vadd.f32 %v221, %v480
    %482 = vmatprep.mubr.f32.mxu0 0.0
    %483 = vmatmul.mubr.f32.gmra.mrb[0].mxu0 %v280
    %v484 = vpop.f32.mrb[0].mxu0
    %v485 = vadd.f32 %v217, %v484
    %v486 = vpop.f32.mrb[0].mxu0
    %v487 = vadd.f32 %v221, %v486
    %488 = vmatprep.mubr.f32.mxu0 0.0
    %489 = vmatmul.mubr.f32.gmra.mrb[0].mxu0 %v283
    %v490 = vpop.f32.mrb[0].mxu0
    %v491 = vadd.f32 %v217, %v490
    %v492 = vpop.f32.mrb[0].mxu0
    %v493 = vadd.f32 %v221, %v492
    %494 = vmatprep.mubr.f32.mxu0 0.0
    %495 = vmatmul.mubr.f32.gmra.mrb[0].mxu0 %v286
    %v496 = vpop.f32.mrb[0].mxu0
    %v497 = vadd.f32 %v217, %v496
    %v498 = vpop.f32.mrb[0].mxu0
    %v499 = vadd.f32 %v221, %v498
    %500 = vmatprep.mubr.f32.mxu0 0.0
    %501 = vmatmul.mubr.f32.gmra.mrb[0].mxu0 %v289
    %v502 = vpop.f32.mrb[0].mxu0
    %v503 = vadd.f32 %v217, %v502
    %v504 = vpop.f32.mrb[0].mxu0
    %v505 = vadd.f32 %v221, %v504
    %506 = vmatprep.mubr.f32.mxu0 0.0
    %507 = vmatmul.mubr.f32.gmra.mrb[0].mxu0 %v292
    %v508 = vpop.f32.mrb[0].mxu0
    %v509 = vadd.f32 %v217, %v508
    %v510 = vpop.f32.mrb[0].mxu0
    %v511 = vadd.f32 %v221, %v510
    %512 = vmatprep.mubr.f32.mxu0 0.0
    %513 = vmatmul.mubr.f32.gmra.mrb[0].mxu0 %v295
    %v514 = vpop.f32.mrb[0].mxu0
    %v515 = vadd.f32 %v217, %v514
    %v516 = vpop.f32.mrb[0].mxu0
    %v517 = vadd.f32 %v221, %v516
    %518 = vmatprep.mubr.f32.mxu0 0.0
    %519 = vmatmul.mubr.f32.gmra.mrb[0].mxu0 %v298
    %v520 = vpop.f32.mrb[0].mxu0
    %v521 = vadd.f32 %v217, %v520
    %v522 = vpop.f32.mrb[0].mxu0
    %v523 = vadd.f32 %v221, %v522
    %524 = vmatprep.mubr.f32.mxu0 0.0
    %525 = vmatmul.mubr.f32.gmra.mrb[0].mxu0 %v301
    %v526 = vpop.f32.mrb[0].mxu0
    %v527 = vadd.f32 %v217, %v526
    %v528 = vpop.f32.mrb[0].mxu0
    %v529 = vadd.f32 %v221, %v528
    %530 = vdwg.mxu0
    %v531 = vmax.f32 %v377, 0.0
    %v532 = vmax.f32 %v379, 0.0
    %v533 = vmax.f32 %v383, 0.0
    %v534 = vmax.f32 %v385, 0.0
    %v535 = vmax.f32 %v389, 0.0
    %v536 = vmax.f32 %v391, 0.0
    %v537 = vmax.f32 %v395, 0.0
    %v538 = vmax.f32 %v397, 0.0
    %v539 = vmax.f32 %v401, 0.0
    %v540 = vmax.f32 %v403, 0.0
    %v541 = vmax.f32 %v407, 0.0
    %v542 = vmax.f32 %v409, 0.0
    %v543 = vmax.f32 %v413, 0.0
    %v544 = vmax.f32 %v415, 0.0
    %v545 = vmax.f32 %v419, 0.0
    %v546 = vmax.f32 %v421, 0.0
    %v547 = vmax.f32 %v425, 0.0
    %v548 = vmax.f32 %v427, 0.0
    %v549 = vmax.f32 %v431, 0.0
    %v550 = vmax.f32 %v433, 0.0
    %v551 = vmax.f32 %v437, 0.0
    %v552 = vmax.f32 %v439, 0.0
    %v553 = vmax.f32 %v443, 0.0
    %v554 = vmax.f32 %v445, 0.0
    %v555 = vmax.f32 %v449, 0.0
    %v556 = vmax.f32 %v451, 0.0
    %v557 = vmax.f32 %v455, 0.0
    %v558 = vmax.f32 %v457, 0.0
    %v559 = vmax.f32 %v461, 0.0
    %v560 = vmax.f32 %v463, 0.0
    %v561 = vmax.f32 %v467, 0.0
    %v562 = vmax.f32 %v469, 0.0
    %v563 = vmax.f32 %v473, 0.0
    %v564 = vmax.f32 %v475, 0.0
    %v565 = vmax.f32 %v479, 0.0
    %v566 = vmax.f32 %v481, 0.0
    %v567 = vmax.f32 %v485, 0.0
    %v568 = vmax.f32 %v487, 0.0
    %v569 = vmax.f32 %v491, 0.0
    %v570 = vmax.f32 %v493, 0.0
    %v571 = vmax.f32 %v497, 0.0
    %v572 = vmax.f32 %v499, 0.0
    %v573 = vmax.f32 %v503, 0.0
    %v574 = vmax.f32 %v505, 0.0
    %v575 = vmax.f32 %v509, 0.0
    %v576 = vmax.f32 %v511, 0.0
    %v577 = vmax.f32 %v515, 0.0
    %v578 = vmax.f32 %v517, 0.0
    %v579 = vmax.f32 %v521, 0.0
    %v580 = vmax.f32 %v523, 0.0
    %v581 = vmax.f32 %v527, 0.0
    %v582 = vmax.f32 %v529, 0.0
    %v583 = vld [vmem:[#allocation7] sm:$0x3]
    %v585 = vlaneseq
    %v586 = vshrl.u32 %v585, 7
    %v587 = vsub.s32 0, %v586
    %v588 = vrot.slane %v583, %v587
    %v589 = vlaneseq
    %v590 = vshrl.u32 %v589, 7
    %v591 = vsub.s32 1, %v590
    %v592 = vrot.slane %v583, %v591
    %v595 = vmul.f32 %v531, %v588
    %v596 = vmul.f32 %v532, %v592
    %v597 = vmul.f32 %v533, %v588
    %v598 = vmul.f32 %v534, %v592
    %v599 = vmul.f32 %v535, %v588
    %v600 = vmul.f32 %v536, %v592
    %v601 = vmul.f32 %v537, %v588
    %v602 = vmul.f32 %v538, %v592
    %v603 = vmul.f32 %v539, %v588
    %v604 = vmul.f32 %v540, %v592
    %v605 = vmul.f32 %v541, %v588
    %v606 = vmul.f32 %v542, %v592
    %v607 = vmul.f32 %v543, %v588
    %v608 = vmul.f32 %v544, %v592
    %v609 = vmul.f32 %v545, %v588
    %v610 = vmul.f32 %v546, %v592
    %v611 = vmul.f32 %v547, %v588
    %v612 = vmul.f32 %v548, %v592
    %v613 = vmul.f32 %v549, %v588
    %v614 = vmul.f32 %v550, %v592
    %v615 = vmul.f32 %v551, %v588
    %v616 = vmul.f32 %v552, %v592
    %v617 = vmul.f32 %v553, %v588
    %v618 = vmul.f32 %v554, %v592
    %v619 = vmul.f32 %v555, %v588
    %v620 = vmul.f32 %v556, %v592
    %v621 = vmul.f32 %v557, %v588
    %v622 = vmul.f32 %v558, %v592
    %v623 = vmul.f32 %v559, %v588
    %v624 = vmul.f32 %v560, %v592
    %v625 = vmul.f32 %v561, %v588
    %v626 = vmul.f32 %v562, %v592
    %v627 = vmul.f32 %v563, %v588
    %v628 = vmul.f32 %v564, %v592
    %v629 = vmul.f32 %v565, %v588
    %v630 = vmul.f32 %v566, %v592
    %v631 = vmul.f32 %v567, %v588
    %v632 = vmul.f32 %v568, %v592
    %v633 = vmul.f32 %v569, %v588
    %v634 = vmul.f32 %v570, %v592
    %v635 = vmul.f32 %v571, %v588
    %v636 = vmul.f32 %v572, %v592
    %v637 = vmul.f32 %v573, %v588
    %v638 = vmul.f32 %v574, %v592
    %v639 = vmul.f32 %v575, %v588
    %v640 = vmul.f32 %v576, %v592
    %v641 = vmul.f32 %v577, %v588
    %v642 = vmul.f32 %v578, %v592
    %v643 = vmul.f32 %v579, %v588
    %v644 = vmul.f32 %v580, %v592
    %v645 = vmul.f32 %v581, %v588
    %v646 = vmul.f32 %v582, %v592
    %v647 = vld [vmem:[#allocation8] sm:$0x3]
    %v649 = vlaneseq
    %v650 = vshrl.u32 %v649, 7
    %v651 = vsub.s32 0, %v650
    %v652 = vrot.slane %v647, %v651
    %v653 = vlaneseq
    %v654 = vshrl.u32 %v653, 7
    %v655 = vsub.s32 1, %v654
    %v656 = vrot.slane %v647, %v655
    %v659 = vadd.f32 %v595, %v652
    %v660 = vadd.f32 %v596, %v656
    %v661 = vadd.f32 %v597, %v652
    %v662 = vadd.f32 %v598, %v656
    %v663 = vadd.f32 %v599, %v652
    %v664 = vadd.f32 %v600, %v656
    %v665 = vadd.f32 %v601, %v652
    %v666 = vadd.f32 %v602, %v656
    %v667 = vadd.f32 %v603, %v652
    %v668 = vadd.f32 %v604, %v656
    %v669 = vadd.f32 %v605, %v652
    %v670 = vadd.f32 %v606, %v656
    %v671 = vadd.f32 %v607, %v652
    %v672 = vadd.f32 %v608, %v656
    %v673 = vadd.f32 %v609, %v652
    %v674 = vadd.f32 %v610, %v656
    %v675 = vadd.f32 %v611, %v652
    %v676 = vadd.f32 %v612, %v656
    %v677 = vadd.f32 %v613, %v652
    %v678 = vadd.f32 %v614, %v656
    %v679 = vadd.f32 %v615, %v652
    %v680 = vadd.f32 %v616, %v656
    %v681 = vadd.f32 %v617, %v652
    %v682 = vadd.f32 %v618, %v656
    %v683 = vadd.f32 %v619, %v652
    %v684 = vadd.f32 %v620, %v656
    %v685 = vadd.f32 %v621, %v652
    %v686 = vadd.f32 %v622, %v656
    %v687 = vadd.f32 %v623, %v652
    %v688 = vadd.f32 %v624, %v656
    %v689 = vadd.f32 %v625, %v652
    %v690 = vadd.f32 %v626, %v656
    %v691 = vadd.f32 %v627, %v652
    %v692 = vadd.f32 %v628, %v656
    %v693 = vadd.f32 %v629, %v652
    %v694 = vadd.f32 %v630, %v656
    %v695 = vadd.f32 %v631, %v652
    %v696 = vadd.f32 %v632, %v656
    %v697 = vadd.f32 %v633, %v652
    %v698 = vadd.f32 %v634, %v656
    %v699 = vadd.f32 %v635, %v652
    %v700 = vadd.f32 %v636, %v656
    %v701 = vadd.f32 %v637, %v652
    %v702 = vadd.f32 %v638, %v656
    %v703 = vadd.f32 %v639, %v652
    %v704 = vadd.f32 %v640, %v656
    %v705 = vadd.f32 %v641, %v652
    %v706 = vadd.f32 %v642, %v656
    %v707 = vadd.f32 %v643, %v652
    %v708 = vadd.f32 %v644, %v656
    %v709 = vadd.f32 %v645, %v652
    %v710 = vadd.f32 %v646, %v656
    %v711 = vmax.f32 %v659, %v660
    %v712 = vmax.f32 %v661, %v662
    %v713 = vmax.f32 %v663, %v664
    %v714 = vmax.f32 %v665, %v666
    %v715 = vmax.f32 %v667, %v668
    %v716 = vmax.f32 %v669, %v670
    %v717 = vmax.f32 %v671, %v672
    %v718 = vmax.f32 %v673, %v674
    %v719 = vmax.f32 %v675, %v676
    %v720 = vmax.f32 %v677, %v678
    %v721 = vmax.f32 %v679, %v680
    %v722 = vmax.f32 %v681, %v682
    %v723 = vmax.f32 %v683, %v684
    %v724 = vmax.f32 %v685, %v686
    %v725 = vmax.f32 %v687, %v688
    %v726 = vmax.f32 %v689, %v690
    %v727 = vmax.f32 %v691, %v692
    %v728 = vmax.f32 %v693, %v694
    %v729 = vmax.f32 %v695, %v696
    %v730 = vmax.f32 %v697, %v698
    %v731 = vmax.f32 %v699, %v700
    %v732 = vmax.f32 %v701, %v702
    %v733 = vmax.f32 %v703, %v704
    %v734 = vmax.f32 %v705, %v706
    %v735 = vmax.f32 %v707, %v708
    %v736 = vmax.f32 %v709, %v710
    %v737 = vmax.f32 %v711, %v724
    %v738 = vmax.f32 %v712, %v725
    %v739 = vmax.f32 %v713, %v726
    %v740 = vmax.f32 %v714, %v727
    %v741 = vmax.f32 %v715, %v728
    %v742 = vmax.f32 %v716, %v729
    %v743 = vmax.f32 %v717, %v730
    %v744 = vmax.f32 %v718, %v731
    %v745 = vmax.f32 %v719, %v732
    %v746 = vmax.f32 %v720, %v733
    %v747 = vmax.f32 %v721, %v734
    %v748 = vmax.f32 %v722, %v735
    %v749 = vmax.f32 %v723, %v736
    %vm750 = vcmask 850944
    %751 = vst.msk [vmem:[#allocation2] sm:$0xff] %vm750, 0.0
    %752 = vst.msk [vmem:[#allocation2 + $0x70] sm:$0xff] %vm750, 0.0
    %753 = vst.msk [vmem:[#allocation2 + $0x8] sm:$0xff] %vm750, %v737
    %754 = vst.msk [vmem:[#allocation2 + $0x10] sm:$0xff] %vm750, %v738
    %755 = vst.msk [vmem:[#allocation2 + $0x18] sm:$0xff] %vm750, %v739
    %756 = vst.msk [vmem:[#allocation2 + $0x20] sm:$0xff] %vm750, %v740
    %757 = vst.msk [vmem:[#allocation2 + $0x28] sm:$0xff] %vm750, %v741
    %758 = vst.msk [vmem:[#allocation2 + $0x30] sm:$0xff] %vm750, %v742
    %759 = vst.msk [vmem:[#allocation2 + $0x38] sm:$0xff] %vm750, %v743
    %760 = vst.msk [vmem:[#allocation2 + $0x40] sm:$0xff] %vm750, %v744
    %761 = vst.msk [vmem:[#allocation2 + $0x48] sm:$0xff] %vm750, %v745
    %762 = vst.msk [vmem:[#allocation2 + $0x50] sm:$0xff] %vm750, %v746
    %763 = vst.msk [vmem:[#allocation2 + $0x58] sm:$0xff] %vm750, %v747
    %764 = vst.msk [vmem:[#allocation2 + $0x60] sm:$0xff] %vm750, %v748
    %765 = vst.msk [vmem:[#allocation2 + $0x68] sm:$0xff] %vm750, %v749
    %v766 = vld [vmem:[#allocation2] sm:$0xff]
    %v767 = vld [vmem:[#allocation2 + $0x8] sm:$0xff]
    %v768 = vld [vmem:[#allocation2 + $0x10] sm:$0xff]
    %v769 = vld [vmem:[#allocation2 + $0x18] sm:$0xff]
    %v770 = vld [vmem:[#allocation2 + $0x20] sm:$0xff]
    %v771 = vld [vmem:[#allocation2 + $0x28] sm:$0xff]
    %v772 = vld [vmem:[#allocation2 + $0x30] sm:$0xff]
    %v773 = vld [vmem:[#allocation2 + $0x38] sm:$0xff]
    %v774 = vld [vmem:[#allocation2 + $0x40] sm:$0xff]
    %v775 = vld [vmem:[#allocation2 + $0x48] sm:$0xff]
    %v776 = vld [vmem:[#allocation2 + $0x50] sm:$0xff]
    %v777 = vld [vmem:[#allocation2 + $0x58] sm:$0xff]
    %v778 = vld [vmem:[#allocation2 + $0x60] sm:$0xff]
    %v779 = vld [vmem:[%s5] sm:$0xff]
    %v780 = vld [vmem:[%s5 + $0x8] sm:$0xff]
    %v781 = vld [vmem:[%s5 + $0x10] sm:$0xff]
    %v782 = vld [vmem:[%s5 + $0x18] sm:$0xff]
    %v783 = vld [vmem:[%s5 + $0x20] sm:$0xff]
    %v784 = vld [vmem:[%s5 + $0x28] sm:$0xff]
    %v785 = vld [vmem:[%s5 + $0x30] sm:$0xff]
    %v786 = vld [vmem:[%s5 + $0x38] sm:$0xff]
    %v787 = vld [vmem:[%s5 + $0x40] sm:$0xff]
    %v788 = vld [vmem:[%s5 + $0x48] sm:$0xff]
    %v789 = vld [vmem:[%s5 + $0x50] sm:$0xff]
    %v790 = vld [vmem:[%s5 + $0x58] sm:$0xff]
    %v791 = vld [vmem:[%s5 + $0x60] sm:$0xff]
    %v792 = vld [vmem:[%s5 + $0x68] sm:$0xff]
    %v793 = vld [vmem:[%s5 + $0x70] sm:$0xff]
    %v794 = vld [vmem:[%s5 + $0x78] sm:$0xff]
    %v795 = vld [vmem:[%s5 + $0x80] sm:$0xff]
    %v796 = vld [vmem:[%s5 + $0x88] sm:$0xff]
    %v797 = vld [vmem:[%s5 + $0x90] sm:$0xff]
    %v798 = vld [vmem:[%s5 + $0x98] sm:$0xff]
    %v799 = vld [vmem:[%s5 + $0xa0] sm:$0xff]
    %v800 = vld [vmem:[%s5 + $0xa8] sm:$0xff]
    %v801 = vld [vmem:[%s5 + $0xb0] sm:$0xff]
    %v802 = vld [vmem:[%s5 + $0xb8] sm:$0xff]
    %v803 = vld [vmem:[%s5 + $0xc0] sm:$0xff]
    %v804 = vld [vmem:[%s5 + $0xc8] sm:$0xff]
    %v805 = vld [vmem:[#allocation2 + $0x68] sm:$0xff]
    %s806 = scalar_lea.vmem %s5, 208
    %v807 = vld [vmem:[%s806] sm:$0xff]
    %v808 = vld [vmem:[%s806 + $0x8] sm:$0xff]
    %v809 = vld [vmem:[%s806 + $0x10] sm:$0xff]
    %v810 = vld [vmem:[%s806 + $0x18] sm:$0xff]
    %v811 = vld [vmem:[%s806 + $0x20] sm:$0xff]
    %v812 = vld [vmem:[%s806 + $0x28] sm:$0xff]
    %v813 = vld [vmem:[%s806 + $0x30] sm:$0xff]
    %v814 = vld [vmem:[%s806 + $0x38] sm:$0xff]
    %v815 = vld [vmem:[%s806 + $0x40] sm:$0xff]
    %v816 = vld [vmem:[%s806 + $0x48] sm:$0xff]
    %v817 = vld [vmem:[%s806 + $0x50] sm:$0xff]
    %v818 = vld [vmem:[%s806 + $0x58] sm:$0xff]
    %v819 = vld [vmem:[%s806 + $0x60] sm:$0xff]
    %v820 = vld [vmem:[%s806 + $0x68] sm:$0xff]
    %v821 = vld [vmem:[%s806 + $0x70] sm:$0xff]
    %v822 = vld [vmem:[%s806 + $0x78] sm:$0xff]
    %v823 = vld [vmem:[%s806 + $0x80] sm:$0xff]
    %v824 = vld [vmem:[%s806 + $0x88] sm:$0xff]
    %v825 = vld [vmem:[%s806 + $0x90] sm:$0xff]
    %v826 = vld [vmem:[%s806 + $0x98] sm:$0xff]
    %v827 = vld [vmem:[%s806 + $0xa0] sm:$0xff]
    %v828 = vld [vmem:[%s806 + $0xa8] sm:$0xff]
    %v829 = vld [vmem:[%s806 + $0xb0] sm:$0xff]
    %v830 = vld [vmem:[%s806 + $0xb8] sm:$0xff]
    %v831 = vld [vmem:[%s806 + $0xc0] sm:$0xff]
    %v832 = vld [vmem:[%s806 + $0xc8] sm:$0xff]
    %v834 = vsel %vm750, %v767, 0
    %v837 = vsel %vm750, %v768, 0
    %v840 = vsel %vm750, %v769, 0
    %v843 = vsel %vm750, %v770, 0
    %v846 = vsel %vm750, %v771, 0
    %v849 = vsel %vm750, %v772, 0
    %v852 = vsel %vm750, %v773, 0
    %v855 = vsel %vm750, %v774, 0
    %v858 = vsel %vm750, %v775, 0
    %v861 = vsel %vm750, %v776, 0
    %v864 = vsel %vm750, %v777, 0
    %v867 = vsel %vm750, %v778, 0
    %v870 = vsel %vm750, %v805, 0
    %872 = vmatprep.subr.mxu0 %v808
    %873 = vmatpush1.msra.mxu0 %v807
    %874 = vmatprep.subr.mxu0 %v810
    %875 = vmatpush1.msra.mxu0 %v809
    %876 = vmatprep.subr.mxu0 %v812
    %877 = vmatpush1.msra.mxu0 %v811
    %878 = vmatprep.subr.mxu0 %v814
    %879 = vmatpush1.msra.mxu0 %v813
    %880 = vmatprep.subr.mxu0 %v816
    %881 = vmatpush1.msra.mxu0 %v815
    %882 = vmatprep.subr.mxu0 %v818
    %883 = vmatpush1.msra.mxu0 %v817
    %884 = vmatprep.subr.mxu0 %v820
    %885 = vmatpush1.msra.mxu0 %v819
    %886 = vmatprep.subr.mxu0 %v822
    %887 = vmatpush1.msra.mxu0 %v821
    %888 = vmatprep.subr.mxu0 %v824
    %889 = vmatpush1.msra.mxu0 %v823
    %890 = vmatprep.subr.mxu0 %v826
    %891 = vmatpush1.msra.mxu0 %v825
    %892 = vmatprep.subr.mxu0 %v828
    %893 = vmatpush1.msra.mxu0 %v827
    %894 = vmatprep.subr.mxu0 %v830
    %895 = vmatpush1.msra.mxu0 %v829
    %896 = vmatprep.subr.mxu0 %v832
    %897 = vmatpush1.msra.mxu0 %v831
    %898 = vmatprep.subr.mxu0 0.0
    %899 = vmatpush1.msra.mxu0 0.0
    %900 = vmatprep.subr.mxu0 0.0
    %901 = vmatpush1.msra.mxu0 0.0
    %902 = vmatprep.subr.mxu0 0.0
    %903 = vmatpush1.msra.mxu0 0.0
    %904 = vmatprep.subr.mxu0 0.0
    %905 = vmatpush1.msra.mxu0 0.0
    %906 = vmatprep.subr.mxu0 0.0
    %907 = vmatpush1.msra.mxu0 0.0
    %908 = vmatprep.subr.mxu0 0.0
    %909 = vmatpush1.msra.mxu0 0.0
    %910 = vmatprep.subr.mxu0 0.0
    %911 = vmatpush1.msra.mxu0 0.0
    %912 = vmatprep.subr.mxu0 0.0
    %913 = vmatpush1.msra.mxu0 0.0
    %914 = vmatprep.subr.mxu0 0.0
    %915 = vmatpush1.msra.mxu0 0.0
    %916 = vmatprep.subr.mxu0 0.0
    %917 = vmatpush1.msra.mxu0 0.0
    %918 = vmatprep.subr.mxu0 0.0
    %919 = vmatpush1.msra.mxu0 0.0
    %920 = vmatprep.subr.mxu0 0.0
    %921 = vmatpush1.msra.mxu0 0.0
    %922 = vmatprep.subr.mxu0 0.0
    %923 = vmatpush1.msra.mxu0 0.0
    %924 = vmatprep.subr.mxu0 0.0
    %925 = vmatpush1.msra.mxu0 0.0
    %926 = vmatprep.subr.mxu0 0.0
    %927 = vmatpush1.msra.mxu0 0.0
    %928 = vmatprep.subr.mxu0 0.0
    %929 = vmatpush1.msra.mxu0 0.0
    %930 = vmatprep.subr.mxu0 0.0
    %931 = vmatpush1.msra.mxu0 0.0
    %932 = vmatprep.subr.mxu0 0.0
    %933 = vmatpush1.msra.mxu0 0.0
    %934 = vmatprep.subr.mxu0 0.0
    %935 = vmatpush1.msra.mxu0 0.0
    %936 = vmatprep.mubr.f32.mxu0 0.0
    %937 = vmatmul.mubr.f32.gmra.mrb[0].mxu0 %v834
    %v938 = vpop.f32.mrb[0].mxu0
    %v939 = vadd.f32 0.0, %v938
    %v940 = vpop.f32.mrb[0].mxu0
    %v941 = vadd.f32 0.0, %v940
    %942 = vmatprep.mubr.f32.mxu0 0.0
    %943 = vmatmul.mubr.f32.gmra.mrb[0].mxu0 %v837
    %v944 = vpop.f32.mrb[0].mxu0
    %v945 = vadd.f32 0.0, %v944
    %v946 = vpop.f32.mrb[0].mxu0
    %v947 = vadd.f32 0.0, %v946
    %948 = vmatprep.mubr.f32.mxu0 0.0
    %949 = vmatmul.mubr.f32.gmra.mrb[0].mxu0 %v840
    %v950 = vpop.f32.mrb[0].mxu0
    %v951 = vadd.f32 0.0, %v950
    %v952 = vpop.f32.mrb[0].mxu0
    %v953 = vadd.f32 0.0, %v952
    %954 = vmatprep.mubr.f32.mxu0 0.0
    %955 = vmatmul.mubr.f32.gmra.mrb[0].mxu0 %v843
    %v956 = vpop.f32.mrb[0].mxu0
    %v957 = vadd.f32 0.0, %v956
    %v958 = vpop.f32.mrb[0].mxu0
    %v959 = vadd.f32 0.0, %v958
    %960 = vmatprep.mubr.f32.mxu0 0.0
    %961 = vmatmul.mubr.f32.gmra.mrb[0].mxu0 %v846
    %v962 = vpop.f32.mrb[0].mxu0
    %v963 = vadd.f32 0.0, %v962
    %v964 = vpop.f32.mrb[0].mxu0
    %v965 = vadd.f32 0.0, %v964
    %966 = vmatprep.mubr.f32.mxu0 0.0
    %967 = vmatmul.mubr.f32.gmra.mrb[0].mxu0 %v849
    %v968 = vpop.f32.mrb[0].mxu0
    %v969 = vadd.f32 0.0, %v968
    %v970 = vpop.f32.mrb[0].mxu0
    %v971 = vadd.f32 0.0, %v970
    %972 = vmatprep.mubr.f32.mxu0 0.0
    %973 = vmatmul.mubr.f32.gmra.mrb[0].mxu0 %v852
    %v974 = vpop.f32.mrb[0].mxu0
    %v975 = vadd.f32 0.0, %v974
    %v976 = vpop.f32.mrb[0].mxu0
    %v977 = vadd.f32 0.0, %v976
    %978 = vmatprep.mubr.f32.mxu0 0.0
    %979 = vmatmul.mubr.f32.gmra.mrb[0].mxu0 %v855
    %v980 = vpop.f32.mrb[0].mxu0
    %v981 = vadd.f32 0.0, %v980
    %v982 = vpop.f32.mrb[0].mxu0
    %v983 = vadd.f32 0.0, %v982
    %984 = vmatprep.mubr.f32.mxu0 0.0
    %985 = vmatmul.mubr.f32.gmra.mrb[0].mxu0 %v858
    %v986 = vpop.f32.mrb[0].mxu0
    %v987 = vadd.f32 0.0, %v986
    %v988 = vpop.f32.mrb[0].mxu0
    %v989 = vadd.f32 0.0, %v988
    %990 = vmatprep.mubr.f32.mxu0 0.0
    %991 = vmatmul.mubr.f32.gmra.mrb[0].mxu0 %v861
    %v992 = vpop.f32.mrb[0].mxu0
    %v993 = vadd.f32 0.0, %v992
    %v994 = vpop.f32.mrb[0].mxu0
    %v995 = vadd.f32 0.0, %v994
    %996 = vmatprep.mubr.f32.mxu0 0.0
    %997 = vmatmul.mubr.f32.gmra.mrb[0].mxu0 %v864
    %v998 = vpop.f32.mrb[0].mxu0
    %v999 = vadd.f32 0.0, %v998
    %v1000 = vpop.f32.mrb[0].mxu0
    %v1001 = vadd.f32 0.0, %v1000
    %1002 = vmatprep.mubr.f32.mxu0 0.0
    %1003 = vmatmul.mubr.f32.gmra.mrb[0].mxu0 %v867
    %v1004 = vpop.f32.mrb[0].mxu0
    %v1005 = vadd.f32 0.0, %v1004
    %v1006 = vpop.f32.mrb[0].mxu0
    %v1007 = vadd.f32 0.0, %v1006
    %1008 = vmatprep.mubr.f32.mxu0 0.0
    %1009 = vmatmul.mubr.f32.gmra.mrb[0].mxu0 %v870
    %v1010 = vpop.f32.mrb[0].mxu0
    %v1011 = vadd.f32 0.0, %v1010
    %v1012 = vpop.f32.mrb[0].mxu0
    %v1013 = vadd.f32 0.0, %v1012
    %1014 = vdwg.mxu0
    %v1016 = vsel %vm750, %v766, 0
    %1018 = vmatprep.subr.mxu0 %v780
    %1019 = vmatpush1.msra.mxu0 %v779
    %1020 = vmatprep.subr.mxu0 %v782
    %1021 = vmatpush1.msra.mxu0 %v781
    %1022 = vmatprep.subr.mxu0 %v784
    %1023 = vmatpush1.msra.mxu0 %v783
    %1024 = vmatprep.subr.mxu0 %v786
    %1025 = vmatpush1.msra.mxu0 %v785
    %1026 = vmatprep.subr.mxu0 %v788
    %1027 = vmatpush1.msra.mxu0 %v787
    %1028 = vmatprep.subr.mxu0 %v790
    %1029 = vmatpush1.msra.mxu0 %v789
    %1030 = vmatprep.subr.mxu0 %v792
    %1031 = vmatpush1.msra.mxu0 %v791
    %1032 = vmatprep.subr.mxu0 %v794
    %1033 = vmatpush1.msra.mxu0 %v793
    %1034 = vmatprep.subr.mxu0 %v796
    %1035 = vmatpush1.msra.mxu0 %v795
    %1036 = vmatprep.subr.mxu0 %v798
    %1037 = vmatpush1.msra.mxu0 %v797
    %1038 = vmatprep.subr.mxu0 %v800
    %1039 = vmatpush1.msra.mxu0 %v799
    %1040 = vmatprep.subr.mxu0 %v802
    %1041 = vmatpush1.msra.mxu0 %v801
    %1042 = vmatprep.subr.mxu0 %v804
    %1043 = vmatpush1.msra.mxu0 %v803
    %1044 = vmatprep.subr.mxu0 0.0
    %1045 = vmatpush1.msra.mxu0 0.0
    %1046 = vmatprep.subr.mxu0 0.0
    %1047 = vmatpush1.msra.mxu0 0.0
    %1048 = vmatprep.subr.mxu0 0.0
    %1049 = vmatpush1.msra.mxu0 0.0
    %1050 = vmatprep.subr.mxu0 0.0
    %1051 = vmatpush1.msra.mxu0 0.0
    %1052 = vmatprep.subr.mxu0 0.0
    %1053 = vmatpush1.msra.mxu0 0.0
    %1054 = vmatprep.subr.mxu0 0.0
    %1055 = vmatpush1.msra.mxu0 0.0
    %1056 = vmatprep.subr.mxu0 0.0
    %1057 = vmatpush1.msra.mxu0 0.0
    %1058 = vmatprep.subr.mxu0 0.0
    %1059 = vmatpush1.msra.mxu0 0.0
    %1060 = vmatprep.subr.mxu0 0.0
    %1061 = vmatpush1.msra.mxu0 0.0
    %1062 = vmatprep.subr.mxu0 0.0
    %1063 = vmatpush1.msra.mxu0 0.0
    %1064 = vmatprep.subr.mxu0 0.0
    %1065 = vmatpush1.msra.mxu0 0.0
    %1066 = vmatprep.subr.mxu0 0.0
    %1067 = vmatpush1.msra.mxu0 0.0
    %1068 = vmatprep.subr.mxu0 0.0
    %1069 = vmatpush1.msra.mxu0 0.0
    %1070 = vmatprep.subr.mxu0 0.0
    %1071 = vmatpush1.msra.mxu0 0.0
    %1072 = vmatprep.subr.mxu0 0.0
    %1073 = vmatpush1.msra.mxu0 0.0
    %1074 = vmatprep.subr.mxu0 0.0
    %1075 = vmatpush1.msra.mxu0 0.0
    %1076 = vmatprep.subr.mxu0 0.0
    %1077 = vmatpush1.msra.mxu0 0.0
    %1078 = vmatprep.subr.mxu0 0.0
    %1079 = vmatpush1.msra.mxu0 0.0
    %1080 = vmatprep.subr.mxu0 0.0
    %1081 = vmatpush1.msra.mxu0 0.0
    %1082 = vmatprep.mubr.f32.mxu0 0.0
    %1083 = vmatmul.mubr.f32.gmra.mrb[0].mxu0 %v1016
    %v1084 = vpop.f32.mrb[0].mxu0
    %v1085 = vadd.f32 %v939, %v1084
    %v1086 = vpop.f32.mrb[0].mxu0
    %v1087 = vadd.f32 %v941, %v1086
    %1088 = vmatprep.mubr.f32.mxu0 0.0
    %1089 = vmatmul.mubr.f32.gmra.mrb[0].mxu0 %v834
    %v1090 = vpop.f32.mrb[0].mxu0
    %v1091 = vadd.f32 %v945, %v1090
    %v1092 = vpop.f32.mrb[0].mxu0
    %v1093 = vadd.f32 %v947, %v1092
    %1094 = vmatprep.mubr.f32.mxu0 0.0
    %1095 = vmatmul.mubr.f32.gmra.mrb[0].mxu0 %v837
    %v1096 = vpop.f32.mrb[0].mxu0
    %v1097 = vadd.f32 %v951, %v1096
    %v1098 = vpop.f32.mrb[0].mxu0
    %v1099 = vadd.f32 %v953, %v1098
    %1100 = vmatprep.mubr.f32.mxu0 0.0
    %1101 = vmatmul.mubr.f32.gmra.mrb[0].mxu0 %v840
    %v1102 = vpop.f32.mrb[0].mxu0
    %v1103 = vadd.f32 %v957, %v1102
    %v1104 = vpop.f32.mrb[0].mxu0
    %v1105 = vadd.f32 %v959, %v1104
    %1106 = vmatprep.mubr.f32.mxu0 0.0
    %1107 = vmatmul.mubr.f32.gmra.mrb[0].mxu0 %v843
    %v1108 = vpop.f32.mrb[0].mxu0
    %v1109 = vadd.f32 %v963, %v1108
    %v1110 = vpop.f32.mrb[0].mxu0
    %v1111 = vadd.f32 %v965, %v1110
    %1112 = vmatprep.mubr.f32.mxu0 0.0
    %1113 = vmatmul.mubr.f32.gmra.mrb[0].mxu0 %v846
    %v1114 = vpop.f32.mrb[0].mxu0
    %v1115 = vadd.f32 %v969, %v1114
    %v1116 = vpop.f32.mrb[0].mxu0
    %v1117 = vadd.f32 %v971, %v1116
    %1118 = vmatprep.mubr.f32.mxu0 0.0
    %1119 = vmatmul.mubr.f32.gmra.mrb[0].mxu0 %v849
    %v1120 = vpop.f32.mrb[0].mxu0
    %v1121 = vadd.f32 %v975, %v1120
    %v1122 = vpop.f32.mrb[0].mxu0
    %v1123 = vadd.f32 %v977, %v1122
    %1124 = vmatprep.mubr.f32.mxu0 0.0
    %1125 = vmatmul.mubr.f32.gmra.mrb[0].mxu0 %v852
    %v1126 = vpop.f32.mrb[0].mxu0
    %v1127 = vadd.f32 %v981, %v1126
    %v1128 = vpop.f32.mrb[0].mxu0
    %v1129 = vadd.f32 %v983, %v1128
    %1130 = vmatprep.mubr.f32.mxu0 0.0
    %1131 = vmatmul.mubr.f32.gmra.mrb[0].mxu0 %v855
    %v1132 = vpop.f32.mrb[0].mxu0
    %v1133 = vadd.f32 %v987, %v1132
    %v1134 = vpop.f32.mrb[0].mxu0
    %v1135 = vadd.f32 %v989, %v1134
    %1136 = vmatprep.mubr.f32.mxu0 0.0
    %1137 = vmatmul.mubr.f32.gmra.mrb[0].mxu0 %v858
    %v1138 = vpop.f32.mrb[0].mxu0
    %v1139 = vadd.f32 %v993, %v1138
    %v1140 = vpop.f32.mrb[0].mxu0
    %v1141 = vadd.f32 %v995, %v1140
    %1142 = vmatprep.mubr.f32.mxu0 0.0
    %1143 = vmatmul.mubr.f32.gmra.mrb[0].mxu0 %v861
    %v1144 = vpop.f32.mrb[0].mxu0
    %v1145 = vadd.f32 %v999, %v1144
    %v1146 = vpop.f32.mrb[0].mxu0
    %v1147 = vadd.f32 %v1001, %v1146
    %1148 = vmatprep.mubr.f32.mxu0 0.0
    %1149 = vmatmul.mubr.f32.gmra.mrb[0].mxu0 %v864
    %v1150 = vpop.f32.mrb[0].mxu0
    %v1151 = vadd.f32 %v1005, %v1150
    %v1152 = vpop.f32.mrb[0].mxu0
    %v1153 = vadd.f32 %v1007, %v1152
    %1154 = vmatprep.mubr.f32.mxu0 0.0
    %1155 = vmatmul.mubr.f32.gmra.mrb[0].mxu0 %v867
    %v1156 = vpop.f32.mrb[0].mxu0
    %v1157 = vadd.f32 %v1011, %v1156
    %v1158 = vpop.f32.mrb[0].mxu0
    %v1159 = vadd.f32 %v1013, %v1158
    %1160 = vdwg.mxu0
    %v1161 = vld [vmem:[#allocation2 + $0x10] sm:$0xff]
    %v1162 = vld [vmem:[#allocation2 + $0x18] sm:$0xff]
    %v1163 = vld [vmem:[#allocation2 + $0x20] sm:$0xff]
    %v1164 = vld [vmem:[#allocation2 + $0x28] sm:$0xff]
    %v1165 = vld [vmem:[#allocation2 + $0x30] sm:$0xff]
    %v1166 = vld [vmem:[#allocation2 + $0x38] sm:$0xff]
    %v1167 = vld [vmem:[#allocation2 + $0x40] sm:$0xff]
    %v1168 = vld [vmem:[#allocation2 + $0x48] sm:$0xff]
    %v1169 = vld [vmem:[#allocation2 + $0x50] sm:$0xff]
    %v1170 = vld [vmem:[#allocation2 + $0x58] sm:$0xff]
    %v1171 = vld [vmem:[#allocation2 + $0x60] sm:$0xff]
    %v1172 = vld [vmem:[#allocation2 + $0x68] sm:$0xff]
    %v1173 = vld [vmem:[#allocation2 + $0x70] sm:$0xff]
    %s1174 = scalar_lea.vmem %s5, 416
    %v1175 = vld [vmem:[%s1174] sm:$0xff]
    %v1176 = vld [vmem:[%s1174 + $0x8] sm:$0xff]
    %v1177 = vld [vmem:[%s1174 + $0x10] sm:$0xff]
    %v1178 = vld [vmem:[%s1174 + $0x18] sm:$0xff]
    %v1179 = vld [vmem:[%s1174 + $0x20] sm:$0xff]
    %v1180 = vld [vmem:[%s1174 + $0x28] sm:$0xff]
    %v1181 = vld [vmem:[%s1174 + $0x30] sm:$0xff]
    %v1182 = vld [vmem:[%s1174 + $0x38] sm:$0xff]
    %v1183 = vld [vmem:[%s1174 + $0x40] sm:$0xff]
    %v1184 = vld [vmem:[%s1174 + $0x48] sm:$0xff]
    %v1185 = vld [vmem:[%s1174 + $0x50] sm:$0xff]
    %v1186 = vld [vmem:[%s1174 + $0x58] sm:$0xff]
    %v1187 = vld [vmem:[%s1174 + $0x60] sm:$0xff]
    %v1188 = vld [vmem:[%s1174 + $0x68] sm:$0xff]
    %v1189 = vld [vmem:[%s1174 + $0x70] sm:$0xff]
    %v1190 = vld [vmem:[%s1174 + $0x78] sm:$0xff]
    %v1191 = vld [vmem:[%s1174 + $0x80] sm:$0xff]
    %v1192 = vld [vmem:[%s1174 + $0x88] sm:$0xff]
    %v1193 = vld [vmem:[%s1174 + $0x90] sm:$0xff]
    %v1194 = vld [vmem:[%s1174 + $0x98] sm:$0xff]
    %v1195 = vld [vmem:[%s1174 + $0xa0] sm:$0xff]
    %v1196 = vld [vmem:[%s1174 + $0xa8] sm:$0xff]
    %v1197 = vld [vmem:[%s1174 + $0xb0] sm:$0xff]
    %v1198 = vld [vmem:[%s1174 + $0xb8] sm:$0xff]
    %v1199 = vld [vmem:[%s1174 + $0xc0] sm:$0xff]
    %v1200 = vld [vmem:[%s1174 + $0xc8] sm:$0xff]
    %v1202 = vsel %vm750, %v1161, 0
    %v1205 = vsel %vm750, %v1162, 0
    %v1208 = vsel %vm750, %v1163, 0
    %v1211 = vsel %vm750, %v1164, 0
    %v1214 = vsel %vm750, %v1165, 0
    %v1217 = vsel %vm750, %v1166, 0
    %v1220 = vsel %vm750, %v1167, 0
    %v1223 = vsel %vm750, %v1168, 0
    %v1226 = vsel %vm750, %v1169, 0
    %v1229 = vsel %vm750, %v1170, 0
    %v1232 = vsel %vm750, %v1171, 0
    %v1235 = vsel %vm750, %v1172, 0
    %v1238 = vsel %vm750, %v1173, 0
    %1240 = vmatprep.subr.mxu0 %v1176
    %1241 = vmatpush1.msra.mxu0 %v1175
    %1242 = vmatprep.subr.mxu0 %v1178
    %1243 = vmatpush1.msra.mxu0 %v1177
    %1244 = vmatprep.subr.mxu0 %v1180
    %1245 = vmatpush1.msra.mxu0 %v1179
    %1246 = vmatprep.subr.mxu0 %v1182
    %1247 = vmatpush1.msra.mxu0 %v1181
    %1248 = vmatprep.subr.mxu0 %v1184
    %1249 = vmatpush1.msra.mxu0 %v1183
    %1250 = vmatprep.subr.mxu0 %v1186
    %1251 = vmatpush1.msra.mxu0 %v1185
    %1252 = vmatprep.subr.mxu0 %v1188
    %1253 = vmatpush1.msra.mxu0 %v1187
    %1254 = vmatprep.subr.mxu0 %v1190
    %1255 = vmatpush1.msra.mxu0 %v1189
    %1256 = vmatprep.subr.mxu0 %v1192
    %1257 = vmatpush1.msra.mxu0 %v1191
    %1258 = vmatprep.subr.mxu0 %v1194
    %1259 = vmatpush1.msra.mxu0 %v1193
    %1260 = vmatprep.subr.mxu0 %v1196
    %1261 = vmatpush1.msra.mxu0 %v1195
    %1262 = vmatprep.subr.mxu0 %v1198
    %1263 = vmatpush1.msra.mxu0 %v1197
    %1264 = vmatprep.subr.mxu0 %v1200
    %1265 = vmatpush1.msra.mxu0 %v1199
    %1266 = vmatprep.subr.mxu0 0.0
    %1267 = vmatpush1.msra.mxu0 0.0
    %1268 = vmatprep.subr.mxu0 0.0
    %1269 = vmatpush1.msra.mxu0 0.0
    %1270 = vmatprep.subr.mxu0 0.0
    %1271 = vmatpush1.msra.mxu0 0.0
    %1272 = vmatprep.subr.mxu0 0.0
    %1273 = vmatpush1.msra.mxu0 0.0
    %1274 = vmatprep.subr.mxu0 0.0
    %1275 = vmatpush1.msra.mxu0 0.0
    %1276 = vmatprep.subr.mxu0 0.0
    %1277 = vmatpush1.msra.mxu0 0.0
    %1278 = vmatprep.subr.mxu0 0.0
    %1279 = vmatpush1.msra.mxu0 0.0
    %1280 = vmatprep.subr.mxu0 0.0
    %1281 = vmatpush1.msra.mxu0 0.0
    %1282 = vmatprep.subr.mxu0 0.0
    %1283 = vmatpush1.msra.mxu0 0.0
    %1284 = vmatprep.subr.mxu0 0.0
    %1285 = vmatpush1.msra.mxu0 0.0
    %1286 = vmatprep.subr.mxu0 0.0
    %1287 = vmatpush1.msra.mxu0 0.0
    %1288 = vmatprep.subr.mxu0 0.0
    %1289 = vmatpush1.msra.mxu0 0.0
    %1290 = vmatprep.subr.mxu0 0.0
    %1291 = vmatpush1.msra.mxu0 0.0
    %1292 = vmatprep.subr.mxu0 0.0
    %1293 = vmatpush1.msra.mxu0 0.0
    %1294 = vmatprep.subr.mxu0 0.0
    %1295 = vmatpush1.msra.mxu0 0.0
    %1296 = vmatprep.subr.mxu0 0.0
    %1297 = vmatpush1.msra.mxu0 0.0
    %1298 = vmatprep.subr.mxu0 0.0
    %1299 = vmatpush1.msra.mxu0 0.0
    %1300 = vmatprep.subr.mxu0 0.0
    %1301 = vmatpush1.msra.mxu0 0.0
    %1302 = vmatprep.subr.mxu0 0.0
    %1303 = vmatpush1.msra.mxu0 0.0
    %1304 = vmatprep.mubr.f32.mxu0 0.0
    %1305 = vmatmul.mubr.f32.gmra.mrb[0].mxu0 %v1202
    %v1306 = vpop.f32.mrb[0].mxu0
    %v1307 = vadd.f32 0.0, %v1306
    %v1308 = vpop.f32.mrb[0].mxu0
    %v1309 = vadd.f32 0.0, %v1308
    %1310 = vmatprep.mubr.f32.mxu0 0.0
    %1311 = vmatmul.mubr.f32.gmra.mrb[0].mxu0 %v1205
    %v1312 = vpop.f32.mrb[0].mxu0
    %v1313 = vadd.f32 0.0, %v1312
    %v1314 = vpop.f32.mrb[0].mxu0
    %v1315 = vadd.f32 0.0, %v1314
    %1316 = vmatprep.mubr.f32.mxu0 0.0
    %1317 = vmatmul.mubr.f32.gmra.mrb[0].mxu0 %v1208
    %v1318 = vpop.f32.mrb[0].mxu0
    %v1319 = vadd.f32 0.0, %v1318
    %v1320 = vpop.f32.mrb[0].mxu0
    %v1321 = vadd.f32 0.0, %v1320
    %1322 = vmatprep.mubr.f32.mxu0 0.0
    %1323 = vmatmul.mubr.f32.gmra.mrb[0].mxu0 %v1211
    %v1324 = vpop.f32.mrb[0].mxu0
    %v1325 = vadd.f32 0.0, %v1324
    %v1326 = vpop.f32.mrb[0].mxu0
    %v1327 = vadd.f32 0.0, %v1326
    %1328 = vmatprep.mubr.f32.mxu0 0.0
    %1329 = vmatmul.mubr.f32.gmra.mrb[0].mxu0 %v1214
    %v1330 = vpop.f32.mrb[0].mxu0
    %v1331 = vadd.f32 0.0, %v1330
    %v1332 = vpop.f32.mrb[0].mxu0
    %v1333 = vadd.f32 0.0, %v1332
    %1334 = vmatprep.mubr.f32.mxu0 0.0
    %1335 = vmatmul.mubr.f32.gmra.mrb[0].mxu0 %v1217
    %v1336 = vpop.f32.mrb[0].mxu0
    %v1337 = vadd.f32 0.0, %v1336
    %v1338 = vpop.f32.mrb[0].mxu0
    %v1339 = vadd.f32 0.0, %v1338
    %1340 = vmatprep.mubr.f32.mxu0 0.0
    %1341 = vmatmul.mubr.f32.gmra.mrb[0].mxu0 %v1220
    %v1342 = vpop.f32.mrb[0].mxu0
    %v1343 = vadd.f32 0.0, %v1342
    %v1344 = vpop.f32.mrb[0].mxu0
    %v1345 = vadd.f32 0.0, %v1344
    %1346 = vmatprep.mubr.f32.mxu0 0.0
    %1347 = vmatmul.mubr.f32.gmra.mrb[0].mxu0 %v1223
    %v1348 = vpop.f32.mrb[0].mxu0
    %v1349 = vadd.f32 0.0, %v1348
    %v1350 = vpop.f32.mrb[0].mxu0
    %v1351 = vadd.f32 0.0, %v1350
    %1352 = vmatprep.mubr.f32.mxu0 0.0
    %1353 = vmatmul.mubr.f32.gmra.mrb[0].mxu0 %v1226
    %v1354 = vpop.f32.mrb[0].mxu0
    %v1355 = vadd.f32 0.0, %v1354
    %v1356 = vpop.f32.mrb[0].mxu0
    %v1357 = vadd.f32 0.0, %v1356
    %1358 = vmatprep.mubr.f32.mxu0 0.0
    %1359 = vmatmul.mubr.f32.gmra.mrb[0].mxu0 %v1229
    %v1360 = vpop.f32.mrb[0].mxu0
    %v1361 = vadd.f32 0.0, %v1360
    %v1362 = vpop.f32.mrb[0].mxu0
    %v1363 = vadd.f32 0.0, %v1362
    %1364 = vmatprep.mubr.f32.mxu0 0.0
    %1365 = vmatmul.mubr.f32.gmra.mrb[0].mxu0 %v1232
    %v1366 = vpop.f32.mrb[0].mxu0
    %v1367 = vadd.f32 0.0, %v1366
    %v1368 = vpop.f32.mrb[0].mxu0
    %v1369 = vadd.f32 0.0, %v1368
    %1370 = vmatprep.mubr.f32.mxu0 0.0
    %1371 = vmatmul.mubr.f32.gmra.mrb[0].mxu0 %v1235
    %v1372 = vpop.f32.mrb[0].mxu0
    %v1373 = vadd.f32 0.0, %v1372
    %v1374 = vpop.f32.mrb[0].mxu0
    %v1375 = vadd.f32 0.0, %v1374
    %1376 = vmatprep.mubr.f32.mxu0 0.0
    %1377 = vmatmul.mubr.f32.gmra.mrb[0].mxu0 %v1238
    %v1378 = vpop.f32.mrb[0].mxu0
    %v1379 = vadd.f32 0.0, %v1378
    %v1380 = vpop.f32.mrb[0].mxu0
    %v1381 = vadd.f32 0.0, %v1380
    %1382 = vdwg.mxu0
    %v1383 = vadd.f32 %v1085, %v1307
    %v1384 = vadd.f32 %v1087, %v1309
    %v1385 = vadd.f32 %v1091, %v1313
    %v1386 = vadd.f32 %v1093, %v1315
    %v1387 = vadd.f32 %v1097, %v1319
    %v1388 = vadd.f32 %v1099, %v1321
    %v1389 = vadd.f32 %v1103, %v1325
    %v1390 = vadd.f32 %v1105, %v1327
    %v1391 = vadd.f32 %v1109, %v1331
    %v1392 = vadd.f32 %v1111, %v1333
    %v1393 = vadd.f32 %v1115, %v1337
    %v1394 = vadd.f32 %v1117, %v1339
    %v1395 = vadd.f32 %v1121, %v1343
    %v1396 = vadd.f32 %v1123, %v1345
    %v1397 = vadd.f32 %v1127, %v1349
    %v1398 = vadd.f32 %v1129, %v1351
    %v1399 = vadd.f32 %v1133, %v1355
    %v1400 = vadd.f32 %v1135, %v1357
    %v1401 = vadd.f32 %v1139, %v1361
    %v1402 = vadd.f32 %v1141, %v1363
    %v1403 = vadd.f32 %v1145, %v1367
    %v1404 = vadd.f32 %v1147, %v1369
    %v1405 = vadd.f32 %v1151, %v1373
    %v1406 = vadd.f32 %v1153, %v1375
    %v1407 = vadd.f32 %v1157, %v1379
    %v1408 = vadd.f32 %v1159, %v1381
    %v1409 = vld [vmem:[#allocation10] sm:$0x3]
    %v1411 = vlaneseq
    %v1412 = vshrl.u32 %v1411, 7
    %v1413 = vsub.s32 0, %v1412
    %v1414 = vrot.slane %v1409, %v1413
    %v1415 = vlaneseq
    %v1416 = vshrl.u32 %v1415, 7
    %v1417 = vsub.s32 1, %v1416
    %v1418 = vrot.slane %v1409, %v1417
    %v1421 = vadd.f32 %v1383, %v1414
    %v1422 = vadd.f32 %v1384, %v1418
    %v1423 = vadd.f32 %v1385, %v1414
    %v1424 = vadd.f32 %v1386, %v1418
    %v1425 = vadd.f32 %v1387, %v1414
    %v1426 = vadd.f32 %v1388, %v1418
    %v1427 = vadd.f32 %v1389, %v1414
    %v1428 = vadd.f32 %v1390, %v1418
    %v1429 = vadd.f32 %v1391, %v1414
    %v1430 = vadd.f32 %v1392, %v1418
    %v1431 = vadd.f32 %v1393, %v1414
    %v1432 = vadd.f32 %v1394, %v1418
    %v1433 = vadd.f32 %v1395, %v1414
    %v1434 = vadd.f32 %v1396, %v1418
    %v1435 = vadd.f32 %v1397, %v1414
    %v1436 = vadd.f32 %v1398, %v1418
    %v1437 = vadd.f32 %v1399, %v1414
    %v1438 = vadd.f32 %v1400, %v1418
    %v1439 = vadd.f32 %v1401, %v1414
    %v1440 = vadd.f32 %v1402, %v1418
    %v1441 = vadd.f32 %v1403, %v1414
    %v1442 = vadd.f32 %v1404, %v1418
    %v1443 = vadd.f32 %v1405, %v1414
    %v1444 = vadd.f32 %v1406, %v1418
    %v1445 = vadd.f32 %v1407, %v1414
    %v1446 = vadd.f32 %v1408, %v1418
    %v1447 = vmax.f32 %v1421, 0.0
    %v1448 = vmax.f32 %v1422, 0.0
    %v1449 = vmax.f32 %v1423, 0.0
    %v1450 = vmax.f32 %v1424, 0.0
    %v1451 = vmax.f32 %v1425, 0.0
    %v1452 = vmax.f32 %v1426, 0.0
    %v1453 = vmax.f32 %v1427, 0.0
    %v1454 = vmax.f32 %v1428, 0.0
    %v1455 = vmax.f32 %v1429, 0.0
    %v1456 = vmax.f32 %v1430, 0.0
    %v1457 = vmax.f32 %v1431, 0.0
    %v1458 = vmax.f32 %v1432, 0.0
    %v1459 = vmax.f32 %v1433, 0.0
    %v1460 = vmax.f32 %v1434, 0.0
    %v1461 = vmax.f32 %v1435, 0.0
    %v1462 = vmax.f32 %v1436, 0.0
    %v1463 = vmax.f32 %v1437, 0.0
    %v1464 = vmax.f32 %v1438, 0.0
    %v1465 = vmax.f32 %v1439, 0.0
    %v1466 = vmax.f32 %v1440, 0.0
    %v1467 = vmax.f32 %v1441, 0.0
    %v1468 = vmax.f32 %v1442, 0.0
    %v1469 = vmax.f32 %v1443, 0.0
    %v1470 = vmax.f32 %v1444, 0.0
    %v1471 = vmax.f32 %v1445, 0.0
    %v1472 = vmax.f32 %v1446, 0.0
    %v1473 = vld [vmem:[#allocation11] sm:$0x3]
    %v1475 = vlaneseq
    %v1476 = vshrl.u32 %v1475, 7
    %v1477 = vsub.s32 0, %v1476
    %v1478 = vrot.slane %v1473, %v1477
    %v1479 = vlaneseq
    %v1480 = vshrl.u32 %v1479, 7
    %v1481 = vsub.s32 1, %v1480
    %v1482 = vrot.slane %v1473, %v1481
    %v1485 = vmul.f32 %v1447, %v1478
    %v1486 = vmul.f32 %v1448, %v1482
    %v1487 = vmul.f32 %v1449, %v1478
    %v1488 = vmul.f32 %v1450, %v1482
    %v1489 = vmul.f32 %v1451, %v1478
    %v1490 = vmul.f32 %v1452, %v1482
    %v1491 = vmul.f32 %v1453, %v1478
    %v1492 = vmul.f32 %v1454, %v1482
    %v1493 = vmul.f32 %v1455, %v1478
    %v1494 = vmul.f32 %v1456, %v1482
    %v1495 = vmul.f32 %v1457, %v1478
    %v1496 = vmul.f32 %v1458, %v1482
    %v1497 = vmul.f32 %v1459, %v1478
    %v1498 = vmul.f32 %v1460, %v1482
    %v1499 = vmul.f32 %v1461, %v1478
    %v1500 = vmul.f32 %v1462, %v1482
    %v1501 = vmul.f32 %v1463, %v1478
    %v1502 = vmul.f32 %v1464, %v1482
    %v1503 = vmul.f32 %v1465, %v1478
    %v1504 = vmul.f32 %v1466, %v1482
    %v1505 = vmul.f32 %v1467, %v1478
    %v1506 = vmul.f32 %v1468, %v1482
    %v1507 = vmul.f32 %v1469, %v1478
    %v1508 = vmul.f32 %v1470, %v1482
    %v1509 = vmul.f32 %v1471, %v1478
    %v1510 = vmul.f32 %v1472, %v1482
    %v1511 = vld [vmem:[#allocation13] sm:$0x3]
    %v1513 = vlaneseq
    %v1514 = vshrl.u32 %v1513, 7
    %v1515 = vsub.s32 0, %v1514
    %v1516 = vrot.slane %v1511, %v1515
    %v1517 = vlaneseq
    %v1518 = vshrl.u32 %v1517, 7
    %v1519 = vsub.s32 1, %v1518
    %v1520 = vrot.slane %v1511, %v1519
    %v1523 = vadd.f32 %v1485, %v1516
    %v1524 = vadd.f32 %v1486, %v1520
    %v1525 = vadd.f32 %v1487, %v1516
    %v1526 = vadd.f32 %v1488, %v1520
    %v1527 = vadd.f32 %v1489, %v1516
    %v1528 = vadd.f32 %v1490, %v1520
    %v1529 = vadd.f32 %v1491, %v1516
    %v1530 = vadd.f32 %v1492, %v1520
    %v1531 = vadd.f32 %v1493, %v1516
    %v1532 = vadd.f32 %v1494, %v1520
    %v1533 = vadd.f32 %v1495, %v1516
    %v1534 = vadd.f32 %v1496, %v1520
    %v1535 = vadd.f32 %v1497, %v1516
    %v1536 = vadd.f32 %v1498, %v1520
    %v1537 = vadd.f32 %v1499, %v1516
    %v1538 = vadd.f32 %v1500, %v1520
    %v1539 = vadd.f32 %v1501, %v1516
    %v1540 = vadd.f32 %v1502, %v1520
    %v1541 = vadd.f32 %v1503, %v1516
    %v1542 = vadd.f32 %v1504, %v1520
    %v1543 = vadd.f32 %v1505, %v1516
    %v1544 = vadd.f32 %v1506, %v1520
    %v1545 = vadd.f32 %v1507, %v1516
    %v1546 = vadd.f32 %v1508, %v1520
    %v1547 = vadd.f32 %v1509, %v1516
    %v1548 = vadd.f32 %v1510, %v1520
    %v1549 = vld [vmem:[#allocation16] sm:$0x1]
    %v1551 = vlaneseq
    %v1552 = vshrl.u32 %v1551, 7
    %v1553 = vsub.s32 0, %v1552
    %v1554 = vrot.slane %v1549, %v1553
    %v1556 = vadd.f32 %v1554, 0.0
    %v1557 = vld [vmem:[#allocation14] sm:$0xff]
    %v1558 = vld [vmem:[#allocation14 + $0x8] sm:$0xff]
    %v1559 = vld [vmem:[#allocation14 + $0x10] sm:$0xff]
    %v1560 = vld [vmem:[#allocation14 + $0x18] sm:$0xff]
    %v1561 = vld [vmem:[#allocation14 + $0x20] sm:$0xff]
    %v1562 = vld [vmem:[#allocation14 + $0x28] sm:$0xff]
    %v1563 = vld [vmem:[#allocation14 + $0x30] sm:$0xff]
    %v1564 = vld [vmem:[#allocation14 + $0x38] sm:$0xff]
    %v1565 = vld [vmem:[#allocation14 + $0x40] sm:$0xff]
    %v1566 = vld [vmem:[#allocation14 + $0x48] sm:$0xff]
    %v1567 = vld [vmem:[#allocation14 + $0x50] sm:$0xff]
    %v1568 = vld [vmem:[#allocation14 + $0x58] sm:$0xff]
    %v1569 = vld [vmem:[#allocation14 + $0x60] sm:$0xff]
    %v1570 = vld [vmem:[#allocation14 + $0x68] sm:$0xff]
    %v1571 = vld [vmem:[#allocation14 + $0x70] sm:$0xff]
    %v1572 = vld [vmem:[#allocation14 + $0x78] sm:$0xff]
    %v1573 = vld [vmem:[#allocation14 + $0x80] sm:$0xff]
    %v1574 = vld [vmem:[#allocation14 + $0x88] sm:$0xff]
    %v1575 = vld [vmem:[#allocation14 + $0x90] sm:$0xff]
    %v1576 = vld [vmem:[#allocation14 + $0x98] sm:$0xff]
    %v1577 = vld [vmem:[#allocation14 + $0xa0] sm:$0xff]
    %v1578 = vld [vmem:[#allocation14 + $0xa8] sm:$0xff]
    %v1579 = vld [vmem:[#allocation14 + $0xb0] sm:$0xff]
    %v1580 = vld [vmem:[#allocation14 + $0xb8] sm:$0xff]
    %v1581 = vld [vmem:[#allocation14 + $0xc0] sm:$0xff]
    %v1582 = vld [vmem:[#allocation14 + $0xc8] sm:$0xff]
    %vm1583 = vcmask 654336
    %v1585 = vsel %vm1583, %v1524, 0
    %1587 = vmatprep.subr.mxu0 0.0
    %1588 = vmatpush1.msra.mxu0 %v1557
    %1589 = vmatprep.subr.mxu0 0.0
    %1590 = vmatpush1.msra.mxu0 %v1558
    %1591 = vmatprep.subr.mxu0 0.0
    %1592 = vmatpush1.msra.mxu0 %v1559
    %1593 = vmatprep.subr.mxu0 0.0
    %1594 = vmatpush1.msra.mxu0 %v1560
    %1595 = vmatprep.subr.mxu0 0.0
    %1596 = vmatpush1.msra.mxu0 %v1561
    %1597 = vmatprep.subr.mxu0 0.0
    %1598 = vmatpush1.msra.mxu0 %v1562
    %1599 = vmatprep.subr.mxu0 0.0
    %1600 = vmatpush1.msra.mxu0 %v1563
    %1601 = vmatprep.subr.mxu0 0.0
    %1602 = vmatpush1.msra.mxu0 %v1564
    %1603 = vmatprep.subr.mxu0 0.0
    %1604 = vmatpush1.msra.mxu0 %v1565
    %1605 = vmatprep.subr.mxu0 0.0
    %1606 = vmatpush1.msra.mxu0 %v1566
    %1607 = vmatprep.subr.mxu0 0.0
    %1608 = vmatpush1.msra.mxu0 %v1567
    %1609 = vmatprep.subr.mxu0 0.0
    %1610 = vmatpush1.msra.mxu0 %v1568
    %1611 = vmatprep.subr.mxu0 0.0
    %1612 = vmatpush1.msra.mxu0 %v1569
    %1613 = vmatprep.subr.mxu0 0.0
    %1614 = vmatpush1.msra.mxu0 %v1570
    %1615 = vmatprep.subr.mxu0 0.0
    %1616 = vmatpush1.msra.mxu0 %v1571
    %1617 = vmatprep.subr.mxu0 0.0
    %1618 = vmatpush1.msra.mxu0 %v1572
    %1619 = vmatprep.subr.mxu0 0.0
    %1620 = vmatpush1.msra.mxu0 %v1573
    %1621 = vmatprep.subr.mxu0 0.0
    %1622 = vmatpush1.msra.mxu0 %v1574
    %1623 = vmatprep.subr.mxu0 0.0
    %1624 = vmatpush1.msra.mxu0 %v1575
    %1625 = vmatprep.subr.mxu0 0.0
    %1626 = vmatpush1.msra.mxu0 %v1576
    %1627 = vmatprep.subr.mxu0 0.0
    %1628 = vmatpush1.msra.mxu0 %v1577
    %1629 = vmatprep.subr.mxu0 0.0
    %1630 = vmatpush1.msra.mxu0 %v1578
    %1631 = vmatprep.subr.mxu0 0.0
    %1632 = vmatpush1.msra.mxu0 %v1579
    %1633 = vmatprep.subr.mxu0 0.0
    %1634 = vmatpush1.msra.mxu0 %v1580
    %1635 = vmatprep.subr.mxu0 0.0
    %1636 = vmatpush1.msra.mxu0 %v1581
    %1637 = vmatprep.subr.mxu0 0.0
    %1638 = vmatpush1.msra.mxu0 %v1582
    %1639 = vmatprep.subr.mxu0 0.0
    %1640 = vmatpush1.msra.mxu0 0.0
    %1641 = vmatprep.subr.mxu0 0.0
    %1642 = vmatpush1.msra.mxu0 0.0
    %1643 = vmatprep.subr.mxu0 0.0
    %1644 = vmatpush1.msra.mxu0 0.0
    %1645 = vmatprep.subr.mxu0 0.0
    %1646 = vmatpush1.msra.mxu0 0.0
    %1647 = vmatprep.subr.mxu0 0.0
    %1648 = vmatpush1.msra.mxu0 0.0
    %1649 = vmatprep.subr.mxu0 0.0
    %1650 = vmatpush1.msra.mxu0 0.0
    %1651 = vmatprep.mubr.f32.mxu0 %v1585
    %1652 = vmatmul.mubr.f32.gmra.mrb[0].mxu0 %v1523
    %v1653 = vpop.f32.mrb[0].mxu0
    %v1654 = vadd.f32 0.0, %v1653
    %v1655 = vpop.f32.mrb[0].mxu0
    %1656 = vdwg.mxu0
    %v1657 = vadd.f32 %v1556, %v1654
    %s1658 = scalar_lea.vmem [#allocation14], 208
    %v1659 = vld [vmem:[%s1658] sm:$0xff]
    %v1660 = vld [vmem:[%s1658 + $0x8] sm:$0xff]
    %v1661 = vld [vmem:[%s1658 + $0x10] sm:$0xff]
    %v1662 = vld [vmem:[%s1658 + $0x18] sm:$0xff]
    %v1663 = vld [vmem:[%s1658 + $0x20] sm:$0xff]
    %v1664 = vld [vmem:[%s1658 + $0x28] sm:$0xff]
    %v1665 = vld [vmem:[%s1658 + $0x30] sm:$0xff]
    %v1666 = vld [vmem:[%s1658 + $0x38] sm:$0xff]
    %v1667 = vld [vmem:[%s1658 + $0x40] sm:$0xff]
    %v1668 = vld [vmem:[%s1658 + $0x48] sm:$0xff]
    %v1669 = vld [vmem:[%s1658 + $0x50] sm:$0xff]
    %v1670 = vld [vmem:[%s1658 + $0x58] sm:$0xff]
    %v1671 = vld [vmem:[%s1658 + $0x60] sm:$0xff]
    %v1672 = vld [vmem:[%s1658 + $0x68] sm:$0xff]
    %v1673 = vld [vmem:[%s1658 + $0x70] sm:$0xff]
    %v1674 = vld [vmem:[%s1658 + $0x78] sm:$0xff]
    %v1675 = vld [vmem:[%s1658 + $0x80] sm:$0xff]
    %v1676 = vld [vmem:[%s1658 + $0x88] sm:$0xff]
    %v1677 = vld [vmem:[%s1658 + $0x90] sm:$0xff]
    %v1678 = vld [vmem:[%s1658 + $0x98] sm:$0xff]
    %v1679 = vld [vmem:[%s1658 + $0xa0] sm:$0xff]
    %v1680 = vld [vmem:[%s1658 + $0xa8] sm:$0xff]
    %v1681 = vld [vmem:[%s1658 + $0xb0] sm:$0xff]
    %v1682 = vld [vmem:[%s1658 + $0xb8] sm:$0xff]
    %v1683 = vld [vmem:[%s1658 + $0xc0] sm:$0xff]
    %v1684 = vld [vmem:[%s1658 + $0xc8] sm:$0xff]
    %v1686 = vsel %vm1583, %v1526, 0
    %1688 = vmatprep.subr.mxu0 0.0
    %1689 = vmatpush1.msra.mxu0 %v1659
    %1690 = vmatprep.subr.mxu0 0.0
    %1691 = vmatpush1.msra.mxu0 %v1660
    %1692 = vmatprep.subr.mxu0 0.0
    %1693 = vmatpush1.msra.mxu0 %v1661
    %1694 = vmatprep.subr.mxu0 0.0
    %1695 = vmatpush1.msra.mxu0 %v1662
    %1696 = vmatprep.subr.mxu0 0.0
    %1697 = vmatpush1.msra.mxu0 %v1663
    %1698 = vmatprep.subr.mxu0 0.0
    %1699 = vmatpush1.msra.mxu0 %v1664
    %1700 = vmatprep.subr.mxu0 0.0
    %1701 = vmatpush1.msra.mxu0 %v1665
    %1702 = vmatprep.subr.mxu0 0.0
    %1703 = vmatpush1.msra.mxu0 %v1666
    %1704 = vmatprep.subr.mxu0 0.0
    %1705 = vmatpush1.msra.mxu0 %v1667
    %1706 = vmatprep.subr.mxu0 0.0
    %1707 = vmatpush1.msra.mxu0 %v1668
    %1708 = vmatprep.subr.mxu0 0.0
    %1709 = vmatpush1.msra.mxu0 %v1669
    %1710 = vmatprep.subr.mxu0 0.0
    %1711 = vmatpush1.msra.mxu0 %v1670
    %1712 = vmatprep.subr.mxu0 0.0
    %1713 = vmatpush1.msra.mxu0 %v1671
    %1714 = vmatprep.subr.mxu0 0.0
    %1715 = vmatpush1.msra.mxu0 %v1672
    %1716 = vmatprep.subr.mxu0 0.0
    %1717 = vmatpush1.msra.mxu0 %v1673
    %1718 = vmatprep.subr.mxu0 0.0
    %1719 = vmatpush1.msra.mxu0 %v1674
    %1720 = vmatprep.subr.mxu0 0.0
    %1721 = vmatpush1.msra.mxu0 %v1675
    %1722 = vmatprep.subr.mxu0 0.0
    %1723 = vmatpush1.msra.mxu0 %v1676
    %1724 = vmatprep.subr.mxu0 0.0
    %1725 = vmatpush1.msra.mxu0 %v1677
    %1726 = vmatprep.subr.mxu0 0.0
    %1727 = vmatpush1.msra.mxu0 %v1678
    %1728 = vmatprep.subr.mxu0 0.0
    %1729 = vmatpush1.msra.mxu0 %v1679
    %1730 = vmatprep.subr.mxu0 0.0
    %1731 = vmatpush1.msra.mxu0 %v1680
    %1732 = vmatprep.subr.mxu0 0.0
    %1733 = vmatpush1.msra.mxu0 %v1681
    %1734 = vmatprep.subr.mxu0 0.0
    %1735 = vmatpush1.msra.mxu0 %v1682
    %1736 = vmatprep.subr.mxu0 0.0
    %1737 = vmatpush1.msra.mxu0 %v1683
    %1738 = vmatprep.subr.mxu0 0.0
    %1739 = vmatpush1.msra.mxu0 %v1684
    %1740 = vmatprep.subr.mxu0 0.0
    %1741 = vmatpush1.msra.mxu0 0.0
    %1742 = vmatprep.subr.mxu0 0.0
    %1743 = vmatpush1.msra.mxu0 0.0
    %1744 = vmatprep.subr.mxu0 0.0
    %1745 = vmatpush1.msra.mxu0 0.0
    %1746 = vmatprep.subr.mxu0 0.0
    %1747 = vmatpush1.msra.mxu0 0.0
    %1748 = vmatprep.subr.mxu0 0.0
    %1749 = vmatpush1.msra.mxu0 0.0
    %1750 = vmatprep.subr.mxu0 0.0
    %1751 = vmatpush1.msra.mxu0 0.0
    %1752 = vmatprep.mubr.f32.mxu0 %v1686
    %1753 = vmatmul.mubr.f32.gmra.mrb[0].mxu0 %v1525
    %v1754 = vpop.f32.mrb[0].mxu0
    %v1755 = vadd.f32 0.0, %v1754
    %v1756 = vpop.f32.mrb[0].mxu0
    %1757 = vdwg.mxu0
    %v1758 = vadd.f32 %v1657, %v1755
    %s1759 = scalar_lea.vmem [#allocation14], 416
    %v1760 = vld [vmem:[%s1759] sm:$0xff]
    %v1761 = vld [vmem:[%s1759 + $0x8] sm:$0xff]
    %v1762 = vld [vmem:[%s1759 + $0x10] sm:$0xff]
    %v1763 = vld [vmem:[%s1759 + $0x18] sm:$0xff]
    %v1764 = vld [vmem:[%s1759 + $0x20] sm:$0xff]
    %v1765 = vld [vmem:[%s1759 + $0x28] sm:$0xff]
    %v1766 = vld [vmem:[%s1759 + $0x30] sm:$0xff]
    %v1767 = vld [vmem:[%s1759 + $0x38] sm:$0xff]
    %v1768 = vld [vmem:[%s1759 + $0x40] sm:$0xff]
    %v1769 = vld [vmem:[%s1759 + $0x48] sm:$0xff]
    %v1770 = vld [vmem:[%s1759 + $0x50] sm:$0xff]
    %v1771 = vld [vmem:[%s1759 + $0x58] sm:$0xff]
    %v1772 = vld [vmem:[%s1759 + $0x60] sm:$0xff]
    %v1773 = vld [vmem:[%s1759 + $0x68] sm:$0xff]
    %v1774 = vld [vmem:[%s1759 + $0x70] sm:$0xff]
    %v1775 = vld [vmem:[%s1759 + $0x78] sm:$0xff]
    %v1776 = vld [vmem:[%s1759 + $0x80] sm:$0xff]
    %v1777 = vld [vmem:[%s1759 + $0x88] sm:$0xff]
    %v1778 = vld [vmem:[%s1759 + $0x90] sm:$0xff]
    %v1779 = vld [vmem:[%s1759 + $0x98] sm:$0xff]
    %v1780 = vld [vmem:[%s1759 + $0xa0] sm:$0xff]
    %v1781 = vld [vmem:[%s1759 + $0xa8] sm:$0xff]
    %v1782 = vld [vmem:[%s1759 + $0xb0] sm:$0xff]
    %v1783 = vld [vmem:[%s1759 + $0xb8] sm:$0xff]
    %v1784 = vld [vmem:[%s1759 + $0xc0] sm:$0xff]
    %v1785 = vld [vmem:[%s1759 + $0xc8] sm:$0xff]
    %v1787 = vsel %vm1583, %v1528, 0
    %1789 = vmatprep.subr.mxu0 0.0
    %1790 = vmatpush1.msra.mxu0 %v1760
    %1791 = vmatprep.subr.mxu0 0.0
    %1792 = vmatpush1.msra.mxu0 %v1761
    %1793 = vmatprep.subr.mxu0 0.0
    %1794 = vmatpush1.msra.mxu0 %v1762
    %1795 = vmatprep.subr.mxu0 0.0
    %1796 = vmatpush1.msra.mxu0 %v1763
    %1797 = vmatprep.subr.mxu0 0.0
    %1798 = vmatpush1.msra.mxu0 %v1764
    %1799 = vmatprep.subr.mxu0 0.0
    %1800 = vmatpush1.msra.mxu0 %v1765
    %1801 = vmatprep.subr.mxu0 0.0
    %1802 = vmatpush1.msra.mxu0 %v1766
    %1803 = vmatprep.subr.mxu0 0.0
    %1804 = vmatpush1.msra.mxu0 %v1767
    %1805 = vmatprep.subr.mxu0 0.0
    %1806 = vmatpush1.msra.mxu0 %v1768
    %1807 = vmatprep.subr.mxu0 0.0
    %1808 = vmatpush1.msra.mxu0 %v1769
    %1809 = vmatprep.subr.mxu0 0.0
    %1810 = vmatpush1.msra.mxu0 %v1770
    %1811 = vmatprep.subr.mxu0 0.0
    %1812 = vmatpush1.msra.mxu0 %v1771
    %1813 = vmatprep.subr.mxu0 0.0
    %1814 = vmatpush1.msra.mxu0 %v1772
    %1815 = vmatprep.subr.mxu0 0.0
    %1816 = vmatpush1.msra.mxu0 %v1773
    %1817 = vmatprep.subr.mxu0 0.0
    %1818 = vmatpush1.msra.mxu0 %v1774
    %1819 = vmatprep.subr.mxu0 0.0
    %1820 = vmatpush1.msra.mxu0 %v1775
    %1821 = vmatprep.subr.mxu0 0.0
    %1822 = vmatpush1.msra.mxu0 %v1776
    %1823 = vmatprep.subr.mxu0 0.0
    %1824 = vmatpush1.msra.mxu0 %v1777
    %1825 = vmatprep.subr.mxu0 0.0
    %1826 = vmatpush1.msra.mxu0 %v1778
    %1827 = vmatprep.subr.mxu0 0.0
    %1828 = vmatpush1.msra.mxu0 %v1779
    %1829 = vmatprep.subr.mxu0 0.0
    %1830 = vmatpush1.msra.mxu0 %v1780
    %1831 = vmatprep.subr.mxu0 0.0
    %1832 = vmatpush1.msra.mxu0 %v1781
    %1833 = vmatprep.subr.mxu0 0.0
    %1834 = vmatpush1.msra.mxu0 %v1782
    %1835 = vmatprep.subr.mxu0 0.0
    %1836 = vmatpush1.msra.mxu0 %v1783
    %1837 = vmatprep.subr.mxu0 0.0
    %1838 = vmatpush1.msra.mxu0 %v1784
    %1839 = vmatprep.subr.mxu0 0.0
    %1840 = vmatpush1.msra.mxu0 %v1785
    %1841 = vmatprep.subr.mxu0 0.0
    %1842 = vmatpush1.msra.mxu0 0.0
    %1843 = vmatprep.subr.mxu0 0.0
    %1844 = vmatpush1.msra.mxu0 0.0
    %1845 = vmatprep.subr.mxu0 0.0
    %1846 = vmatpush1.msra.mxu0 0.0
    %1847 = vmatprep.subr.mxu0 0.0
    %1848 = vmatpush1.msra.mxu0 0.0
    %1849 = vmatprep.subr.mxu0 0.0
    %1850 = vmatpush1.msra.mxu0 0.0
    %1851 = vmatprep.subr.mxu0 0.0
    %1852 = vmatpush1.msra.mxu0 0.0
    %1853 = vmatprep.mubr.f32.mxu0 %v1787
    %1854 = vmatmul.mubr.f32.gmra.mrb[0].mxu0 %v1527
    %v1855 = vpop.f32.mrb[0].mxu0
    %v1856 = vadd.f32 0.0, %v1855
    %v1857 = vpop.f32.mrb[0].mxu0
    %1858 = vdwg.mxu0
    %v1859 = vadd.f32 %v1758, %v1856
    %s1860 = scalar_lea.vmem [#allocation14], 624
    %v1861 = vld [vmem:[%s1860] sm:$0xff]
    %v1862 = vld [vmem:[%s1860 + $0x8] sm:$0xff]
    %v1863 = vld [vmem:[%s1860 + $0x10] sm:$0xff]
    %v1864 = vld [vmem:[%s1860 + $0x18] sm:$0xff]
    %v1865 = vld [vmem:[%s1860 + $0x20] sm:$0xff]
    %v1866 = vld [vmem:[%s1860 + $0x28] sm:$0xff]
    %v1867 = vld [vmem:[%s1860 + $0x30] sm:$0xff]
    %v1868 = vld [vmem:[%s1860 + $0x38] sm:$0xff]
    %v1869 = vld [vmem:[%s1860 + $0x40] sm:$0xff]
    %v1870 = vld [vmem:[%s1860 + $0x48] sm:$0xff]
    %v1871 = vld [vmem:[%s1860 + $0x50] sm:$0xff]
    %v1872 = vld [vmem:[%s1860 + $0x58] sm:$0xff]
    %v1873 = vld [vmem:[%s1860 + $0x60] sm:$0xff]
    %v1874 = vld [vmem:[%s1860 + $0x68] sm:$0xff]
    %v1875 = vld [vmem:[%s1860 + $0x70] sm:$0xff]
    %v1876 = vld [vmem:[%s1860 + $0x78] sm:$0xff]
    %v1877 = vld [vmem:[%s1860 + $0x80] sm:$0xff]
    %v1878 = vld [vmem:[%s1860 + $0x88] sm:$0xff]
    %v1879 = vld [vmem:[%s1860 + $0x90] sm:$0xff]
    %v1880 = vld [vmem:[%s1860 + $0x98] sm:$0xff]
    %v1881 = vld [vmem:[%s1860 + $0xa0] sm:$0xff]
    %v1882 = vld [vmem:[%s1860 + $0xa8] sm:$0xff]
    %v1883 = vld [vmem:[%s1860 + $0xb0] sm:$0xff]
    %v1884 = vld [vmem:[%s1860 + $0xb8] sm:$0xff]
    %v1885 = vld [vmem:[%s1860 + $0xc0] sm:$0xff]
    %v1886 = vld [vmem:[%s1860 + $0xc8] sm:$0xff]
    %v1888 = vsel %vm1583, %v1530, 0
    %1890 = vmatprep.subr.mxu0 0.0
    %1891 = vmatpush1.msra.mxu0 %v1861
    %1892 = vmatprep.subr.mxu0 0.0
    %1893 = vmatpush1.msra.mxu0 %v1862
    %1894 = vmatprep.subr.mxu0 0.0
    %1895 = vmatpush1.msra.mxu0 %v1863
    %1896 = vmatprep.subr.mxu0 0.0
    %1897 = vmatpush1.msra.mxu0 %v1864
    %1898 = vmatprep.subr.mxu0 0.0
    %1899 = vmatpush1.msra.mxu0 %v1865
    %1900 = vmatprep.subr.mxu0 0.0
    %1901 = vmatpush1.msra.mxu0 %v1866
    %1902 = vmatprep.subr.mxu0 0.0
    %1903 = vmatpush1.msra.mxu0 %v1867
    %1904 = vmatprep.subr.mxu0 0.0
    %1905 = vmatpush1.msra.mxu0 %v1868
    %1906 = vmatprep.subr.mxu0 0.0
    %1907 = vmatpush1.msra.mxu0 %v1869
    %1908 = vmatprep.subr.mxu0 0.0
    %1909 = vmatpush1.msra.mxu0 %v1870
    %1910 = vmatprep.subr.mxu0 0.0
    %1911 = vmatpush1.msra.mxu0 %v1871
    %1912 = vmatprep.subr.mxu0 0.0
    %1913 = vmatpush1.msra.mxu0 %v1872
    %1914 = vmatprep.subr.mxu0 0.0
    %1915 = vmatpush1.msra.mxu0 %v1873
    %1916 = vmatprep.subr.mxu0 0.0
    %1917 = vmatpush1.msra.mxu0 %v1874
    %1918 = vmatprep.subr.mxu0 0.0
    %1919 = vmatpush1.msra.mxu0 %v1875
    %1920 = vmatprep.subr.mxu0 0.0
    %1921 = vmatpush1.msra.mxu0 %v1876
    %1922 = vmatprep.subr.mxu0 0.0
    %1923 = vmatpush1.msra.mxu0 %v1877
    %1924 = vmatprep.subr.mxu0 0.0
    %1925 = vmatpush1.msra.mxu0 %v1878
    %1926 = vmatprep.subr.mxu0 0.0
    %1927 = vmatpush1.msra.mxu0 %v1879
    %1928 = vmatprep.subr.mxu0 0.0
    %1929 = vmatpush1.msra.mxu0 %v1880
    %1930 = vmatprep.subr.mxu0 0.0
    %1931 = vmatpush1.msra.mxu0 %v1881
    %1932 = vmatprep.subr.mxu0 0.0
    %1933 = vmatpush1.msra.mxu0 %v1882
    %1934 = vmatprep.subr.mxu0 0.0
    %1935 = vmatpush1.msra.mxu0 %v1883
    %1936 = vmatprep.subr.mxu0 0.0
    %1937 = vmatpush1.msra.mxu0 %v1884
    %1938 = vmatprep.subr.mxu0 0.0
    %1939 = vmatpush1.msra.mxu0 %v1885
    %1940 = vmatprep.subr.mxu0 0.0
    %1941 = vmatpush1.msra.mxu0 %v1886
    %1942 = vmatprep.subr.mxu0 0.0
    %1943 = vmatpush1.msra.mxu0 0.0
    %1944 = vmatprep.subr.mxu0 0.0
    %1945 = vmatpush1.msra.mxu0 0.0
    %1946 = vmatprep.subr.mxu0 0.0
    %1947 = vmatpush1.msra.mxu0 0.0
    %1948 = vmatprep.subr.mxu0 0.0
    %1949 = vmatpush1.msra.mxu0 0.0
    %1950 = vmatprep.subr.mxu0 0.0
    %1951 = vmatpush1.msra.mxu0 0.0
    %1952 = vmatprep.subr.mxu0 0.0
    %1953 = vmatpush1.msra.mxu0 0.0
    %1954 = vmatprep.mubr.f32.mxu0 %v1888
    %1955 = vmatmul.mubr.f32.gmra.mrb[0].mxu0 %v1529
    %v1956 = vpop.f32.mrb[0].mxu0
    %v1957 = vadd.f32 0.0, %v1956
    %v1958 = vpop.f32.mrb[0].mxu0
    %1959 = vdwg.mxu0
    %v1960 = vadd.f32 %v1859, %v1957
    %s1961 = scalar_lea.vmem [#allocation14], 832
    %v1962 = vld [vmem:[%s1961] sm:$0xff]
    %v1963 = vld [vmem:[%s1961 + $0x8] sm:$0xff]
    %v1964 = vld [vmem:[%s1961 + $0x10] sm:$0xff]
    %v1965 = vld [vmem:[%s1961 + $0x18] sm:$0xff]
    %v1966 = vld [vmem:[%s1961 + $0x20] sm:$0xff]
    %v1967 = vld [vmem:[%s1961 + $0x28] sm:$0xff]
    %v1968 = vld [vmem:[%s1961 + $0x30] sm:$0xff]
    %v1969 = vld [vmem:[%s1961 + $0x38] sm:$0xff]
    %v1970 = vld [vmem:[%s1961 + $0x40] sm:$0xff]
    %v1971 = vld [vmem:[%s1961 + $0x48] sm:$0xff]
    %v1972 = vld [vmem:[%s1961 + $0x50] sm:$0xff]
    %v1973 = vld [vmem:[%s1961 + $0x58] sm:$0xff]
    %v1974 = vld [vmem:[%s1961 + $0x60] sm:$0xff]
    %v1975 = vld [vmem:[%s1961 + $0x68] sm:$0xff]
    %v1976 = vld [vmem:[%s1961 + $0x70] sm:$0xff]
    %v1977 = vld [vmem:[%s1961 + $0x78] sm:$0xff]
    %v1978 = vld [vmem:[%s1961 + $0x80] sm:$0xff]
    %v1979 = vld [vmem:[%s1961 + $0x88] sm:$0xff]
    %v1980 = vld [vmem:[%s1961 + $0x90] sm:$0xff]
    %v1981 = vld [vmem:[%s1961 + $0x98] sm:$0xff]
    %v1982 = vld [vmem:[%s1961 + $0xa0] sm:$0xff]
    %v1983 = vld [vmem:[%s1961 + $0xa8] sm:$0xff]
    %v1984 = vld [vmem:[%s1961 + $0xb0] sm:$0xff]
    %v1985 = vld [vmem:[%s1961 + $0xb8] sm:$0xff]
    %v1986 = vld [vmem:[%s1961 + $0xc0] sm:$0xff]
    %v1987 = vld [vmem:[%s1961 + $0xc8] sm:$0xff]
    %v1989 = vsel %vm1583, %v1532, 0
    %1991 = vmatprep.subr.mxu0 0.0
    %1992 = vmatpush1.msra.mxu0 %v1962
    %1993 = vmatprep.subr.mxu0 0.0
    %1994 = vmatpush1.msra.mxu0 %v1963
    %1995 = vmatprep.subr.mxu0 0.0
    %1996 = vmatpush1.msra.mxu0 %v1964
    %1997 = vmatprep.subr.mxu0 0.0
    %1998 = vmatpush1.msra.mxu0 %v1965
    %1999 = vmatprep.subr.mxu0 0.0
    %2000 = vmatpush1.msra.mxu0 %v1966
    %2001 = vmatprep.subr.mxu0 0.0
    %2002 = vmatpush1.msra.mxu0 %v1967
    %2003 = vmatprep.subr.mxu0 0.0
    %2004 = vmatpush1.msra.mxu0 %v1968
    %2005 = vmatprep.subr.mxu0 0.0
    %2006 = vmatpush1.msra.mxu0 %v1969
    %2007 = vmatprep.subr.mxu0 0.0
    %2008 = vmatpush1.msra.mxu0 %v1970
    %2009 = vmatprep.subr.mxu0 0.0
    %2010 = vmatpush1.msra.mxu0 %v1971
    %2011 = vmatprep.subr.mxu0 0.0
    %2012 = vmatpush1.msra.mxu0 %v1972
    %2013 = vmatprep.subr.mxu0 0.0
    %2014 = vmatpush1.msra.mxu0 %v1973
    %2015 = vmatprep.subr.mxu0 0.0
    %2016 = vmatpush1.msra.mxu0 %v1974
    %2017 = vmatprep.subr.mxu0 0.0
    %2018 = vmatpush1.msra.mxu0 %v1975
    %2019 = vmatprep.subr.mxu0 0.0
    %2020 = vmatpush1.msra.mxu0 %v1976
    %2021 = vmatprep.subr.mxu0 0.0
    %2022 = vmatpush1.msra.mxu0 %v1977
    %2023 = vmatprep.subr.mxu0 0.0
    %2024 = vmatpush1.msra.mxu0 %v1978
    %2025 = vmatprep.subr.mxu0 0.0
    %2026 = vmatpush1.msra.mxu0 %v1979
    %2027 = vmatprep.subr.mxu0 0.0
    %2028 = vmatpush1.msra.mxu0 %v1980
    %2029 = vmatprep.subr.mxu0 0.0
    %2030 = vmatpush1.msra.mxu0 %v1981
    %2031 = vmatprep.subr.mxu0 0.0
    %2032 = vmatpush1.msra.mxu0 %v1982
    %2033 = vmatprep.subr.mxu0 0.0
    %2034 = vmatpush1.msra.mxu0 %v1983
    %2035 = vmatprep.subr.mxu0 0.0
    %2036 = vmatpush1.msra.mxu0 %v1984
    %2037 = vmatprep.subr.mxu0 0.0
    %2038 = vmatpush1.msra.mxu0 %v1985
    %2039 = vmatprep.subr.mxu0 0.0
    %2040 = vmatpush1.msra.mxu0 %v1986
    %2041 = vmatprep.subr.mxu0 0.0
    %2042 = vmatpush1.msra.mxu0 %v1987
    %2043 = vmatprep.subr.mxu0 0.0
    %2044 = vmatpush1.msra.mxu0 0.0
    %2045 = vmatprep.subr.mxu0 0.0
    %2046 = vmatpush1.msra.mxu0 0.0
    %2047 = vmatprep.subr.mxu0 0.0
    %2048 = vmatpush1.msra.mxu0 0.0
    %2049 = vmatprep.subr.mxu0 0.0
    %2050 = vmatpush1.msra.mxu0 0.0
    %2051 = vmatprep.subr.mxu0 0.0
    %2052 = vmatpush1.msra.mxu0 0.0
    %2053 = vmatprep.subr.mxu0 0.0
    %2054 = vmatpush1.msra.mxu0 0.0
    %2055 = vmatprep.mubr.f32.mxu0 %v1989
    %2056 = vmatmul.mubr.f32.gmra.mrb[0].mxu0 %v1531
    %v2057 = vpop.f32.mrb[0].mxu0
    %v2058 = vadd.f32 0.0, %v2057
    %v2059 = vpop.f32.mrb[0].mxu0
    %2060 = vdwg.mxu0
    %v2061 = vadd.f32 %v1960, %v2058
    %s2062 = scalar_lea.vmem [#allocation14], 1040
    %v2063 = vld [vmem:[%s2062] sm:$0xff]
    %v2064 = vld [vmem:[%s2062 + $0x8] sm:$0xff]
    %v2065 = vld [vmem:[%s2062 + $0x10] sm:$0xff]
    %v2066 = vld [vmem:[%s2062 + $0x18] sm:$0xff]
    %v2067 = vld [vmem:[%s2062 + $0x20] sm:$0xff]
    %v2068 = vld [vmem:[%s2062 + $0x28] sm:$0xff]
    %v2069 = vld [vmem:[%s2062 + $0x30] sm:$0xff]
    %v2070 = vld [vmem:[%s2062 + $0x38] sm:$0xff]
    %v2071 = vld [vmem:[%s2062 + $0x40] sm:$0xff]
    %v2072 = vld [vmem:[%s2062 + $0x48] sm:$0xff]
    %v2073 = vld [vmem:[%s2062 + $0x50] sm:$0xff]
    %v2074 = vld [vmem:[%s2062 + $0x58] sm:$0xff]
    %v2075 = vld [vmem:[%s2062 + $0x60] sm:$0xff]
    %v2076 = vld [vmem:[%s2062 + $0x68] sm:$0xff]
    %v2077 = vld [vmem:[%s2062 + $0x70] sm:$0xff]
    %v2078 = vld [vmem:[%s2062 + $0x78] sm:$0xff]
    %v2079 = vld [vmem:[%s2062 + $0x80] sm:$0xff]
    %v2080 = vld [vmem:[%s2062 + $0x88] sm:$0xff]
    %v2081 = vld [vmem:[%s2062 + $0x90] sm:$0xff]
    %v2082 = vld [vmem:[%s2062 + $0x98] sm:$0xff]
    %v2083 = vld [vmem:[%s2062 + $0xa0] sm:$0xff]
    %v2084 = vld [vmem:[%s2062 + $0xa8] sm:$0xff]
    %v2085 = vld [vmem:[%s2062 + $0xb0] sm:$0xff]
    %v2086 = vld [vmem:[%s2062 + $0xb8] sm:$0xff]
    %v2087 = vld [vmem:[%s2062 + $0xc0] sm:$0xff]
    %v2088 = vld [vmem:[%s2062 + $0xc8] sm:$0xff]
    %v2090 = vsel %vm1583, %v1534, 0
    %2092 = vmatprep.subr.mxu0 0.0
    %2093 = vmatpush1.msra.mxu0 %v2063
    %2094 = vmatprep.subr.mxu0 0.0
    %2095 = vmatpush1.msra.mxu0 %v2064
    %2096 = vmatprep.subr.mxu0 0.0
    %2097 = vmatpush1.msra.mxu0 %v2065
    %2098 = vmatprep.subr.mxu0 0.0
    %2099 = vmatpush1.msra.mxu0 %v2066
    %2100 = vmatprep.subr.mxu0 0.0
    %2101 = vmatpush1.msra.mxu0 %v2067
    %2102 = vmatprep.subr.mxu0 0.0
    %2103 = vmatpush1.msra.mxu0 %v2068
    %2104 = vmatprep.subr.mxu0 0.0
    %2105 = vmatpush1.msra.mxu0 %v2069
    %2106 = vmatprep.subr.mxu0 0.0
    %2107 = vmatpush1.msra.mxu0 %v2070
    %2108 = vmatprep.subr.mxu0 0.0
    %2109 = vmatpush1.msra.mxu0 %v2071
    %2110 = vmatprep.subr.mxu0 0.0
    %2111 = vmatpush1.msra.mxu0 %v2072
    %2112 = vmatprep.subr.mxu0 0.0
    %2113 = vmatpush1.msra.mxu0 %v2073
    %2114 = vmatprep.subr.mxu0 0.0
    %2115 = vmatpush1.msra.mxu0 %v2074
    %2116 = vmatprep.subr.mxu0 0.0
    %2117 = vmatpush1.msra.mxu0 %v2075
    %2118 = vmatprep.subr.mxu0 0.0
    %2119 = vmatpush1.msra.mxu0 %v2076
    %2120 = vmatprep.subr.mxu0 0.0
    %2121 = vmatpush1.msra.mxu0 %v2077
    %2122 = vmatprep.subr.mxu0 0.0
    %2123 = vmatpush1.msra.mxu0 %v2078
    %2124 = vmatprep.subr.mxu0 0.0
    %2125 = vmatpush1.msra.mxu0 %v2079
    %2126 = vmatprep.subr.mxu0 0.0
    %2127 = vmatpush1.msra.mxu0 %v2080
    %2128 = vmatprep.subr.mxu0 0.0
    %2129 = vmatpush1.msra.mxu0 %v2081
    %2130 = vmatprep.subr.mxu0 0.0
    %2131 = vmatpush1.msra.mxu0 %v2082
    %2132 = vmatprep.subr.mxu0 0.0
    %2133 = vmatpush1.msra.mxu0 %v2083
    %2134 = vmatprep.subr.mxu0 0.0
    %2135 = vmatpush1.msra.mxu0 %v2084
    %2136 = vmatprep.subr.mxu0 0.0
    %2137 = vmatpush1.msra.mxu0 %v2085
    %2138 = vmatprep.subr.mxu0 0.0
    %2139 = vmatpush1.msra.mxu0 %v2086
    %2140 = vmatprep.subr.mxu0 0.0
    %2141 = vmatpush1.msra.mxu0 %v2087
    %2142 = vmatprep.subr.mxu0 0.0
    %2143 = vmatpush1.msra.mxu0 %v2088
    %2144 = vmatprep.subr.mxu0 0.0
    %2145 = vmatpush1.msra.mxu0 0.0
    %2146 = vmatprep.subr.mxu0 0.0
    %2147 = vmatpush1.msra.mxu0 0.0
    %2148 = vmatprep.subr.mxu0 0.0
    %2149 = vmatpush1.msra.mxu0 0.0
    %2150 = vmatprep.subr.mxu0 0.0
    %2151 = vmatpush1.msra.mxu0 0.0
    %2152 = vmatprep.subr.mxu0 0.0
    %2153 = vmatpush1.msra.mxu0 0.0
    %2154 = vmatprep.subr.mxu0 0.0
    %2155 = vmatpush1.msra.mxu0 0.0
    %2156 = vmatprep.mubr.f32.mxu0 %v2090
    %2157 = vmatmul.mubr.f32.gmra.mrb[0].mxu0 %v1533
    %v2158 = vpop.f32.mrb[0].mxu0
    %v2159 = vadd.f32 0.0, %v2158
    %v2160 = vpop.f32.mrb[0].mxu0
    %2161 = vdwg.mxu0
    %v2162 = vadd.f32 %v2061, %v2159
    %s2163 = scalar_lea.vmem [#allocation14], 1248
    %v2164 = vld [vmem:[%s2163] sm:$0xff]
    %v2165 = vld [vmem:[%s2163 + $0x8] sm:$0xff]
    %v2166 = vld [vmem:[%s2163 + $0x10] sm:$0xff]
    %v2167 = vld [vmem:[%s2163 + $0x18] sm:$0xff]
    %v2168 = vld [vmem:[%s2163 + $0x20] sm:$0xff]
    %v2169 = vld [vmem:[%s2163 + $0x28] sm:$0xff]
    %v2170 = vld [vmem:[%s2163 + $0x30] sm:$0xff]
    %v2171 = vld [vmem:[%s2163 + $0x38] sm:$0xff]
    %v2172 = vld [vmem:[%s2163 + $0x40] sm:$0xff]
    %v2173 = vld [vmem:[%s2163 + $0x48] sm:$0xff]
    %v2174 = vld [vmem:[%s2163 + $0x50] sm:$0xff]
    %v2175 = vld [vmem:[%s2163 + $0x58] sm:$0xff]
    %v2176 = vld [vmem:[%s2163 + $0x60] sm:$0xff]
    %v2177 = vld [vmem:[%s2163 + $0x68] sm:$0xff]
    %v2178 = vld [vmem:[%s2163 + $0x70] sm:$0xff]
    %v2179 = vld [vmem:[%s2163 + $0x78] sm:$0xff]
    %v2180 = vld [vmem:[%s2163 + $0x80] sm:$0xff]
    %v2181 = vld [vmem:[%s2163 + $0x88] sm:$0xff]
    %v2182 = vld [vmem:[%s2163 + $0x90] sm:$0xff]
    %v2183 = vld [vmem:[%s2163 + $0x98] sm:$0xff]
    %v2184 = vld [vmem:[%s2163 + $0xa0] sm:$0xff]
    %v2185 = vld [vmem:[%s2163 + $0xa8] sm:$0xff]
    %v2186 = vld [vmem:[%s2163 + $0xb0] sm:$0xff]
    %v2187 = vld [vmem:[%s2163 + $0xb8] sm:$0xff]
    %v2188 = vld [vmem:[%s2163 + $0xc0] sm:$0xff]
    %v2189 = vld [vmem:[%s2163 + $0xc8] sm:$0xff]
    %v2191 = vsel %vm1583, %v1536, 0
    %2193 = vmatprep.subr.mxu0 0.0
    %2194 = vmatpush1.msra.mxu0 %v2164
    %2195 = vmatprep.subr.mxu0 0.0
    %2196 = vmatpush1.msra.mxu0 %v2165
    %2197 = vmatprep.subr.mxu0 0.0
    %2198 = vmatpush1.msra.mxu0 %v2166
    %2199 = vmatprep.subr.mxu0 0.0
    %2200 = vmatpush1.msra.mxu0 %v2167
    %2201 = vmatprep.subr.mxu0 0.0
    %2202 = vmatpush1.msra.mxu0 %v2168
    %2203 = vmatprep.subr.mxu0 0.0
    %2204 = vmatpush1.msra.mxu0 %v2169
    %2205 = vmatprep.subr.mxu0 0.0
    %2206 = vmatpush1.msra.mxu0 %v2170
    %2207 = vmatprep.subr.mxu0 0.0
    %2208 = vmatpush1.msra.mxu0 %v2171
    %2209 = vmatprep.subr.mxu0 0.0
    %2210 = vmatpush1.msra.mxu0 %v2172
    %2211 = vmatprep.subr.mxu0 0.0
    %2212 = vmatpush1.msra.mxu0 %v2173
    %2213 = vmatprep.subr.mxu0 0.0
    %2214 = vmatpush1.msra.mxu0 %v2174
    %2215 = vmatprep.subr.mxu0 0.0
    %2216 = vmatpush1.msra.mxu0 %v2175
    %2217 = vmatprep.subr.mxu0 0.0
    %2218 = vmatpush1.msra.mxu0 %v2176
    %2219 = vmatprep.subr.mxu0 0.0
    %2220 = vmatpush1.msra.mxu0 %v2177
    %2221 = vmatprep.subr.mxu0 0.0
    %2222 = vmatpush1.msra.mxu0 %v2178
    %2223 = vmatprep.subr.mxu0 0.0
    %2224 = vmatpush1.msra.mxu0 %v2179
    %2225 = vmatprep.subr.mxu0 0.0
    %2226 = vmatpush1.msra.mxu0 %v2180
    %2227 = vmatprep.subr.mxu0 0.0
    %2228 = vmatpush1.msra.mxu0 %v2181
    %2229 = vmatprep.subr.mxu0 0.0
    %2230 = vmatpush1.msra.mxu0 %v2182
    %2231 = vmatprep.subr.mxu0 0.0
    %2232 = vmatpush1.msra.mxu0 %v2183
    %2233 = vmatprep.subr.mxu0 0.0
    %2234 = vmatpush1.msra.mxu0 %v2184
    %2235 = vmatprep.subr.mxu0 0.0
    %2236 = vmatpush1.msra.mxu0 %v2185
    %2237 = vmatprep.subr.mxu0 0.0
    %2238 = vmatpush1.msra.mxu0 %v2186
    %2239 = vmatprep.subr.mxu0 0.0
    %2240 = vmatpush1.msra.mxu0 %v2187
    %2241 = vmatprep.subr.mxu0 0.0
    %2242 = vmatpush1.msra.mxu0 %v2188
    %2243 = vmatprep.subr.mxu0 0.0
    %2244 = vmatpush1.msra.mxu0 %v2189
    %2245 = vmatprep.subr.mxu0 0.0
    %2246 = vmatpush1.msra.mxu0 0.0
    %2247 = vmatprep.subr.mxu0 0.0
    %2248 = vmatpush1.msra.mxu0 0.0
    %2249 = vmatprep.subr.mxu0 0.0
    %2250 = vmatpush1.msra.mxu0 0.0
    %2251 = vmatprep.subr.mxu0 0.0
    %2252 = vmatpush1.msra.mxu0 0.0
    %2253 = vmatprep.subr.mxu0 0.0
    %2254 = vmatpush1.msra.mxu0 0.0
    %2255 = vmatprep.subr.mxu0 0.0
    %2256 = vmatpush1.msra.mxu0 0.0
    %2257 = vmatprep.mubr.f32.mxu0 %v2191
    %2258 = vmatmul.mubr.f32.gmra.mrb[0].mxu0 %v1535
    %v2259 = vpop.f32.mrb[0].mxu0
    %v2260 = vadd.f32 0.0, %v2259
    %v2261 = vpop.f32.mrb[0].mxu0
    %2262 = vdwg.mxu0
    %v2263 = vadd.f32 %v2162, %v2260
    %s2264 = scalar_lea.vmem [#allocation14], 1456
    %v2265 = vld [vmem:[%s2264] sm:$0xff]
    %v2266 = vld [vmem:[%s2264 + $0x8] sm:$0xff]
    %v2267 = vld [vmem:[%s2264 + $0x10] sm:$0xff]
    %v2268 = vld [vmem:[%s2264 + $0x18] sm:$0xff]
    %v2269 = vld [vmem:[%s2264 + $0x20] sm:$0xff]
    %v2270 = vld [vmem:[%s2264 + $0x28] sm:$0xff]
    %v2271 = vld [vmem:[%s2264 + $0x30] sm:$0xff]
    %v2272 = vld [vmem:[%s2264 + $0x38] sm:$0xff]
    %v2273 = vld [vmem:[%s2264 + $0x40] sm:$0xff]
    %v2274 = vld [vmem:[%s2264 + $0x48] sm:$0xff]
    %v2275 = vld [vmem:[%s2264 + $0x50] sm:$0xff]
    %v2276 = vld [vmem:[%s2264 + $0x58] sm:$0xff]
    %v2277 = vld [vmem:[%s2264 + $0x60] sm:$0xff]
    %v2278 = vld [vmem:[%s2264 + $0x68] sm:$0xff]
    %v2279 = vld [vmem:[%s2264 + $0x70] sm:$0xff]
    %v2280 = vld [vmem:[%s2264 + $0x78] sm:$0xff]
    %v2281 = vld [vmem:[%s2264 + $0x80] sm:$0xff]
    %v2282 = vld [vmem:[%s2264 + $0x88] sm:$0xff]
    %v2283 = vld [vmem:[%s2264 + $0x90] sm:$0xff]
    %v2284 = vld [vmem:[%s2264 + $0x98] sm:$0xff]
    %v2285 = vld [vmem:[%s2264 + $0xa0] sm:$0xff]
    %v2286 = vld [vmem:[%s2264 + $0xa8] sm:$0xff]
    %v2287 = vld [vmem:[%s2264 + $0xb0] sm:$0xff]
    %v2288 = vld [vmem:[%s2264 + $0xb8] sm:$0xff]
    %v2289 = vld [vmem:[%s2264 + $0xc0] sm:$0xff]
    %v2290 = vld [vmem:[%s2264 + $0xc8] sm:$0xff]
    %v2292 = vsel %vm1583, %v1538, 0
    %2294 = vmatprep.subr.mxu0 0.0
    %2295 = vmatpush1.msra.mxu0 %v2265
    %2296 = vmatprep.subr.mxu0 0.0
    %2297 = vmatpush1.msra.mxu0 %v2266
    %2298 = vmatprep.subr.mxu0 0.0
    %2299 = vmatpush1.msra.mxu0 %v2267
    %2300 = vmatprep.subr.mxu0 0.0
    %2301 = vmatpush1.msra.mxu0 %v2268
    %2302 = vmatprep.subr.mxu0 0.0
    %2303 = vmatpush1.msra.mxu0 %v2269
    %2304 = vmatprep.subr.mxu0 0.0
    %2305 = vmatpush1.msra.mxu0 %v2270
    %2306 = vmatprep.subr.mxu0 0.0
    %2307 = vmatpush1.msra.mxu0 %v2271
    %2308 = vmatprep.subr.mxu0 0.0
    %2309 = vmatpush1.msra.mxu0 %v2272
    %2310 = vmatprep.subr.mxu0 0.0
    %2311 = vmatpush1.msra.mxu0 %v2273
    %2312 = vmatprep.subr.mxu0 0.0
    %2313 = vmatpush1.msra.mxu0 %v2274
    %2314 = vmatprep.subr.mxu0 0.0
    %2315 = vmatpush1.msra.mxu0 %v2275
    %2316 = vmatprep.subr.mxu0 0.0
    %2317 = vmatpush1.msra.mxu0 %v2276
    %2318 = vmatprep.subr.mxu0 0.0
    %2319 = vmatpush1.msra.mxu0 %v2277
    %2320 = vmatprep.subr.mxu0 0.0
    %2321 = vmatpush1.msra.mxu0 %v2278
    %2322 = vmatprep.subr.mxu0 0.0
    %2323 = vmatpush1.msra.mxu0 %v2279
    %2324 = vmatprep.subr.mxu0 0.0
    %2325 = vmatpush1.msra.mxu0 %v2280
    %2326 = vmatprep.subr.mxu0 0.0
    %2327 = vmatpush1.msra.mxu0 %v2281
    %2328 = vmatprep.subr.mxu0 0.0
    %2329 = vmatpush1.msra.mxu0 %v2282
    %2330 = vmatprep.subr.mxu0 0.0
    %2331 = vmatpush1.msra.mxu0 %v2283
    %2332 = vmatprep.subr.mxu0 0.0
    %2333 = vmatpush1.msra.mxu0 %v2284
    %2334 = vmatprep.subr.mxu0 0.0
    %2335 = vmatpush1.msra.mxu0 %v2285
    %2336 = vmatprep.subr.mxu0 0.0
    %2337 = vmatpush1.msra.mxu0 %v2286
    %2338 = vmatprep.subr.mxu0 0.0
    %2339 = vmatpush1.msra.mxu0 %v2287
    %2340 = vmatprep.subr.mxu0 0.0
    %2341 = vmatpush1.msra.mxu0 %v2288
    %2342 = vmatprep.subr.mxu0 0.0
    %2343 = vmatpush1.msra.mxu0 %v2289
    %2344 = vmatprep.subr.mxu0 0.0
    %2345 = vmatpush1.msra.mxu0 %v2290
    %2346 = vmatprep.subr.mxu0 0.0
    %2347 = vmatpush1.msra.mxu0 0.0
    %2348 = vmatprep.subr.mxu0 0.0
    %2349 = vmatpush1.msra.mxu0 0.0
    %2350 = vmatprep.subr.mxu0 0.0
    %2351 = vmatpush1.msra.mxu0 0.0
    %2352 = vmatprep.subr.mxu0 0.0
    %2353 = vmatpush1.msra.mxu0 0.0
    %2354 = vmatprep.subr.mxu0 0.0
    %2355 = vmatpush1.msra.mxu0 0.0
    %2356 = vmatprep.subr.mxu0 0.0
    %2357 = vmatpush1.msra.mxu0 0.0
    %2358 = vmatprep.mubr.f32.mxu0 %v2292
    %2359 = vmatmul.mubr.f32.gmra.mrb[0].mxu0 %v1537
    %v2360 = vpop.f32.mrb[0].mxu0
    %v2361 = vadd.f32 0.0, %v2360
    %v2362 = vpop.f32.mrb[0].mxu0
    %2363 = vdwg.mxu0
    %v2364 = vadd.f32 %v2263, %v2361
    %s2365 = scalar_lea.vmem [#allocation14], 1664
    %v2366 = vld [vmem:[%s2365] sm:$0xff]
    %v2367 = vld [vmem:[%s2365 + $0x8] sm:$0xff]
    %v2368 = vld [vmem:[%s2365 + $0x10] sm:$0xff]
    %v2369 = vld [vmem:[%s2365 + $0x18] sm:$0xff]
    %v2370 = vld [vmem:[%s2365 + $0x20] sm:$0xff]
    %v2371 = vld [vmem:[%s2365 + $0x28] sm:$0xff]
    %v2372 = vld [vmem:[%s2365 + $0x30] sm:$0xff]
    %v2373 = vld [vmem:[%s2365 + $0x38] sm:$0xff]
    %v2374 = vld [vmem:[%s2365 + $0x40] sm:$0xff]
    %v2375 = vld [vmem:[%s2365 + $0x48] sm:$0xff]
    %v2376 = vld [vmem:[%s2365 + $0x50] sm:$0xff]
    %v2377 = vld [vmem:[%s2365 + $0x58] sm:$0xff]
    %v2378 = vld [vmem:[%s2365 + $0x60] sm:$0xff]
    %v2379 = vld [vmem:[%s2365 + $0x68] sm:$0xff]
    %v2380 = vld [vmem:[%s2365 + $0x70] sm:$0xff]
    %v2381 = vld [vmem:[%s2365 + $0x78] sm:$0xff]
    %v2382 = vld [vmem:[%s2365 + $0x80] sm:$0xff]
    %v2383 = vld [vmem:[%s2365 + $0x88] sm:$0xff]
    %v2384 = vld [vmem:[%s2365 + $0x90] sm:$0xff]
    %v2385 = vld [vmem:[%s2365 + $0x98] sm:$0xff]
    %v2386 = vld [vmem:[%s2365 + $0xa0] sm:$0xff]
    %v2387 = vld [vmem:[%s2365 + $0xa8] sm:$0xff]
    %v2388 = vld [vmem:[%s2365 + $0xb0] sm:$0xff]
    %v2389 = vld [vmem:[%s2365 + $0xb8] sm:$0xff]
    %v2390 = vld [vmem:[%s2365 + $0xc0] sm:$0xff]
    %v2391 = vld [vmem:[%s2365 + $0xc8] sm:$0xff]
    %v2393 = vsel %vm1583, %v1540, 0
    %2395 = vmatprep.subr.mxu0 0.0
    %2396 = vmatpush1.msra.mxu0 %v2366
    %2397 = vmatprep.subr.mxu0 0.0
    %2398 = vmatpush1.msra.mxu0 %v2367
    %2399 = vmatprep.subr.mxu0 0.0
    %2400 = vmatpush1.msra.mxu0 %v2368
    %2401 = vmatprep.subr.mxu0 0.0
    %2402 = vmatpush1.msra.mxu0 %v2369
    %2403 = vmatprep.subr.mxu0 0.0
    %2404 = vmatpush1.msra.mxu0 %v2370
    %2405 = vmatprep.subr.mxu0 0.0
    %2406 = vmatpush1.msra.mxu0 %v2371
    %2407 = vmatprep.subr.mxu0 0.0
    %2408 = vmatpush1.msra.mxu0 %v2372
    %2409 = vmatprep.subr.mxu0 0.0
    %2410 = vmatpush1.msra.mxu0 %v2373
    %2411 = vmatprep.subr.mxu0 0.0
    %2412 = vmatpush1.msra.mxu0 %v2374
    %2413 = vmatprep.subr.mxu0 0.0
    %2414 = vmatpush1.msra.mxu0 %v2375
    %2415 = vmatprep.subr.mxu0 0.0
    %2416 = vmatpush1.msra.mxu0 %v2376
    %2417 = vmatprep.subr.mxu0 0.0
    %2418 = vmatpush1.msra.mxu0 %v2377
    %2419 = vmatprep.subr.mxu0 0.0
    %2420 = vmatpush1.msra.mxu0 %v2378
    %2421 = vmatprep.subr.mxu0 0.0
    %2422 = vmatpush1.msra.mxu0 %v2379
    %2423 = vmatprep.subr.mxu0 0.0
    %2424 = vmatpush1.msra.mxu0 %v2380
    %2425 = vmatprep.subr.mxu0 0.0
    %2426 = vmatpush1.msra.mxu0 %v2381
    %2427 = vmatprep.subr.mxu0 0.0
    %2428 = vmatpush1.msra.mxu0 %v2382
    %2429 = vmatprep.subr.mxu0 0.0
    %2430 = vmatpush1.msra.mxu0 %v2383
    %2431 = vmatprep.subr.mxu0 0.0
    %2432 = vmatpush1.msra.mxu0 %v2384
    %2433 = vmatprep.subr.mxu0 0.0
    %2434 = vmatpush1.msra.mxu0 %v2385
    %2435 = vmatprep.subr.mxu0 0.0
    %2436 = vmatpush1.msra.mxu0 %v2386
    %2437 = vmatprep.subr.mxu0 0.0
    %2438 = vmatpush1.msra.mxu0 %v2387
    %2439 = vmatprep.subr.mxu0 0.0
    %2440 = vmatpush1.msra.mxu0 %v2388
    %2441 = vmatprep.subr.mxu0 0.0
    %2442 = vmatpush1.msra.mxu0 %v2389
    %2443 = vmatprep.subr.mxu0 0.0
    %2444 = vmatpush1.msra.mxu0 %v2390
    %2445 = vmatprep.subr.mxu0 0.0
    %2446 = vmatpush1.msra.mxu0 %v2391
    %2447 = vmatprep.subr.mxu0 0.0
    %2448 = vmatpush1.msra.mxu0 0.0
    %2449 = vmatprep.subr.mxu0 0.0
    %2450 = vmatpush1.msra.mxu0 0.0
    %2451 = vmatprep.subr.mxu0 0.0
    %2452 = vmatpush1.msra.mxu0 0.0
    %2453 = vmatprep.subr.mxu0 0.0
    %2454 = vmatpush1.msra.mxu0 0.0
    %2455 = vmatprep.subr.mxu0 0.0
    %2456 = vmatpush1.msra.mxu0 0.0
    %2457 = vmatprep.subr.mxu0 0.0
    %2458 = vmatpush1.msra.mxu0 0.0
    %2459 = vmatprep.mubr.f32.mxu0 %v2393
    %2460 = vmatmul.mubr.f32.gmra.mrb[0].mxu0 %v1539
    %v2461 = vpop.f32.mrb[0].mxu0
    %v2462 = vadd.f32 0.0, %v2461
    %v2463 = vpop.f32.mrb[0].mxu0
    %2464 = vdwg.mxu0
    %v2465 = vadd.f32 %v2364, %v2462
    %s2466 = scalar_lea.vmem [#allocation14], 1872
    %v2467 = vld [vmem:[%s2466] sm:$0xff]
    %v2468 = vld [vmem:[%s2466 + $0x8] sm:$0xff]
    %v2469 = vld [vmem:[%s2466 + $0x10] sm:$0xff]
    %v2470 = vld [vmem:[%s2466 + $0x18] sm:$0xff]
    %v2471 = vld [vmem:[%s2466 + $0x20] sm:$0xff]
    %v2472 = vld [vmem:[%s2466 + $0x28] sm:$0xff]
    %v2473 = vld [vmem:[%s2466 + $0x30] sm:$0xff]
    %v2474 = vld [vmem:[%s2466 + $0x38] sm:$0xff]
    %v2475 = vld [vmem:[%s2466 + $0x40] sm:$0xff]
    %v2476 = vld [vmem:[%s2466 + $0x48] sm:$0xff]
    %v2477 = vld [vmem:[%s2466 + $0x50] sm:$0xff]
    %v2478 = vld [vmem:[%s2466 + $0x58] sm:$0xff]
    %v2479 = vld [vmem:[%s2466 + $0x60] sm:$0xff]
    %v2480 = vld [vmem:[%s2466 + $0x68] sm:$0xff]
    %v2481 = vld [vmem:[%s2466 + $0x70] sm:$0xff]
    %v2482 = vld [vmem:[%s2466 + $0x78] sm:$0xff]
    %v2483 = vld [vmem:[%s2466 + $0x80] sm:$0xff]
    %v2484 = vld [vmem:[%s2466 + $0x88] sm:$0xff]
    %v2485 = vld [vmem:[%s2466 + $0x90] sm:$0xff]
    %v2486 = vld [vmem:[%s2466 + $0x98] sm:$0xff]
    %v2487 = vld [vmem:[%s2466 + $0xa0] sm:$0xff]
    %v2488 = vld [vmem:[%s2466 + $0xa8] sm:$0xff]
    %v2489 = vld [vmem:[%s2466 + $0xb0] sm:$0xff]
    %v2490 = vld [vmem:[%s2466 + $0xb8] sm:$0xff]
    %v2491 = vld [vmem:[%s2466 + $0xc0] sm:$0xff]
    %v2492 = vld [vmem:[%s2466 + $0xc8] sm:$0xff]
    %v2494 = vsel %vm1583, %v1542, 0
    %2496 = vmatprep.subr.mxu0 0.0
    %2497 = vmatpush1.msra.mxu0 %v2467
    %2498 = vmatprep.subr.mxu0 0.0
    %2499 = vmatpush1.msra.mxu0 %v2468
    %2500 = vmatprep.subr.mxu0 0.0
    %2501 = vmatpush1.msra.mxu0 %v2469
    %2502 = vmatprep.subr.mxu0 0.0
    %2503 = vmatpush1.msra.mxu0 %v2470
    %2504 = vmatprep.subr.mxu0 0.0
    %2505 = vmatpush1.msra.mxu0 %v2471
    %2506 = vmatprep.subr.mxu0 0.0
    %2507 = vmatpush1.msra.mxu0 %v2472
    %2508 = vmatprep.subr.mxu0 0.0
    %2509 = vmatpush1.msra.mxu0 %v2473
    %2510 = vmatprep.subr.mxu0 0.0
    %2511 = vmatpush1.msra.mxu0 %v2474
    %2512 = vmatprep.subr.mxu0 0.0
    %2513 = vmatpush1.msra.mxu0 %v2475
    %2514 = vmatprep.subr.mxu0 0.0
    %2515 = vmatpush1.msra.mxu0 %v2476
    %2516 = vmatprep.subr.mxu0 0.0
    %2517 = vmatpush1.msra.mxu0 %v2477
    %2518 = vmatprep.subr.mxu0 0.0
    %2519 = vmatpush1.msra.mxu0 %v2478
    %2520 = vmatprep.subr.mxu0 0.0
    %2521 = vmatpush1.msra.mxu0 %v2479
    %2522 = vmatprep.subr.mxu0 0.0
    %2523 = vmatpush1.msra.mxu0 %v2480
    %2524 = vmatprep.subr.mxu0 0.0
    %2525 = vmatpush1.msra.mxu0 %v2481
    %2526 = vmatprep.subr.mxu0 0.0
    %2527 = vmatpush1.msra.mxu0 %v2482
    %2528 = vmatprep.subr.mxu0 0.0
    %2529 = vmatpush1.msra.mxu0 %v2483
    %2530 = vmatprep.subr.mxu0 0.0
    %2531 = vmatpush1.msra.mxu0 %v2484
    %2532 = vmatprep.subr.mxu0 0.0
    %2533 = vmatpush1.msra.mxu0 %v2485
    %2534 = vmatprep.subr.mxu0 0.0
    %2535 = vmatpush1.msra.mxu0 %v2486
    %2536 = vmatprep.subr.mxu0 0.0
    %2537 = vmatpush1.msra.mxu0 %v2487
    %2538 = vmatprep.subr.mxu0 0.0
    %2539 = vmatpush1.msra.mxu0 %v2488
    %2540 = vmatprep.subr.mxu0 0.0
    %2541 = vmatpush1.msra.mxu0 %v2489
    %2542 = vmatprep.subr.mxu0 0.0
    %2543 = vmatpush1.msra.mxu0 %v2490
    %2544 = vmatprep.subr.mxu0 0.0
    %2545 = vmatpush1.msra.mxu0 %v2491
    %2546 = vmatprep.subr.mxu0 0.0
    %2547 = vmatpush1.msra.mxu0 %v2492
    %2548 = vmatprep.subr.mxu0 0.0
    %2549 = vmatpush1.msra.mxu0 0.0
    %2550 = vmatprep.subr.mxu0 0.0
    %2551 = vmatpush1.msra.mxu0 0.0
    %2552 = vmatprep.subr.mxu0 0.0
    %2553 = vmatpush1.msra.mxu0 0.0
    %2554 = vmatprep.subr.mxu0 0.0
    %2555 = vmatpush1.msra.mxu0 0.0
    %2556 = vmatprep.subr.mxu0 0.0
    %2557 = vmatpush1.msra.mxu0 0.0
    %2558 = vmatprep.subr.mxu0 0.0
    %2559 = vmatpush1.msra.mxu0 0.0
    %2560 = vmatprep.mubr.f32.mxu0 %v2494
    %2561 = vmatmul.mubr.f32.gmra.mrb[0].mxu0 %v1541
    %v2562 = vpop.f32.mrb[0].mxu0
    %v2563 = vadd.f32 0.0, %v2562
    %v2564 = vpop.f32.mrb[0].mxu0
    %2565 = vdwg.mxu0
    %v2566 = vadd.f32 %v2465, %v2563
    %s2567 = scalar_lea.vmem [#allocation14], 2080
    %v2568 = vld [vmem:[%s2567] sm:$0xff]
    %v2569 = vld [vmem:[%s2567 + $0x8] sm:$0xff]
    %v2570 = vld [vmem:[%s2567 + $0x10] sm:$0xff]
    %v2571 = vld [vmem:[%s2567 + $0x18] sm:$0xff]
    %v2572 = vld [vmem:[%s2567 + $0x20] sm:$0xff]
    %v2573 = vld [vmem:[%s2567 + $0x28] sm:$0xff]
    %v2574 = vld [vmem:[%s2567 + $0x30] sm:$0xff]
    %v2575 = vld [vmem:[%s2567 + $0x38] sm:$0xff]
    %v2576 = vld [vmem:[%s2567 + $0x40] sm:$0xff]
    %v2577 = vld [vmem:[%s2567 + $0x48] sm:$0xff]
    %v2578 = vld [vmem:[%s2567 + $0x50] sm:$0xff]
    %v2579 = vld [vmem:[%s2567 + $0x58] sm:$0xff]
    %v2580 = vld [vmem:[%s2567 + $0x60] sm:$0xff]
    %v2581 = vld [vmem:[%s2567 + $0x68] sm:$0xff]
    %v2582 = vld [vmem:[%s2567 + $0x70] sm:$0xff]
    %v2583 = vld [vmem:[%s2567 + $0x78] sm:$0xff]
    %v2584 = vld [vmem:[%s2567 + $0x80] sm:$0xff]
    %v2585 = vld [vmem:[%s2567 + $0x88] sm:$0xff]
    %v2586 = vld [vmem:[%s2567 + $0x90] sm:$0xff]
    %v2587 = vld [vmem:[%s2567 + $0x98] sm:$0xff]
    %v2588 = vld [vmem:[%s2567 + $0xa0] sm:$0xff]
    %v2589 = vld [vmem:[%s2567 + $0xa8] sm:$0xff]
    %v2590 = vld [vmem:[%s2567 + $0xb0] sm:$0xff]
    %v2591 = vld [vmem:[%s2567 + $0xb8] sm:$0xff]
    %v2592 = vld [vmem:[%s2567 + $0xc0] sm:$0xff]
    %v2593 = vld [vmem:[%s2567 + $0xc8] sm:$0xff]
    %v2595 = vsel %vm1583, %v1544, 0
    %2597 = vmatprep.subr.mxu0 0.0
    %2598 = vmatpush1.msra.mxu0 %v2568
    %2599 = vmatprep.subr.mxu0 0.0
    %2600 = vmatpush1.msra.mxu0 %v2569
    %2601 = vmatprep.subr.mxu0 0.0
    %2602 = vmatpush1.msra.mxu0 %v2570
    %2603 = vmatprep.subr.mxu0 0.0
    %2604 = vmatpush1.msra.mxu0 %v2571
    %2605 = vmatprep.subr.mxu0 0.0
    %2606 = vmatpush1.msra.mxu0 %v2572
    %2607 = vmatprep.subr.mxu0 0.0
    %2608 = vmatpush1.msra.mxu0 %v2573
    %2609 = vmatprep.subr.mxu0 0.0
    %2610 = vmatpush1.msra.mxu0 %v2574
    %2611 = vmatprep.subr.mxu0 0.0
    %2612 = vmatpush1.msra.mxu0 %v2575
    %2613 = vmatprep.subr.mxu0 0.0
    %2614 = vmatpush1.msra.mxu0 %v2576
    %2615 = vmatprep.subr.mxu0 0.0
    %2616 = vmatpush1.msra.mxu0 %v2577
    %2617 = vmatprep.subr.mxu0 0.0
    %2618 = vmatpush1.msra.mxu0 %v2578
    %2619 = vmatprep.subr.mxu0 0.0
    %2620 = vmatpush1.msra.mxu0 %v2579
    %2621 = vmatprep.subr.mxu0 0.0
    %2622 = vmatpush1.msra.mxu0 %v2580
    %2623 = vmatprep.subr.mxu0 0.0
    %2624 = vmatpush1.msra.mxu0 %v2581
    %2625 = vmatprep.subr.mxu0 0.0
    %2626 = vmatpush1.msra.mxu0 %v2582
    %2627 = vmatprep.subr.mxu0 0.0
    %2628 = vmatpush1.msra.mxu0 %v2583
    %2629 = vmatprep.subr.mxu0 0.0
    %2630 = vmatpush1.msra.mxu0 %v2584
    %2631 = vmatprep.subr.mxu0 0.0
    %2632 = vmatpush1.msra.mxu0 %v2585
    %2633 = vmatprep.subr.mxu0 0.0
    %2634 = vmatpush1.msra.mxu0 %v2586
    %2635 = vmatprep.subr.mxu0 0.0
    %2636 = vmatpush1.msra.mxu0 %v2587
    %2637 = vmatprep.subr.mxu0 0.0
    %2638 = vmatpush1.msra.mxu0 %v2588
    %2639 = vmatprep.subr.mxu0 0.0
    %2640 = vmatpush1.msra.mxu0 %v2589
    %2641 = vmatprep.subr.mxu0 0.0
    %2642 = vmatpush1.msra.mxu0 %v2590
    %2643 = vmatprep.subr.mxu0 0.0
    %2644 = vmatpush1.msra.mxu0 %v2591
    %2645 = vmatprep.subr.mxu0 0.0
    %2646 = vmatpush1.msra.mxu0 %v2592
    %2647 = vmatprep.subr.mxu0 0.0
    %2648 = vmatpush1.msra.mxu0 %v2593
    %2649 = vmatprep.subr.mxu0 0.0
    %2650 = vmatpush1.msra.mxu0 0.0
    %2651 = vmatprep.subr.mxu0 0.0
    %2652 = vmatpush1.msra.mxu0 0.0
    %2653 = vmatprep.subr.mxu0 0.0
    %2654 = vmatpush1.msra.mxu0 0.0
    %2655 = vmatprep.subr.mxu0 0.0
    %2656 = vmatpush1.msra.mxu0 0.0
    %2657 = vmatprep.subr.mxu0 0.0
    %2658 = vmatpush1.msra.mxu0 0.0
    %2659 = vmatprep.subr.mxu0 0.0
    %2660 = vmatpush1.msra.mxu0 0.0
    %2661 = vmatprep.mubr.f32.mxu0 %v2595
    %2662 = vmatmul.mubr.f32.gmra.mrb[0].mxu0 %v1543
    %v2663 = vpop.f32.mrb[0].mxu0
    %v2664 = vadd.f32 0.0, %v2663
    %v2665 = vpop.f32.mrb[0].mxu0
    %2666 = vdwg.mxu0
    %v2667 = vadd.f32 %v2566, %v2664
    %s2668 = scalar_lea.vmem [#allocation14], 2288
    %v2669 = vld [vmem:[%s2668] sm:$0xff]
    %v2670 = vld [vmem:[%s2668 + $0x8] sm:$0xff]
    %v2671 = vld [vmem:[%s2668 + $0x10] sm:$0xff]
    %v2672 = vld [vmem:[%s2668 + $0x18] sm:$0xff]
    %v2673 = vld [vmem:[%s2668 + $0x20] sm:$0xff]
    %v2674 = vld [vmem:[%s2668 + $0x28] sm:$0xff]
    %v2675 = vld [vmem:[%s2668 + $0x30] sm:$0xff]
    %v2676 = vld [vmem:[%s2668 + $0x38] sm:$0xff]
    %v2677 = vld [vmem:[%s2668 + $0x40] sm:$0xff]
    %v2678 = vld [vmem:[%s2668 + $0x48] sm:$0xff]
    %v2679 = vld [vmem:[%s2668 + $0x50] sm:$0xff]
    %v2680 = vld [vmem:[%s2668 + $0x58] sm:$0xff]
    %v2681 = vld [vmem:[%s2668 + $0x60] sm:$0xff]
    %v2682 = vld [vmem:[%s2668 + $0x68] sm:$0xff]
    %v2683 = vld [vmem:[%s2668 + $0x70] sm:$0xff]
    %v2684 = vld [vmem:[%s2668 + $0x78] sm:$0xff]
    %v2685 = vld [vmem:[%s2668 + $0x80] sm:$0xff]
    %v2686 = vld [vmem:[%s2668 + $0x88] sm:$0xff]
    %v2687 = vld [vmem:[%s2668 + $0x90] sm:$0xff]
    %v2688 = vld [vmem:[%s2668 + $0x98] sm:$0xff]
    %v2689 = vld [vmem:[%s2668 + $0xa0] sm:$0xff]
    %v2690 = vld [vmem:[%s2668 + $0xa8] sm:$0xff]
    %v2691 = vld [vmem:[%s2668 + $0xb0] sm:$0xff]
    %v2692 = vld [vmem:[%s2668 + $0xb8] sm:$0xff]
    %v2693 = vld [vmem:[%s2668 + $0xc0] sm:$0xff]
    %v2694 = vld [vmem:[%s2668 + $0xc8] sm:$0xff]
    %v2696 = vsel %vm1583, %v1546, 0
    %2698 = vmatprep.subr.mxu0 0.0
    %2699 = vmatpush1.msra.mxu0 %v2669
    %2700 = vmatprep.subr.mxu0 0.0
    %2701 = vmatpush1.msra.mxu0 %v2670
    %2702 = vmatprep.subr.mxu0 0.0
    %2703 = vmatpush1.msra.mxu0 %v2671
    %2704 = vmatprep.subr.mxu0 0.0
    %2705 = vmatpush1.msra.mxu0 %v2672
    %2706 = vmatprep.subr.mxu0 0.0
    %2707 = vmatpush1.msra.mxu0 %v2673
    %2708 = vmatprep.subr.mxu0 0.0
    %2709 = vmatpush1.msra.mxu0 %v2674
    %2710 = vmatprep.subr.mxu0 0.0
    %2711 = vmatpush1.msra.mxu0 %v2675
    %2712 = vmatprep.subr.mxu0 0.0
    %2713 = vmatpush1.msra.mxu0 %v2676
    %2714 = vmatprep.subr.mxu0 0.0
    %2715 = vmatpush1.msra.mxu0 %v2677
    %2716 = vmatprep.subr.mxu0 0.0
    %2717 = vmatpush1.msra.mxu0 %v2678
    %2718 = vmatprep.subr.mxu0 0.0
    %2719 = vmatpush1.msra.mxu0 %v2679
    %2720 = vmatprep.subr.mxu0 0.0
    %2721 = vmatpush1.msra.mxu0 %v2680
    %2722 = vmatprep.subr.mxu0 0.0
    %2723 = vmatpush1.msra.mxu0 %v2681
    %2724 = vmatprep.subr.mxu0 0.0
    %2725 = vmatpush1.msra.mxu0 %v2682
    %2726 = vmatprep.subr.mxu0 0.0
    %2727 = vmatpush1.msra.mxu0 %v2683
    %2728 = vmatprep.subr.mxu0 0.0
    %2729 = vmatpush1.msra.mxu0 %v2684
    %2730 = vmatprep.subr.mxu0 0.0
    %2731 = vmatpush1.msra.mxu0 %v2685
    %2732 = vmatprep.subr.mxu0 0.0
    %2733 = vmatpush1.msra.mxu0 %v2686
    %2734 = vmatprep.subr.mxu0 0.0
    %2735 = vmatpush1.msra.mxu0 %v2687
    %2736 = vmatprep.subr.mxu0 0.0
    %2737 = vmatpush1.msra.mxu0 %v2688
    %2738 = vmatprep.subr.mxu0 0.0
    %2739 = vmatpush1.msra.mxu0 %v2689
    %2740 = vmatprep.subr.mxu0 0.0
    %2741 = vmatpush1.msra.mxu0 %v2690
    %2742 = vmatprep.subr.mxu0 0.0
    %2743 = vmatpush1.msra.mxu0 %v2691
    %2744 = vmatprep.subr.mxu0 0.0
    %2745 = vmatpush1.msra.mxu0 %v2692
    %2746 = vmatprep.subr.mxu0 0.0
    %2747 = vmatpush1.msra.mxu0 %v2693
    %2748 = vmatprep.subr.mxu0 0.0
    %2749 = vmatpush1.msra.mxu0 %v2694
    %2750 = vmatprep.subr.mxu0 0.0
    %2751 = vmatpush1.msra.mxu0 0.0
    %2752 = vmatprep.subr.mxu0 0.0
    %2753 = vmatpush1.msra.mxu0 0.0
    %2754 = vmatprep.subr.mxu0 0.0
    %2755 = vmatpush1.msra.mxu0 0.0
    %2756 = vmatprep.subr.mxu0 0.0
    %2757 = vmatpush1.msra.mxu0 0.0
    %2758 = vmatprep.subr.mxu0 0.0
    %2759 = vmatpush1.msra.mxu0 0.0
    %2760 = vmatprep.subr.mxu0 0.0
    %2761 = vmatpush1.msra.mxu0 0.0
    %2762 = vmatprep.mubr.f32.mxu0 %v2696
    %2763 = vmatmul.mubr.f32.gmra.mrb[0].mxu0 %v1545
    %v2764 = vpop.f32.mrb[0].mxu0
    %v2765 = vadd.f32 0.0, %v2764
    %v2766 = vpop.f32.mrb[0].mxu0
    %2767 = vdwg.mxu0
    %v2768 = vadd.f32 %v2667, %v2765
    %s2769 = scalar_lea.vmem [#allocation14], 2496
    %v2770 = vld [vmem:[%s2769] sm:$0xff]
    %v2771 = vld [vmem:[%s2769 + $0x8] sm:$0xff]
    %v2772 = vld [vmem:[%s2769 + $0x10] sm:$0xff]
    %v2773 = vld [vmem:[%s2769 + $0x18] sm:$0xff]
    %v2774 = vld [vmem:[%s2769 + $0x20] sm:$0xff]
    %v2775 = vld [vmem:[%s2769 + $0x28] sm:$0xff]
    %v2776 = vld [vmem:[%s2769 + $0x30] sm:$0xff]
    %v2777 = vld [vmem:[%s2769 + $0x38] sm:$0xff]
    %v2778 = vld [vmem:[%s2769 + $0x40] sm:$0xff]
    %v2779 = vld [vmem:[%s2769 + $0x48] sm:$0xff]
    %v2780 = vld [vmem:[%s2769 + $0x50] sm:$0xff]
    %v2781 = vld [vmem:[%s2769 + $0x58] sm:$0xff]
    %v2782 = vld [vmem:[%s2769 + $0x60] sm:$0xff]
    %v2783 = vld [vmem:[%s2769 + $0x68] sm:$0xff]
    %v2784 = vld [vmem:[%s2769 + $0x70] sm:$0xff]
    %v2785 = vld [vmem:[%s2769 + $0x78] sm:$0xff]
    %v2786 = vld [vmem:[%s2769 + $0x80] sm:$0xff]
    %v2787 = vld [vmem:[%s2769 + $0x88] sm:$0xff]
    %v2788 = vld [vmem:[%s2769 + $0x90] sm:$0xff]
    %v2789 = vld [vmem:[%s2769 + $0x98] sm:$0xff]
    %v2790 = vld [vmem:[%s2769 + $0xa0] sm:$0xff]
    %v2791 = vld [vmem:[%s2769 + $0xa8] sm:$0xff]
    %v2792 = vld [vmem:[%s2769 + $0xb0] sm:$0xff]
    %v2793 = vld [vmem:[%s2769 + $0xb8] sm:$0xff]
    %v2794 = vld [vmem:[%s2769 + $0xc0] sm:$0xff]
    %v2795 = vld [vmem:[%s2769 + $0xc8] sm:$0xff]
    %v2797 = vsel %vm1583, %v1548, 0
    %2799 = vmatprep.subr.mxu0 0.0
    %2800 = vmatpush1.msra.mxu0 %v2770
    %2801 = vmatprep.subr.mxu0 0.0
    %2802 = vmatpush1.msra.mxu0 %v2771
    %2803 = vmatprep.subr.mxu0 0.0
    %2804 = vmatpush1.msra.mxu0 %v2772
    %2805 = vmatprep.subr.mxu0 0.0
    %2806 = vmatpush1.msra.mxu0 %v2773
    %2807 = vmatprep.subr.mxu0 0.0
    %2808 = vmatpush1.msra.mxu0 %v2774
    %2809 = vmatprep.subr.mxu0 0.0
    %2810 = vmatpush1.msra.mxu0 %v2775
    %2811 = vmatprep.subr.mxu0 0.0
    %2812 = vmatpush1.msra.mxu0 %v2776
    %2813 = vmatprep.subr.mxu0 0.0
    %2814 = vmatpush1.msra.mxu0 %v2777
    %2815 = vmatprep.subr.mxu0 0.0
    %2816 = vmatpush1.msra.mxu0 %v2778
    %2817 = vmatprep.subr.mxu0 0.0
    %2818 = vmatpush1.msra.mxu0 %v2779
    %2819 = vmatprep.subr.mxu0 0.0
    %2820 = vmatpush1.msra.mxu0 %v2780
    %2821 = vmatprep.subr.mxu0 0.0
    %2822 = vmatpush1.msra.mxu0 %v2781
    %2823 = vmatprep.subr.mxu0 0.0
    %2824 = vmatpush1.msra.mxu0 %v2782
    %2825 = vmatprep.subr.mxu0 0.0
    %2826 = vmatpush1.msra.mxu0 %v2783
    %2827 = vmatprep.subr.mxu0 0.0
    %2828 = vmatpush1.msra.mxu0 %v2784
    %2829 = vmatprep.subr.mxu0 0.0
    %2830 = vmatpush1.msra.mxu0 %v2785
    %2831 = vmatprep.subr.mxu0 0.0
    %2832 = vmatpush1.msra.mxu0 %v2786
    %2833 = vmatprep.subr.mxu0 0.0
    %2834 = vmatpush1.msra.mxu0 %v2787
    %2835 = vmatprep.subr.mxu0 0.0
    %2836 = vmatpush1.msra.mxu0 %v2788
    %2837 = vmatprep.subr.mxu0 0.0
    %2838 = vmatpush1.msra.mxu0 %v2789
    %2839 = vmatprep.subr.mxu0 0.0
    %2840 = vmatpush1.msra.mxu0 %v2790
    %2841 = vmatprep.subr.mxu0 0.0
    %2842 = vmatpush1.msra.mxu0 %v2791
    %2843 = vmatprep.subr.mxu0 0.0
    %2844 = vmatpush1.msra.mxu0 %v2792
    %2845 = vmatprep.subr.mxu0 0.0
    %2846 = vmatpush1.msra.mxu0 %v2793
    %2847 = vmatprep.subr.mxu0 0.0
    %2848 = vmatpush1.msra.mxu0 %v2794
    %2849 = vmatprep.subr.mxu0 0.0
    %2850 = vmatpush1.msra.mxu0 %v2795
    %2851 = vmatprep.subr.mxu0 0.0
    %2852 = vmatpush1.msra.mxu0 0.0
    %2853 = vmatprep.subr.mxu0 0.0
    %2854 = vmatpush1.msra.mxu0 0.0
    %2855 = vmatprep.subr.mxu0 0.0
    %2856 = vmatpush1.msra.mxu0 0.0
    %2857 = vmatprep.subr.mxu0 0.0
    %2858 = vmatpush1.msra.mxu0 0.0
    %2859 = vmatprep.subr.mxu0 0.0
    %2860 = vmatpush1.msra.mxu0 0.0
    %2861 = vmatprep.subr.mxu0 0.0
    %2862 = vmatpush1.msra.mxu0 0.0
    %2863 = vmatprep.mubr.f32.mxu0 %v2797
    %2864 = vmatmul.mubr.f32.gmra.mrb[0].mxu0 %v1547
    %v2865 = vpop.f32.mrb[0].mxu0
    %v2866 = vadd.f32 0.0, %v2865
    %v2867 = vpop.f32.mrb[0].mxu0
    %2868 = vdwg.mxu0
    %v2869 = vadd.f32 %v2768, %v2866
    %v2870 = vmax.f32 %v2869, 0.0
    %v2871 = vld [vmem:[%s11] sm:$0xff]
    %v2872 = vld [vmem:[%s11 + $0x8] sm:$0xff]
    %v2873 = vld [vmem:[%s11 + $0x10] sm:$0xff]
    %v2874 = vld [vmem:[%s11 + $0x18] sm:$0xff]
    %v2875 = vld [vmem:[%s11 + $0x20] sm:$0xff]
    %v2876 = vld [vmem:[%s11 + $0x28] sm:$0xff]
    %v2877 = vld [vmem:[%s11 + $0x30] sm:$0xff]
    %v2878 = vld [vmem:[%s11 + $0x38] sm:$0xff]
    %v2879 = vld [vmem:[%s11 + $0x40] sm:$0xff]
    %v2880 = vld [vmem:[%s11 + $0x48] sm:$0xff]
    %v2881 = vld [vmem:[%s11 + $0x50] sm:$0xff]
    %v2882 = vld [vmem:[%s11 + $0x58] sm:$0xff]
    %v2883 = vld [vmem:[%s11 + $0x60] sm:$0xff]
    %v2884 = vld [vmem:[%s11 + $0x68] sm:$0xff]
    %v2885 = vld [vmem:[%s11 + $0x70] sm:$0xff]
    %v2886 = vld [vmem:[%s11 + $0x78] sm:$0xff]
    %v2887 = vld [vmem:[#allocation17] sm:$0x1]
    %v2889 = vlaneseq
    %v2890 = vshrl.u32 %v2889, 7
    %v2891 = vsub.s32 0, %v2890
    %v2892 = vrot.slane %v2887, %v2891
    %2894 = vmatprep.subr.mxu0 0.0
    %2895 = vmatpush1.msra.mxu0 %v2871
    %2896 = vmatprep.subr.mxu0 0.0
    %2897 = vmatpush1.msra.mxu0 %v2872
    %2898 = vmatprep.subr.mxu0 0.0
    %2899 = vmatpush1.msra.mxu0 %v2873
    %2900 = vmatprep.subr.mxu0 0.0
    %2901 = vmatpush1.msra.mxu0 %v2874
    %2902 = vmatprep.subr.mxu0 0.0
    %2903 = vmatpush1.msra.mxu0 %v2875
    %2904 = vmatprep.subr.mxu0 0.0
    %2905 = vmatpush1.msra.mxu0 %v2876
    %2906 = vmatprep.subr.mxu0 0.0
    %2907 = vmatpush1.msra.mxu0 %v2877
    %2908 = vmatprep.subr.mxu0 0.0
    %2909 = vmatpush1.msra.mxu0 %v2878
    %2910 = vmatprep.subr.mxu0 0.0
    %2911 = vmatpush1.msra.mxu0 %v2879
    %2912 = vmatprep.subr.mxu0 0.0
    %2913 = vmatpush1.msra.mxu0 %v2880
    %2914 = vmatprep.subr.mxu0 0.0
    %2915 = vmatpush1.msra.mxu0 %v2881
    %2916 = vmatprep.subr.mxu0 0.0
    %2917 = vmatpush1.msra.mxu0 %v2882
    %2918 = vmatprep.subr.mxu0 0.0
    %2919 = vmatpush1.msra.mxu0 %v2883
    %2920 = vmatprep.subr.mxu0 0.0
    %2921 = vmatpush1.msra.mxu0 %v2884
    %2922 = vmatprep.subr.mxu0 0.0
    %2923 = vmatpush1.msra.mxu0 %v2885
    %2924 = vmatprep.subr.mxu0 0.0
    %2925 = vmatpush1.msra.mxu0 %v2886
    %2926 = vmatprep.subr.mxu0 0.0
    %2927 = vmatpush1.msra.mxu0 0.0
    %2928 = vmatprep.subr.mxu0 0.0
    %2929 = vmatpush1.msra.mxu0 0.0
    %2930 = vmatprep.subr.mxu0 0.0
    %2931 = vmatpush1.msra.mxu0 0.0
    %2932 = vmatprep.subr.mxu0 0.0
    %2933 = vmatpush1.msra.mxu0 0.0
    %2934 = vmatprep.subr.mxu0 0.0
    %2935 = vmatpush1.msra.mxu0 0.0
    %2936 = vmatprep.subr.mxu0 0.0
    %2937 = vmatpush1.msra.mxu0 0.0
    %2938 = vmatprep.subr.mxu0 0.0
    %2939 = vmatpush1.msra.mxu0 0.0
    %2940 = vmatprep.subr.mxu0 0.0
    %2941 = vmatpush1.msra.mxu0 0.0
    %2942 = vmatprep.subr.mxu0 0.0
    %2943 = vmatpush1.msra.mxu0 0.0
    %2944 = vmatprep.subr.mxu0 0.0
    %2945 = vmatpush1.msra.mxu0 0.0
    %2946 = vmatprep.subr.mxu0 0.0
    %2947 = vmatpush1.msra.mxu0 0.0
    %2948 = vmatprep.subr.mxu0 0.0
    %2949 = vmatpush1.msra.mxu0 0.0
    %2950 = vmatprep.subr.mxu0 0.0
    %2951 = vmatpush1.msra.mxu0 0.0
    %2952 = vmatprep.subr.mxu0 0.0
    %2953 = vmatpush1.msra.mxu0 0.0
    %2954 = vmatprep.subr.mxu0 0.0
    %2955 = vmatpush1.msra.mxu0 0.0
    %2956 = vmatprep.subr.mxu0 0.0
    %2957 = vmatpush1.msra.mxu0 0.0
    %2958 = vmatprep.mubr.f32.mxu0 0.0
    %2959 = vmatmul.mubr.f32.gmra.mrb[0].mxu0 %v2870
    %v2960 = vpop.f32.mrb[0].mxu0
    %v2961 = vadd.f32 %v2892, %v2960
    %v2962 = vpop.f32.mrb[0].mxu0
    %2963 = vdwg.mxu0
    %vm2964 = vcmask 80896
    %2965 = vst.msk [vmem:[%s13] sm:$0xff] %vm2964, %v2961
    // Predicated region
    $region94: #{forward.1} parent=1 // pred_check
      _
    $region95: #{forward.1} parent=1 // pred_check_branch
      %2967 = sbr.rel (0) target = $region97
    $region96: #{forward.1} parent=1 // pred_region
      _
    $region97: #{forward.1} parent=1 // pred_fallthru
      _
    // Predicated region
    $region98: #{forward.1} parent=1 // pred_check
      _
    $region99: #{forward.1} parent=1 // pred_check_branch
      %2969 = sbr.rel (0) target = $region101
    $region100: #{forward.1} parent=1 // pred_region
      _
    $region101: #{forward.1} parent=1 // pred_fallthru
      _
    %2970 = vsyncpa [#allocation4], 1
    %2971 = vsyncpa [#allocation6], 1
    %2972 = vsyncpa [#allocation9], 1
    %2973 = vsyncpa [#allocation12], 1
    %2974 = vsyncpa [#allocation15], 1
    %2975 = vsyncpa [#allocation18], 1

</llo_original>
